<compile_context>
chip_gen: v5e
topology: v5e:2x2
jax: 0.10.0
libtpu: 0.0.40
codegen_flags: <defaults>
</compile_context>

<pallas_src>
import jax
import jax.numpy as jnp
from jax import lax
from jax.experimental import pallas as pl
from jax.experimental.pallas import tpu as pltpu

jax.config.update("jax_default_matmul_precision", "highest")

N_LAYERS = 2
INPUT_SIZE = 8
HIDDEN_SIZE = 10


def lstm_encoder_kernel(tmax_ref, ids_ref, len_ref,
                        tab_ref, whh0_ref, b0_ref,
                        wih1_ref, whh1_ref, b1_ref,
                        h0_ref, c0_ref,
                        out_ref, hn_ref, cn_ref):
    B, T, H = out_ref.shape
    N = tab_ref.shape[0]           # vocabulary size
    TB = T * B

    t_max = tmax_ref[0]            # SMEM scalar: max(len_x), runtime value
    lens = len_ref[...]            # (B, 1) int32, stays in vregs

    # ---- hoisted weight / bias loads (a handful of vregs) ----
    whh0 = whh0_ref[...]                                  # (H, 4H)
    wih1 = wih1_ref[...]                                  # (H, 4H)
    whh1 = whh1_ref[...]                                  # (H, 4H)
    b1 = jnp.broadcast_to(b1_ref[...], (B, 4 * H))        # broadcast once

    # ---- embedding gather + layer-0 input projection, all timesteps at once.
    # ids are time-major (row t*B + b); one-hot matmul against the pre-fused
    # (n_words, 4H) table == exact row selection, so this IS the gather.
    ids = ids_ref[...]                                    # (T*B, 1) int32
    onehot = (lax.broadcasted_iota(jnp.int32, (TB, N), 1) == ids
              ).astype(jnp.float32)                       # (T*B, N)
    xp = jnp.dot(onehot, tab_ref[...],
                 preferred_element_type=jnp.float32) + b0_ref[...]   # (T*B, 4H)
    xp = xp.reshape(T, B, 4 * H)   # single up-front relayout; xp[t] is free

    # ---- running (h, c) state kept in registers for the whole recurrence ----
    h0 = h0_ref[0]
    c0 = c0_ref[0]
    h1 = h0_ref[1]
    c1 = c0_ref[1]

    def lstm_gates(g):
        # 2 whole-tile EUP pushes (sigmoid + tanh); slices happen afterwards.
        s = jax.nn.sigmoid(g)                              # (B, 4H)
        th = jnp.tanh(g)                                   # (B, 4H)
        # PyTorch gate order: i, f, g, o
        return s[:, 0:H], s[:, H:2 * H], th[:, 2 * H:3 * H], s[:, 3 * H:4 * H]

    def layer0_step(t, h, c):
        valid = lens > t                                   # (B, 1) packed mask
        g = xp[t] + jnp.dot(h, whh0, preferred_element_type=jnp.float32)
        i, f, gg, o = lstm_gates(g)
        c_new = f * c + i * gg
        h_new = o * jnp.tanh(c_new)
        # return unmasked h_new (feeds layer 1) plus masked carried state
        return h_new, jnp.where(valid, h_new, h), jnp.where(valid, c_new, c)

    def layer1_step(t, x, h, c):
        # TODO(synk): inter-layer dropout (p=0.4) is training-only; skipped (eval).
        valid = lens > t
        g = (jnp.dot(x, wih1, preferred_element_type=jnp.float32)
             + jnp.dot(h, whh1, preferred_element_type=jnp.float32) + b1)
        i, f, gg, o = lstm_gates(g)
        c_new = f * c + i * gg
        h_new = o * jnp.tanh(c_new)
        # pad_packed_sequence fills invalid steps with 0.0; store directly.
        out_ref[:, t, :] = jnp.where(valid, h_new, 0.0)
        return jnp.where(valid, h_new, h), jnp.where(valid, c_new, c)

    # ---- wavefront: layer-1 of step t alongside layer-0 of step t+1 ----
    x1_prev, h0, c0 = layer0_step(0, h0, c0)
    for t in range(1, T):                                  # static, fully unrolled
        x1_cur, h0, c0 = layer0_step(t, h0, c0)
        h1, c1 = layer1_step(t - 1, x1_prev, h1, c1)
        x1_prev = x1_cur
    h1, c1 = layer1_step(T - 1, x1_prev, h1, c1)

    # Final LSTM state: stored once, after the loop.
    hn_ref[0] = h0
    hn_ref[1] = h1
    cn_ref[0] = c0
    cn_ref[1] = c1

    # F.log_softmax(output, dim=1): softmax over the TIME axis of the padded
    # (B, t_max, H) tensor.  Time maps to sublanes -> sublane reductions.
    y = out_ref[...]                                       # (B, T, H)
    t_idx = lax.broadcasted_iota(jnp.int32, (B, T, H), 1)
    in_range = t_idx < t_max
    y_masked = jnp.where(in_range, y, jnp.float32(-1e30))
    m = jnp.max(y_masked, axis=1, keepdims=True)
    e = jnp.where(in_range, jnp.exp(y - m), jnp.float32(0.0))
    s = jnp.sum(e, axis=1, keepdims=True)
    out_ref[...] = jnp.where(in_range, y - m - jnp.log(s), jnp.float32(0.0))


def init_params(key, n_words, input_size=INPUT_SIZE, hidden_size=HIDDEN_SIZE):
    ks = jax.random.split(key, 9)
    emb = jax.random.normal(ks[0], (n_words, input_size), jnp.float32)
    emb = emb.at[0].set(0.0)                 # padding_idx=0 row is zeros
    bound = 1.0 / float(jnp.sqrt(jnp.float32(hidden_size)))

    def u(k, shape):
        return jax.random.uniform(k, shape, jnp.float32, -bound, bound)

    return dict(
        embedding=emb,
        w_ih_l0=u(ks[1], (4 * hidden_size, input_size)),
        w_hh_l0=u(ks[2], (4 * hidden_size, hidden_size)),
        b_ih_l0=u(ks[3], (4 * hidden_size,)),
        b_hh_l0=u(ks[4], (4 * hidden_size,)),
        w_ih_l1=u(ks[5], (4 * hidden_size, hidden_size)),
        w_hh_l1=u(ks[6], (4 * hidden_size, hidden_size)),
        b_ih_l1=u(ks[7], (4 * hidden_size,)),
        b_hh_l1=u(ks[8], (4 * hidden_size,)),
    )


def prepare_params(params):
    """One-time (init-time) weight fusion/transposition for the kernel."""
    H = params["w_hh_l0"].shape[1]
    return dict(
        # embedding gather + layer-0 input projection fused into one table
        table0=jnp.dot(params["embedding"], params["w_ih_l0"].T),   # (n_words, 4H)
        whh0=params["w_hh_l0"].T,                                   # (H, 4H)
        b0=(params["b_ih_l0"] + params["b_hh_l0"]).reshape(1, 4 * H),
        wih1=params["w_ih_l1"].T,                                   # (H, 4H)
        whh1=params["w_hh_l1"].T,                                   # (H, 4H)
        b1=(params["b_ih_l1"] + params["b_hh_l1"]).reshape(1, 4 * H),
    )


@jax.jit
def _forward_jit(prep, input_ids, len_arr, h0, c0):
    B, T = input_ids.shape
    H = prep["whh0"].shape[0]

    ids_tm = jnp.transpose(input_ids).reshape(T * B, 1).astype(jnp.int32)
    lens = len_arr.astype(jnp.int32).reshape(B, 1)
    t_max = jnp.max(len_arr).astype(jnp.int32).reshape(1)

    smem = pl.BlockSpec(memory_space=pltpu.MemorySpace.SMEM)
    vmem = pl.BlockSpec(memory_space=pltpu.MemorySpace.VMEM)

    # Single invocation, no grid: whole problem is a few KiB of VMEM; grid
    # tiling (or splitting across v7x's 2 TCs) would only add overhead.
    out_full, hn, cn = pl.pallas_call(
        lstm_encoder_kernel,
        out_shape=(
            jax.ShapeDtypeStruct((B, T, H), jnp.float32),
            jax.ShapeDtypeStruct((N_LAYERS, B, H), jnp.float32),
            jax.ShapeDtypeStruct((N_LAYERS, B, H), jnp.float32),
        ),
        in_specs=[smem] + [vmem] * 10,
        out_specs=(vmem, vmem, vmem),
    )(t_max, ids_tm, lens,
      prep["table0"], prep["whh0"], prep["b0"],
      prep["wih1"], prep["whh1"], prep["b1"], h0, c0)
    return out_full, hn, cn


def encoder_forward(prep, input_ids, len_x, state=None, *, state_key=None):
    B, T = input_ids.shape
    H = prep["whh0"].shape[0]

    if state is None:
        # TODO(synk): PyTorch draws fresh torch.randn per forward when
        # state is None; here the initial state comes from an explicit key.
        if state_key is None:
            state_key = jax.random.PRNGKey(0)
        kh, kc = jax.random.split(state_key)
        h0 = jax.random.normal(kh, (N_LAYERS, B, H), jnp.float32)
        c0 = jax.random.normal(kc, (N_LAYERS, B, H), jnp.float32)
    else:
        h0, c0 = state

    len_arr = jnp.asarray(len_x, jnp.int32)
    out_full, hn, cn = _forward_jit(prep, input_ids, len_arr, h0, c0)

    # host-side time slice of the result; kernel itself is length-agnostic,
    # so different max lengths never trigger a recompile.
    t_max = int(max(len_x))
    return out_full[:, :t_max, :], (hn, cn)


def reference_forward(params, input_ids, len_x, h0, c0):
    """Pure-JAX reference matching the PyTorch forward (eval mode)."""
    emb = params["embedding"][input_ids]
    B, T, _ = emb.shape
    H = params["w_hh_l0"].shape[1]
    lens = jnp.asarray(len_x, jnp.int32)
    t_max = int(max(len_x))
    h = [h0[0], h0[1]]
    c = [c0[0], c0[1]]

    def cell(x, hh, cc, wih, whh, bih, bhh):
        g = x @ wih.T + hh @ whh.T + bih + bhh
        i = jax.nn.sigmoid(g[:, :H])
        f = jax.nn.sigmoid(g[:, H:2 * H])
        gg = jnp.tanh(g[:, 2 * H:3 * H])
        o = jax.nn.sigmoid(g[:, 3 * H:])
        cn = f * cc + i * gg
        return o * jnp.tanh(cn), cn

    ys = []
    for t in range(T):
        valid = (lens > t)[:, None]
        x_t = emb[:, t, :]
        h0n, c0n = cell(x_t, h[0], c[0], params["w_ih_l0"], params["w_hh_l0"],
                        params["b_ih_l0"], params["b_hh_l0"])
        h[0] = jnp.where(valid, h0n, h[0])
        c[0] = jnp.where(valid, c0n, c[0])
        h1n, c1n = cell(h0n, h[1], c[1], params["w_ih_l1"], params["w_hh_l1"],
                        params["b_ih_l1"], params["b_hh_l1"])
        h[1] = jnp.where(valid, h1n, h[1])
        c[1] = jnp.where(valid, c1n, c[1])
        ys.append(jnp.where(valid, h1n, 0.0))
    y = jnp.stack(ys, axis=1)[:, :t_max, :]
    out = jax.nn.log_softmax(y, axis=1)
    return out, (jnp.stack(h), jnp.stack(c))


if __name__ == "__main__":
    key = jax.random.PRNGKey(0)
    k_param, k_ids, k_state = jax.random.split(key, 3)

    n_words = 20
    B, T = 2, 8
    len_x = [8, 5]    # sorted descending (pack_padded_sequence default)

    params = init_params(k_param, n_words)
    prep = prepare_params(params)

    ids = jax.random.randint(k_ids, (B, T), 1, n_words, jnp.int32)
    t_iota = jnp.arange(T)[None, :]
    ids = jnp.where(t_iota < jnp.asarray(len_x)[:, None], ids, 0)   # pad token 0

    kh, kc = jax.random.split(k_state)
    h0 = jax.random.normal(kh, (N_LAYERS, B, HIDDEN_SIZE), jnp.float32)
    c0 = jax.random.normal(kc, (N_LAYERS, B, HIDDEN_SIZE), jnp.float32)

    out, (hn, cn) = encoder_forward(prep, ids, len_x, state=(h0, c0))
    jax.block_until_ready((out, hn, cn))

    ref_out, (ref_hn, ref_cn) = reference_forward(params, ids, len_x, h0, c0)
    assert out.shape == (B, max(len_x), HIDDEN_SIZE)
    assert jnp.allclose(out, ref_out, atol=1e-3, rtol=1e-3)
    assert jnp.allclose(hn, ref_hn, atol=1e-3, rtol=1e-3)
    assert jnp.allclose(cn, ref_cn, atol=1e-3, rtol=1e-3)

    print("KERNEL_OK")
</pallas_src>

<mosaic_0001>
module attributes {stable_mosaic.version = 11 : i64} {
  func.func @lstm_encoder_kernel(%arg0: memref<1xi32, #tpu.memory_space<smem>>, %arg1: memref<16x1xi32, #tpu.memory_space<vmem>>, %arg2: memref<2x1xi32, #tpu.memory_space<vmem>>, %arg3: memref<20x40xf32, #tpu.memory_space<vmem>>, %arg4: memref<10x40xf32, #tpu.memory_space<vmem>>, %arg5: memref<1x40xf32, #tpu.memory_space<vmem>>, %arg6: memref<10x40xf32, #tpu.memory_space<vmem>>, %arg7: memref<10x40xf32, #tpu.memory_space<vmem>>, %arg8: memref<1x40xf32, #tpu.memory_space<vmem>>, %arg9: memref<2x2x10xf32, #tpu.memory_space<vmem>>, %arg10: memref<2x2x10xf32, #tpu.memory_space<vmem>>, %arg11: memref<2x8x10xf32, #tpu.memory_space<vmem>>, %arg12: memref<2x2x10xf32, #tpu.memory_space<vmem>>, %arg13: memref<2x2x10xf32, #tpu.memory_space<vmem>>) attributes {dimension_semantics = [], scalar_prefetch = 0 : i64, scratch_operands = 0 : i64, tpu.core_type = #tpu.core_type<tc>} {
    %c0 = arith.constant 0 : index
    %0 = memref.load %arg0[%c0] : memref<1xi32, #tpu.memory_space<smem>>
    %c0_0 = arith.constant 0 : index
    %c0_1 = arith.constant 0 : index
    %1 = vector.load %arg2[%c0_0, %c0_1] : memref<2x1xi32, #tpu.memory_space<vmem>>, vector<2x1xi32>
    %c0_2 = arith.constant 0 : index
    %c0_3 = arith.constant 0 : index
    %2 = vector.load %arg4[%c0_2, %c0_3] : memref<10x40xf32, #tpu.memory_space<vmem>>, vector<10x40xf32>
    %c0_4 = arith.constant 0 : index
    %c0_5 = arith.constant 0 : index
    %3 = vector.load %arg6[%c0_4, %c0_5] : memref<10x40xf32, #tpu.memory_space<vmem>>, vector<10x40xf32>
    %c0_6 = arith.constant 0 : index
    %c0_7 = arith.constant 0 : index
    %4 = vector.load %arg7[%c0_6, %c0_7] : memref<10x40xf32, #tpu.memory_space<vmem>>, vector<10x40xf32>
    %c0_8 = arith.constant 0 : index
    %c0_9 = arith.constant 0 : index
    %5 = vector.load %arg8[%c0_8, %c0_9] : memref<1x40xf32, #tpu.memory_space<vmem>>, vector<1x40xf32>
    %6 = vector.shape_cast %5 : vector<1x40xf32> to vector<1x40xf32>
    %7 = vector.broadcast %6 : vector<1x40xf32> to vector<2x40xf32>
    %c0_10 = arith.constant 0 : index
    %c0_11 = arith.constant 0 : index
    %8 = vector.load %arg1[%c0_10, %c0_11] : memref<16x1xi32, #tpu.memory_space<vmem>>, vector<16x1xi32>
    %9 = tpu.iota {dimensions = array<i32: 1>} : vector<16x20xi32>
    %10 = vector.broadcast %8 : vector<16x1xi32> to vector<16x20xi32>
    %11 = arith.cmpi eq, %9, %10 : vector<16x20xi32>
    %12 = arith.extui %11 : vector<16x20xi1> to vector<16x20xi32>
    %13 = arith.sitofp %12 : vector<16x20xi32> to vector<16x20xf32>
    %c0_12 = arith.constant 0 : index
    %c0_13 = arith.constant 0 : index
    %14 = vector.load %arg3[%c0_12, %c0_13] : memref<20x40xf32, #tpu.memory_space<vmem>>, vector<20x40xf32>
    %cst = arith.constant dense<0.000000e+00> : vector<16x40xf32>
    %15 = tpu.matmul %13, %14, %cst {dimension_numbers = #tpu.dot_dimension_numbers<[1], [0], [0], [1], [0, 0, 1, 1], [], []>, precision = #tpu.contract_precision<fp32>} : vector<16x20xf32>, vector<20x40xf32>, vector<16x40xf32> -> vector<16x40xf32>
    %c0_14 = arith.constant 0 : index
    %c0_15 = arith.constant 0 : index
    %16 = vector.load %arg5[%c0_14, %c0_15] : memref<1x40xf32, #tpu.memory_space<vmem>>, vector<1x40xf32>
    %17 = vector.broadcast %16 : vector<1x40xf32> to vector<16x40xf32>
    %18 = arith.addf %15, %17 : vector<16x40xf32>
    %19 = vector.shape_cast %18 : vector<16x40xf32> to vector<8x2x40xf32>
    %c0_16 = arith.constant 0 : index
    %c0_17 = arith.constant 0 : index
    %c0_18 = arith.constant 0 : index
    %20 = vector.load %arg9[%c0_16, %c0_17, %c0_18] : memref<2x2x10xf32, #tpu.memory_space<vmem>>, vector<1x2x10xf32>
    %21 = vector.shape_cast %20 : vector<1x2x10xf32> to vector<2x10xf32>
    %c0_19 = arith.constant 0 : index
    %c0_20 = arith.constant 0 : index
    %c0_21 = arith.constant 0 : index
    %22 = vector.load %arg10[%c0_19, %c0_20, %c0_21] : memref<2x2x10xf32, #tpu.memory_space<vmem>>, vector<1x2x10xf32>
    %23 = vector.shape_cast %22 : vector<1x2x10xf32> to vector<2x10xf32>
    %c1 = arith.constant 1 : index
    %c0_22 = arith.constant 0 : index
    %c0_23 = arith.constant 0 : index
    %24 = vector.load %arg9[%c1, %c0_22, %c0_23] : memref<2x2x10xf32, #tpu.memory_space<vmem>>, vector<1x2x10xf32>
    %25 = vector.shape_cast %24 : vector<1x2x10xf32> to vector<2x10xf32>
    %c1_24 = arith.constant 1 : index
    %c0_25 = arith.constant 0 : index
    %c0_26 = arith.constant 0 : index
    %26 = vector.load %arg10[%c1_24, %c0_25, %c0_26] : memref<2x2x10xf32, #tpu.memory_space<vmem>>, vector<1x2x10xf32>
    %27 = vector.shape_cast %26 : vector<1x2x10xf32> to vector<2x10xf32>
    %c0_i32 = arith.constant 0 : i32
    %28 = vector.broadcast %c0_i32 : i32 to vector<2x1xi32>
    %29 = arith.cmpi sgt, %1, %28 : vector<2x1xi32>
    %30 = vector.extract_strided_slice %19 {offsets = [0, 0, 0], sizes = [1, 2, 40], strides = [1, 1, 1]} : vector<8x2x40xf32> to vector<1x2x40xf32>
    %31 = vector.shape_cast %30 : vector<1x2x40xf32> to vector<2x40xf32>
    %cst_27 = arith.constant dense<0.000000e+00> : vector<2x40xf32>
    %32 = tpu.matmul %21, %2, %cst_27 {dimension_numbers = #tpu.dot_dimension_numbers<[1], [0], [0], [1], [0, 0, 1, 1], [], []>, precision = #tpu.contract_precision<fp32>} : vector<2x10xf32>, vector<10x40xf32>, vector<2x40xf32> -> vector<2x40xf32>
    %33 = arith.addf %31, %32 : vector<2x40xf32>
    %34 = arith.negf %33 : vector<2x40xf32>
    %35 = math.exp %34 : vector<2x40xf32>
    %cst_28 = arith.constant 1.000000e+00 : f32
    %36 = vector.broadcast %cst_28 : f32 to vector<2x40xf32>
    %37 = arith.addf %36, %35 : vector<2x40xf32>
    %38 = arith.divf %36, %37 : vector<2x40xf32>
    %39 = math.tanh %33 : vector<2x40xf32>
    %40 = vector.extract_strided_slice %38 {offsets = [0, 0], sizes = [2, 10], strides = [1, 1]} : vector<2x40xf32> to vector<2x10xf32>
    %41 = vector.extract_strided_slice %38 {offsets = [0, 10], sizes = [2, 10], strides = [1, 1]} : vector<2x40xf32> to vector<2x10xf32>
    %42 = vector.extract_strided_slice %39 {offsets = [0, 20], sizes = [2, 10], strides = [1, 1]} : vector<2x40xf32> to vector<2x10xf32>
    %43 = vector.extract_strided_slice %38 {offsets = [0, 30], sizes = [2, 10], strides = [1, 1]} : vector<2x40xf32> to vector<2x10xf32>
    %44 = arith.mulf %41, %23 : vector<2x10xf32>
    %45 = arith.mulf %40, %42 : vector<2x10xf32>
    %46 = arith.addf %44, %45 : vector<2x10xf32>
    %47 = math.tanh %46 : vector<2x10xf32>
    %48 = arith.mulf %43, %47 : vector<2x10xf32>
    %49 = vector.shape_cast %29 : vector<2x1xi1> to vector<2x1xi1>
    %50 = vector.broadcast %49 : vector<2x1xi1> to vector<2x10xi1>
    %51 = arith.select %50, %48, %21 : vector<2x10xi1>, vector<2x10xf32>
    %52 = vector.shape_cast %29 : vector<2x1xi1> to vector<2x1xi1>
    %53 = vector.broadcast %52 : vector<2x1xi1> to vector<2x10xi1>
    %54 = arith.select %53, %46, %23 : vector<2x10xi1>, vector<2x10xf32>
    %c1_i32 = arith.constant 1 : i32
    %55 = vector.broadcast %c1_i32 : i32 to vector<2x1xi32>
    %56 = arith.cmpi sgt, %1, %55 : vector<2x1xi32>
    %57 = vector.extract_strided_slice %19 {offsets = [1, 0, 0], sizes = [1, 2, 40], strides = [1, 1, 1]} : vector<8x2x40xf32> to vector<1x2x40xf32>
    %58 = vector.shape_cast %57 : vector<1x2x40xf32> to vector<2x40xf32>
    %cst_29 = arith.constant dense<0.000000e+00> : vector<2x40xf32>
    %59 = tpu.matmul %51, %2, %cst_29 {dimension_numbers = #tpu.dot_dimension_numbers<[1], [0], [0], [1], [0, 0, 1, 1], [], []>, precision = #tpu.contract_precision<fp32>} : vector<2x10xf32>, vector<10x40xf32>, vector<2x40xf32> -> vector<2x40xf32>
    %60 = arith.addf %58, %59 : vector<2x40xf32>
    %61 = arith.negf %60 : vector<2x40xf32>
    %62 = math.exp %61 : vector<2x40xf32>
    %cst_30 = arith.constant 1.000000e+00 : f32
    %63 = vector.broadcast %cst_30 : f32 to vector<2x40xf32>
    %64 = arith.addf %63, %62 : vector<2x40xf32>
    %65 = arith.divf %63, %64 : vector<2x40xf32>
    %66 = math.tanh %60 : vector<2x40xf32>
    %67 = vector.extract_strided_slice %65 {offsets = [0, 0], sizes = [2, 10], strides = [1, 1]} : vector<2x40xf32> to vector<2x10xf32>
    %68 = vector.extract_strided_slice %65 {offsets = [0, 10], sizes = [2, 10], strides = [1, 1]} : vector<2x40xf32> to vector<2x10xf32>
    %69 = vector.extract_strided_slice %66 {offsets = [0, 20], sizes = [2, 10], strides = [1, 1]} : vector<2x40xf32> to vector<2x10xf32>
    %70 = vector.extract_strided_slice %65 {offsets = [0, 30], sizes = [2, 10], strides = [1, 1]} : vector<2x40xf32> to vector<2x10xf32>
    %71 = arith.mulf %68, %54 : vector<2x10xf32>
    %72 = arith.mulf %67, %69 : vector<2x10xf32>
    %73 = arith.addf %71, %72 : vector<2x10xf32>
    %74 = math.tanh %73 : vector<2x10xf32>
    %75 = arith.mulf %70, %74 : vector<2x10xf32>
    %76 = vector.shape_cast %56 : vector<2x1xi1> to vector<2x1xi1>
    %77 = vector.broadcast %76 : vector<2x1xi1> to vector<2x10xi1>
    %78 = arith.select %77, %75, %51 : vector<2x10xi1>, vector<2x10xf32>
    %79 = vector.shape_cast %56 : vector<2x1xi1> to vector<2x1xi1>
    %80 = vector.broadcast %79 : vector<2x1xi1> to vector<2x10xi1>
    %81 = arith.select %80, %73, %54 : vector<2x10xi1>, vector<2x10xf32>
    %c0_i32_31 = arith.constant 0 : i32
    %82 = vector.broadcast %c0_i32_31 : i32 to vector<2x1xi32>
    %83 = arith.cmpi sgt, %1, %82 : vector<2x1xi32>
    %cst_32 = arith.constant dense<0.000000e+00> : vector<2x40xf32>
    %84 = tpu.matmul %48, %3, %cst_32 {dimension_numbers = #tpu.dot_dimension_numbers<[1], [0], [0], [1], [0, 0, 1, 1], [], []>, precision = #tpu.contract_precision<fp32>} : vector<2x10xf32>, vector<10x40xf32>, vector<2x40xf32> -> vector<2x40xf32>
    %cst_33 = arith.constant dense<0.000000e+00> : vector<2x40xf32>
    %85 = tpu.matmul %25, %4, %cst_33 {dimension_numbers = #tpu.dot_dimension_numbers<[1], [0], [0], [1], [0, 0, 1, 1], [], []>, precision = #tpu.contract_precision<fp32>} : vector<2x10xf32>, vector<10x40xf32>, vector<2x40xf32> -> vector<2x40xf32>
    %86 = arith.addf %84, %85 : vector<2x40xf32>
    %87 = arith.addf %86, %7 : vector<2x40xf32>
    %88 = arith.negf %87 : vector<2x40xf32>
    %89 = math.exp %88 : vector<2x40xf32>
    %cst_34 = arith.constant 1.000000e+00 : f32
    %90 = vector.broadcast %cst_34 : f32 to vector<2x40xf32>
    %91 = arith.addf %90, %89 : vector<2x40xf32>
    %92 = arith.divf %90, %91 : vector<2x40xf32>
    %93 = math.tanh %87 : vector<2x40xf32>
    %94 = vector.extract_strided_slice %92 {offsets = [0, 0], sizes = [2, 10], strides = [1, 1]} : vector<2x40xf32> to vector<2x10xf32>
    %95 = vector.extract_strided_slice %92 {offsets = [0, 10], sizes = [2, 10], strides = [1, 1]} : vector<2x40xf32> to vector<2x10xf32>
    %96 = vector.extract_strided_slice %93 {offsets = [0, 20], sizes = [2, 10], strides = [1, 1]} : vector<2x40xf32> to vector<2x10xf32>
    %97 = vector.extract_strided_slice %92 {offsets = [0, 30], sizes = [2, 10], strides = [1, 1]} : vector<2x40xf32> to vector<2x10xf32>
    %98 = arith.mulf %95, %27 : vector<2x10xf32>
    %99 = arith.mulf %94, %96 : vector<2x10xf32>
    %100 = arith.addf %98, %99 : vector<2x10xf32>
    %101 = math.tanh %100 : vector<2x10xf32>
    %102 = arith.mulf %97, %101 : vector<2x10xf32>
    %cst_35 = arith.constant 0.000000e+00 : f32
    %103 = vector.shape_cast %83 : vector<2x1xi1> to vector<2x1xi1>
    %104 = vector.broadcast %103 : vector<2x1xi1> to vector<2x10xi1>
    %105 = vector.broadcast %cst_35 : f32 to vector<2x10xf32>
    %106 = arith.select %104, %102, %105 : vector<2x10xi1>, vector<2x10xf32>
    %c0_36 = arith.constant 0 : index
    %c0_37 = arith.constant 0 : index
    %c0_38 = arith.constant 0 : index
    %107 = vector.load %arg11[%c0_36, %c0_37, %c0_38] : memref<2x8x10xf32, #tpu.memory_space<vmem>>, vector<2x1x10xf32>
    %108 = vector.shape_cast %107 : vector<2x1x10xf32> to vector<2x10xf32>
    %109 = vector.shape_cast %106 : vector<2x10xf32> to vector<2x1x10xf32>
    tpu.vector_store %arg11[%c0_36, %c0_37, %c0_38], %109 {strides = array<i32>} : memref<2x8x10xf32, #tpu.memory_space<vmem>>, vector<2x1x10xf32>,
    %110 = vector.shape_cast %83 : vector<2x1xi1> to vector<2x1xi1>
    %111 = vector.broadcast %110 : vector<2x1xi1> to vector<2x10xi1>
    %112 = arith.select %111, %102, %25 : vector<2x10xi1>, vector<2x10xf32>
    %113 = vector.shape_cast %83 : vector<2x1xi1> to vector<2x1xi1>
    %114 = vector.broadcast %113 : vector<2x1xi1> to vector<2x10xi1>
    %115 = arith.select %114, %100, %27 : vector<2x10xi1>, vector<2x10xf32>
    %c2_i32 = arith.constant 2 : i32
    %116 = vector.broadcast %c2_i32 : i32 to vector<2x1xi32>
    %117 = arith.cmpi sgt, %1, %116 : vector<2x1xi32>
    %118 = vector.extract_strided_slice %19 {offsets = [2, 0, 0], sizes = [1, 2, 40], strides = [1, 1, 1]} : vector<8x2x40xf32> to vector<1x2x40xf32>
    %119 = vector.shape_cast %118 : vector<1x2x40xf32> to vector<2x40xf32>
    %cst_39 = arith.constant dense<0.000000e+00> : vector<2x40xf32>
    %120 = tpu.matmul %78, %2, %cst_39 {dimension_numbers = #tpu.dot_dimension_numbers<[1], [0], [0], [1], [0, 0, 1, 1], [], []>, precision = #tpu.contract_precision<fp32>} : vector<2x10xf32>, vector<10x40xf32>, vector<2x40xf32> -> vector<2x40xf32>
    %121 = arith.addf %119, %120 : vector<2x40xf32>
    %122 = arith.negf %121 : vector<2x40xf32>
    %123 = math.exp %122 : vector<2x40xf32>
    %cst_40 = arith.constant 1.000000e+00 : f32
    %124 = vector.broadcast %cst_40 : f32 to vector<2x40xf32>
    %125 = arith.addf %124, %123 : vector<2x40xf32>
    %126 = arith.divf %124, %125 : vector<2x40xf32>
    %127 = math.tanh %121 : vector<2x40xf32>
    %128 = vector.extract_strided_slice %126 {offsets = [0, 0], sizes = [2, 10], strides = [1, 1]} : vector<2x40xf32> to vector<2x10xf32>
    %129 = vector.extract_strided_slice %126 {offsets = [0, 10], sizes = [2, 10], strides = [1, 1]} : vector<2x40xf32> to vector<2x10xf32>
    %130 = vector.extract_strided_slice %127 {offsets = [0, 20], sizes = [2, 10], strides = [1, 1]} : vector<2x40xf32> to vector<2x10xf32>
    %131 = vector.extract_strided_slice %126 {offsets = [0, 30], sizes = [2, 10], strides = [1, 1]} : vector<2x40xf32> to vector<2x10xf32>
    %132 = arith.mulf %129, %81 : vector<2x10xf32>
    %133 = arith.mulf %128, %130 : vector<2x10xf32>
    %134 = arith.addf %132, %133 : vector<2x10xf32>
    %135 = math.tanh %134 : vector<2x10xf32>
    %136 = arith.mulf %131, %135 : vector<2x10xf32>
    %137 = vector.shape_cast %117 : vector<2x1xi1> to vector<2x1xi1>
    %138 = vector.broadcast %137 : vector<2x1xi1> to vector<2x10xi1>
    %139 = arith.select %138, %136, %78 : vector<2x10xi1>, vector<2x10xf32>
    %140 = vector.shape_cast %117 : vector<2x1xi1> to vector<2x1xi1>
    %141 = vector.broadcast %140 : vector<2x1xi1> to vector<2x10xi1>
    %142 = arith.select %141, %134, %81 : vector<2x10xi1>, vector<2x10xf32>
    %c1_i32_41 = arith.constant 1 : i32
    %143 = vector.broadcast %c1_i32_41 : i32 to vector<2x1xi32>
    %144 = arith.cmpi sgt, %1, %143 : vector<2x1xi32>
    %cst_42 = arith.constant dense<0.000000e+00> : vector<2x40xf32>
    %145 = tpu.matmul %75, %3, %cst_42 {dimension_numbers = #tpu.dot_dimension_numbers<[1], [0], [0], [1], [0, 0, 1, 1], [], []>, precision = #tpu.contract_precision<fp32>} : vector<2x10xf32>, vector<10x40xf32>, vector<2x40xf32> -> vector<2x40xf32>
    %cst_43 = arith.constant dense<0.000000e+00> : vector<2x40xf32>
    %146 = tpu.matmul %112, %4, %cst_43 {dimension_numbers = #tpu.dot_dimension_numbers<[1], [0], [0], [1], [0, 0, 1, 1], [], []>, precision = #tpu.contract_precision<fp32>} : vector<2x10xf32>, vector<10x40xf32>, vector<2x40xf32> -> vector<2x40xf32>
    %147 = arith.addf %145, %146 : vector<2x40xf32>
    %148 = arith.addf %147, %7 : vector<2x40xf32>
    %149 = arith.negf %148 : vector<2x40xf32>
    %150 = math.exp %149 : vector<2x40xf32>
    %cst_44 = arith.constant 1.000000e+00 : f32
    %151 = vector.broadcast %cst_44 : f32 to vector<2x40xf32>
    %152 = arith.addf %151, %150 : vector<2x40xf32>
    %153 = arith.divf %151, %152 : vector<2x40xf32>
    %154 = math.tanh %148 : vector<2x40xf32>
    %155 = vector.extract_strided_slice %153 {offsets = [0, 0], sizes = [2, 10], strides = [1, 1]} : vector<2x40xf32> to vector<2x10xf32>
    %156 = vector.extract_strided_slice %153 {offsets = [0, 10], sizes = [2, 10], strides = [1, 1]} : vector<2x40xf32> to vector<2x10xf32>
    %157 = vector.extract_strided_slice %154 {offsets = [0, 20], sizes = [2, 10], strides = [1, 1]} : vector<2x40xf32> to vector<2x10xf32>
    %158 = vector.extract_strided_slice %153 {offsets = [0, 30], sizes = [2, 10], strides = [1, 1]} : vector<2x40xf32> to vector<2x10xf32>
    %159 = arith.mulf %156, %115 : vector<2x10xf32>
    %160 = arith.mulf %155, %157 : vector<2x10xf32>
    %161 = arith.addf %159, %160 : vector<2x10xf32>
    %162 = math.tanh %161 : vector<2x10xf32>
    %163 = arith.mulf %158, %162 : vector<2x10xf32>
    %cst_45 = arith.constant 0.000000e+00 : f32
    %164 = vector.shape_cast %144 : vector<2x1xi1> to vector<2x1xi1>
    %165 = vector.broadcast %164 : vector<2x1xi1> to vector<2x10xi1>
    %166 = vector.broadcast %cst_45 : f32 to vector<2x10xf32>
    %167 = arith.select %165, %163, %166 : vector<2x10xi1>, vector<2x10xf32>
    %c0_46 = arith.constant 0 : index
    %c1_47 = arith.constant 1 : index
    %c0_48 = arith.constant 0 : index
    %168 = vector.load %arg11[%c0_46, %c1_47, %c0_48] : memref<2x8x10xf32, #tpu.memory_space<vmem>>, vector<2x1x10xf32>
    %169 = vector.shape_cast %168 : vector<2x1x10xf32> to vector<2x10xf32>
    %170 = vector.shape_cast %167 : vector<2x10xf32> to vector<2x1x10xf32>
    tpu.vector_store %arg11[%c0_46, %c1_47, %c0_48], %170 {strides = array<i32>} : memref<2x8x10xf32, #tpu.memory_space<vmem>>, vector<2x1x10xf32>,
    %171 = vector.shape_cast %144 : vector<2x1xi1> to vector<2x1xi1>
    %172 = vector.broadcast %171 : vector<2x1xi1> to vector<2x10xi1>
    %173 = arith.select %172, %163, %112 : vector<2x10xi1>, vector<2x10xf32>
    %174 = vector.shape_cast %144 : vector<2x1xi1> to vector<2x1xi1>
    %175 = vector.broadcast %174 : vector<2x1xi1> to vector<2x10xi1>
    %176 = arith.select %175, %161, %115 : vector<2x10xi1>, vector<2x10xf32>
    %c3_i32 = arith.constant 3 : i32
    %177 = vector.broadcast %c3_i32 : i32 to vector<2x1xi32>
    %178 = arith.cmpi sgt, %1, %177 : vector<2x1xi32>
    %179 = vector.extract_strided_slice %19 {offsets = [3, 0, 0], sizes = [1, 2, 40], strides = [1, 1, 1]} : vector<8x2x40xf32> to vector<1x2x40xf32>
    %180 = vector.shape_cast %179 : vector<1x2x40xf32> to vector<2x40xf32>
    %cst_49 = arith.constant dense<0.000000e+00> : vector<2x40xf32>
    %181 = tpu.matmul %139, %2, %cst_49 {dimension_numbers = #tpu.dot_dimension_numbers<[1], [0], [0], [1], [0, 0, 1, 1], [], []>, precision = #tpu.contract_precision<fp32>} : vector<2x10xf32>, vector<10x40xf32>, vector<2x40xf32> -> vector<2x40xf32>
    %182 = arith.addf %180, %181 : vector<2x40xf32>
    %183 = arith.negf %182 : vector<2x40xf32>
    %184 = math.exp %183 : vector<2x40xf32>
    %cst_50 = arith.constant 1.000000e+00 : f32
    %185 = vector.broadcast %cst_50 : f32 to vector<2x40xf32>
    %186 = arith.addf %185, %184 : vector<2x40xf32>
    %187 = arith.divf %185, %186 : vector<2x40xf32>
    %188 = math.tanh %182 : vector<2x40xf32>
    %189 = vector.extract_strided_slice %187 {offsets = [0, 0], sizes = [2, 10], strides = [1, 1]} : vector<2x40xf32> to vector<2x10xf32>
    %190 = vector.extract_strided_slice %187 {offsets = [0, 10], sizes = [2, 10], strides = [1, 1]} : vector<2x40xf32> to vector<2x10xf32>
    %191 = vector.extract_strided_slice %188 {offsets = [0, 20], sizes = [2, 10], strides = [1, 1]} : vector<2x40xf32> to vector<2x10xf32>
    %192 = vector.extract_strided_slice %187 {offsets = [0, 30], sizes = [2, 10], strides = [1, 1]} : vector<2x40xf32> to vector<2x10xf32>
    %193 = arith.mulf %190, %142 : vector<2x10xf32>
    %194 = arith.mulf %189, %191 : vector<2x10xf32>
    %195 = arith.addf %193, %194 : vector<2x10xf32>
    %196 = math.tanh %195 : vector<2x10xf32>
    %197 = arith.mulf %192, %196 : vector<2x10xf32>
    %198 = vector.shape_cast %178 : vector<2x1xi1> to vector<2x1xi1>
    %199 = vector.broadcast %198 : vector<2x1xi1> to vector<2x10xi1>
    %200 = arith.select %199, %197, %139 : vector<2x10xi1>, vector<2x10xf32>
    %201 = vector.shape_cast %178 : vector<2x1xi1> to vector<2x1xi1>
    %202 = vector.broadcast %201 : vector<2x1xi1> to vector<2x10xi1>
    %203 = arith.select %202, %195, %142 : vector<2x10xi1>, vector<2x10xf32>
    %c2_i32_51 = arith.constant 2 : i32
    %204 = vector.broadcast %c2_i32_51 : i32 to vector<2x1xi32>
    %205 = arith.cmpi sgt, %1, %204 : vector<2x1xi32>
    %cst_52 = arith.constant dense<0.000000e+00> : vector<2x40xf32>
    %206 = tpu.matmul %136, %3, %cst_52 {dimension_numbers = #tpu.dot_dimension_numbers<[1], [0], [0], [1], [0, 0, 1, 1], [], []>, precision = #tpu.contract_precision<fp32>} : vector<2x10xf32>, vector<10x40xf32>, vector<2x40xf32> -> vector<2x40xf32>
    %cst_53 = arith.constant dense<0.000000e+00> : vector<2x40xf32>
    %207 = tpu.matmul %173, %4, %cst_53 {dimension_numbers = #tpu.dot_dimension_numbers<[1], [0], [0], [1], [0, 0, 1, 1], [], []>, precision = #tpu.contract_precision<fp32>} : vector<2x10xf32>, vector<10x40xf32>, vector<2x40xf32> -> vector<2x40xf32>
    %208 = arith.addf %206, %207 : vector<2x40xf32>
    %209 = arith.addf %208, %7 : vector<2x40xf32>
    %210 = arith.negf %209 : vector<2x40xf32>
    %211 = math.exp %210 : vector<2x40xf32>
    %cst_54 = arith.constant 1.000000e+00 : f32
    %212 = vector.broadcast %cst_54 : f32 to vector<2x40xf32>
    %213 = arith.addf %212, %211 : vector<2x40xf32>
    %214 = arith.divf %212, %213 : vector<2x40xf32>
    %215 = math.tanh %209 : vector<2x40xf32>
    %216 = vector.extract_strided_slice %214 {offsets = [0, 0], sizes = [2, 10], strides = [1, 1]} : vector<2x40xf32> to vector<2x10xf32>
    %217 = vector.extract_strided_slice %214 {offsets = [0, 10], sizes = [2, 10], strides = [1, 1]} : vector<2x40xf32> to vector<2x10xf32>
    %218 = vector.extract_strided_slice %215 {offsets = [0, 20], sizes = [2, 10], strides = [1, 1]} : vector<2x40xf32> to vector<2x10xf32>
    %219 = vector.extract_strided_slice %214 {offsets = [0, 30], sizes = [2, 10], strides = [1, 1]} : vector<2x40xf32> to vector<2x10xf32>
    %220 = arith.mulf %217, %176 : vector<2x10xf32>
    %221 = arith.mulf %216, %218 : vector<2x10xf32>
    %222 = arith.addf %220, %221 : vector<2x10xf32>
    %223 = math.tanh %222 : vector<2x10xf32>
    %224 = arith.mulf %219, %223 : vector<2x10xf32>
    %cst_55 = arith.constant 0.000000e+00 : f32
    %225 = vector.shape_cast %205 : vector<2x1xi1> to vector<2x1xi1>
    %226 = vector.broadcast %225 : vector<2x1xi1> to vector<2x10xi1>
    %227 = vector.broadcast %cst_55 : f32 to vector<2x10xf32>
    %228 = arith.select %226, %224, %227 : vector<2x10xi1>, vector<2x10xf32>
    %c0_56 = arith.constant 0 : index
    %c2 = arith.constant 2 : index
    %c0_57 = arith.constant 0 : index
    %229 = vector.load %arg11[%c0_56, %c2, %c0_57] : memref<2x8x10xf32, #tpu.memory_space<vmem>>, vector<2x1x10xf32>
    %230 = vector.shape_cast %229 : vector<2x1x10xf32> to vector<2x10xf32>
    %231 = vector.shape_cast %228 : vector<2x10xf32> to vector<2x1x10xf32>
    tpu.vector_store %arg11[%c0_56, %c2, %c0_57], %231 {strides = array<i32>} : memref<2x8x10xf32, #tpu.memory_space<vmem>>, vector<2x1x10xf32>,
    %232 = vector.shape_cast %205 : vector<2x1xi1> to vector<2x1xi1>
    %233 = vector.broadcast %232 : vector<2x1xi1> to vector<2x10xi1>
    %234 = arith.select %233, %224, %173 : vector<2x10xi1>, vector<2x10xf32>
    %235 = vector.shape_cast %205 : vector<2x1xi1> to vector<2x1xi1>
    %236 = vector.broadcast %235 : vector<2x1xi1> to vector<2x10xi1>
    %237 = arith.select %236, %222, %176 : vector<2x10xi1>, vector<2x10xf32>
    %c4_i32 = arith.constant 4 : i32
    %238 = vector.broadcast %c4_i32 : i32 to vector<2x1xi32>
    %239 = arith.cmpi sgt, %1, %238 : vector<2x1xi32>
    %240 = vector.extract_strided_slice %19 {offsets = [4, 0, 0], sizes = [1, 2, 40], strides = [1, 1, 1]} : vector<8x2x40xf32> to vector<1x2x40xf32>
    %241 = vector.shape_cast %240 : vector<1x2x40xf32> to vector<2x40xf32>
    %cst_58 = arith.constant dense<0.000000e+00> : vector<2x40xf32>
    %242 = tpu.matmul %200, %2, %cst_58 {dimension_numbers = #tpu.dot_dimension_numbers<[1], [0], [0], [1], [0, 0, 1, 1], [], []>, precision = #tpu.contract_precision<fp32>} : vector<2x10xf32>, vector<10x40xf32>, vector<2x40xf32> -> vector<2x40xf32>
    %243 = arith.addf %241, %242 : vector<2x40xf32>
    %244 = arith.negf %243 : vector<2x40xf32>
    %245 = math.exp %244 : vector<2x40xf32>
    %cst_59 = arith.constant 1.000000e+00 : f32
    %246 = vector.broadcast %cst_59 : f32 to vector<2x40xf32>
    %247 = arith.addf %246, %245 : vector<2x40xf32>
    %248 = arith.divf %246, %247 : vector<2x40xf32>
    %249 = math.tanh %243 : vector<2x40xf32>
    %250 = vector.extract_strided_slice %248 {offsets = [0, 0], sizes = [2, 10], strides = [1, 1]} : vector<2x40xf32> to vector<2x10xf32>
    %251 = vector.extract_strided_slice %248 {offsets = [0, 10], sizes = [2, 10], strides = [1, 1]} : vector<2x40xf32> to vector<2x10xf32>
    %252 = vector.extract_strided_slice %249 {offsets = [0, 20], sizes = [2, 10], strides = [1, 1]} : vector<2x40xf32> to vector<2x10xf32>
    %253 = vector.extract_strided_slice %248 {offsets = [0, 30], sizes = [2, 10], strides = [1, 1]} : vector<2x40xf32> to vector<2x10xf32>
    %254 = arith.mulf %251, %203 : vector<2x10xf32>
    %255 = arith.mulf %250, %252 : vector<2x10xf32>
    %256 = arith.addf %254, %255 : vector<2x10xf32>
    %257 = math.tanh %256 : vector<2x10xf32>
    %258 = arith.mulf %253, %257 : vector<2x10xf32>
    %259 = vector.shape_cast %239 : vector<2x1xi1> to vector<2x1xi1>
    %260 = vector.broadcast %259 : vector<2x1xi1> to vector<2x10xi1>
    %261 = arith.select %260, %258, %200 : vector<2x10xi1>, vector<2x10xf32>
    %262 = vector.shape_cast %239 : vector<2x1xi1> to vector<2x1xi1>
    %263 = vector.broadcast %262 : vector<2x1xi1> to vector<2x10xi1>
    %264 = arith.select %263, %256, %203 : vector<2x10xi1>, vector<2x10xf32>
    %c3_i32_60 = arith.constant 3 : i32
    %265 = vector.broadcast %c3_i32_60 : i32 to vector<2x1xi32>
    %266 = arith.cmpi sgt, %1, %265 : vector<2x1xi32>
    %cst_61 = arith.constant dense<0.000000e+00> : vector<2x40xf32>
    %267 = tpu.matmul %197, %3, %cst_61 {dimension_numbers = #tpu.dot_dimension_numbers<[1], [0], [0], [1], [0, 0, 1, 1], [], []>, precision = #tpu.contract_precision<fp32>} : vector<2x10xf32>, vector<10x40xf32>, vector<2x40xf32> -> vector<2x40xf32>
    %cst_62 = arith.constant dense<0.000000e+00> : vector<2x40xf32>
    %268 = tpu.matmul %234, %4, %cst_62 {dimension_numbers = #tpu.dot_dimension_numbers<[1], [0], [0], [1], [0, 0, 1, 1], [], []>, precision = #tpu.contract_precision<fp32>} : vector<2x10xf32>, vector<10x40xf32>, vector<2x40xf32> -> vector<2x40xf32>
    %269 = arith.addf %267, %268 : vector<2x40xf32>
    %270 = arith.addf %269, %7 : vector<2x40xf32>
    %271 = arith.negf %270 : vector<2x40xf32>
    %272 = math.exp %271 : vector<2x40xf32>
    %cst_63 = arith.constant 1.000000e+00 : f32
    %273 = vector.broadcast %cst_63 : f32 to vector<2x40xf32>
    %274 = arith.addf %273, %272 : vector<2x40xf32>
    %275 = arith.divf %273, %274 : vector<2x40xf32>
    %276 = math.tanh %270 : vector<2x40xf32>
    %277 = vector.extract_strided_slice %275 {offsets = [0, 0], sizes = [2, 10], strides = [1, 1]} : vector<2x40xf32> to vector<2x10xf32>
    %278 = vector.extract_strided_slice %275 {offsets = [0, 10], sizes = [2, 10], strides = [1, 1]} : vector<2x40xf32> to vector<2x10xf32>
    %279 = vector.extract_strided_slice %276 {offsets = [0, 20], sizes = [2, 10], strides = [1, 1]} : vector<2x40xf32> to vector<2x10xf32>
    %280 = vector.extract_strided_slice %275 {offsets = [0, 30], sizes = [2, 10], strides = [1, 1]} : vector<2x40xf32> to vector<2x10xf32>
    %281 = arith.mulf %278, %237 : vector<2x10xf32>
    %282 = arith.mulf %277, %279 : vector<2x10xf32>
    %283 = arith.addf %281, %282 : vector<2x10xf32>
    %284 = math.tanh %283 : vector<2x10xf32>
    %285 = arith.mulf %280, %284 : vector<2x10xf32>
    %cst_64 = arith.constant 0.000000e+00 : f32
    %286 = vector.shape_cast %266 : vector<2x1xi1> to vector<2x1xi1>
    %287 = vector.broadcast %286 : vector<2x1xi1> to vector<2x10xi1>
    %288 = vector.broadcast %cst_64 : f32 to vector<2x10xf32>
    %289 = arith.select %287, %285, %288 : vector<2x10xi1>, vector<2x10xf32>
    %c0_65 = arith.constant 0 : index
    %c3 = arith.constant 3 : index
    %c0_66 = arith.constant 0 : index
    %290 = vector.load %arg11[%c0_65, %c3, %c0_66] : memref<2x8x10xf32, #tpu.memory_space<vmem>>, vector<2x1x10xf32>
    %291 = vector.shape_cast %290 : vector<2x1x10xf32> to vector<2x10xf32>
    %292 = vector.shape_cast %289 : vector<2x10xf32> to vector<2x1x10xf32>
    tpu.vector_store %arg11[%c0_65, %c3, %c0_66], %292 {strides = array<i32>} : memref<2x8x10xf32, #tpu.memory_space<vmem>>, vector<2x1x10xf32>,
    %293 = vector.shape_cast %266 : vector<2x1xi1> to vector<2x1xi1>
    %294 = vector.broadcast %293 : vector<2x1xi1> to vector<2x10xi1>
    %295 = arith.select %294, %285, %234 : vector<2x10xi1>, vector<2x10xf32>
    %296 = vector.shape_cast %266 : vector<2x1xi1> to vector<2x1xi1>
    %297 = vector.broadcast %296 : vector<2x1xi1> to vector<2x10xi1>
    %298 = arith.select %297, %283, %237 : vector<2x10xi1>, vector<2x10xf32>
    %c5_i32 = arith.constant 5 : i32
    %299 = vector.broadcast %c5_i32 : i32 to vector<2x1xi32>
    %300 = arith.cmpi sgt, %1, %299 : vector<2x1xi32>
    %301 = vector.extract_strided_slice %19 {offsets = [5, 0, 0], sizes = [1, 2, 40], strides = [1, 1, 1]} : vector<8x2x40xf32> to vector<1x2x40xf32>
    %302 = vector.shape_cast %301 : vector<1x2x40xf32> to vector<2x40xf32>
    %cst_67 = arith.constant dense<0.000000e+00> : vector<2x40xf32>
    %303 = tpu.matmul %261, %2, %cst_67 {dimension_numbers = #tpu.dot_dimension_numbers<[1], [0], [0], [1], [0, 0, 1, 1], [], []>, precision = #tpu.contract_precision<fp32>} : vector<2x10xf32>, vector<10x40xf32>, vector<2x40xf32> -> vector<2x40xf32>
    %304 = arith.addf %302, %303 : vector<2x40xf32>
    %305 = arith.negf %304 : vector<2x40xf32>
    %306 = math.exp %305 : vector<2x40xf32>
    %cst_68 = arith.constant 1.000000e+00 : f32
    %307 = vector.broadcast %cst_68 : f32 to vector<2x40xf32>
    %308 = arith.addf %307, %306 : vector<2x40xf32>
    %309 = arith.divf %307, %308 : vector<2x40xf32>
    %310 = math.tanh %304 : vector<2x40xf32>
    %311 = vector.extract_strided_slice %309 {offsets = [0, 0], sizes = [2, 10], strides = [1, 1]} : vector<2x40xf32> to vector<2x10xf32>
    %312 = vector.extract_strided_slice %309 {offsets = [0, 10], sizes = [2, 10], strides = [1, 1]} : vector<2x40xf32> to vector<2x10xf32>
    %313 = vector.extract_strided_slice %310 {offsets = [0, 20], sizes = [2, 10], strides = [1, 1]} : vector<2x40xf32> to vector<2x10xf32>
    %314 = vector.extract_strided_slice %309 {offsets = [0, 30], sizes = [2, 10], strides = [1, 1]} : vector<2x40xf32> to vector<2x10xf32>
    %315 = arith.mulf %312, %264 : vector<2x10xf32>
    %316 = arith.mulf %311, %313 : vector<2x10xf32>
    %317 = arith.addf %315, %316 : vector<2x10xf32>
    %318 = math.tanh %317 : vector<2x10xf32>
    %319 = arith.mulf %314, %318 : vector<2x10xf32>
    %320 = vector.shape_cast %300 : vector<2x1xi1> to vector<2x1xi1>
    %321 = vector.broadcast %320 : vector<2x1xi1> to vector<2x10xi1>
    %322 = arith.select %321, %319, %261 : vector<2x10xi1>, vector<2x10xf32>
    %323 = vector.shape_cast %300 : vector<2x1xi1> to vector<2x1xi1>
    %324 = vector.broadcast %323 : vector<2x1xi1> to vector<2x10xi1>
    %325 = arith.select %324, %317, %264 : vector<2x10xi1>, vector<2x10xf32>
    %c4_i32_69 = arith.constant 4 : i32
    %326 = vector.broadcast %c4_i32_69 : i32 to vector<2x1xi32>
    %327 = arith.cmpi sgt, %1, %326 : vector<2x1xi32>
    %cst_70 = arith.constant dense<0.000000e+00> : vector<2x40xf32>
    %328 = tpu.matmul %258, %3, %cst_70 {dimension_numbers = #tpu.dot_dimension_numbers<[1], [0], [0], [1], [0, 0, 1, 1], [], []>, precision = #tpu.contract_precision<fp32>} : vector<2x10xf32>, vector<10x40xf32>, vector<2x40xf32> -> vector<2x40xf32>
    %cst_71 = arith.constant dense<0.000000e+00> : vector<2x40xf32>
    %329 = tpu.matmul %295, %4, %cst_71 {dimension_numbers = #tpu.dot_dimension_numbers<[1], [0], [0], [1], [0, 0, 1, 1], [], []>, precision = #tpu.contract_precision<fp32>} : vector<2x10xf32>, vector<10x40xf32>, vector<2x40xf32> -> vector<2x40xf32>
    %330 = arith.addf %328, %329 : vector<2x40xf32>
    %331 = arith.addf %330, %7 : vector<2x40xf32>
    %332 = arith.negf %331 : vector<2x40xf32>
    %333 = math.exp %332 : vector<2x40xf32>
    %cst_72 = arith.constant 1.000000e+00 : f32
    %334 = vector.broadcast %cst_72 : f32 to vector<2x40xf32>
    %335 = arith.addf %334, %333 : vector<2x40xf32>
    %336 = arith.divf %334, %335 : vector<2x40xf32>
    %337 = math.tanh %331 : vector<2x40xf32>
    %338 = vector.extract_strided_slice %336 {offsets = [0, 0], sizes = [2, 10], strides = [1, 1]} : vector<2x40xf32> to vector<2x10xf32>
    %339 = vector.extract_strided_slice %336 {offsets = [0, 10], sizes = [2, 10], strides = [1, 1]} : vector<2x40xf32> to vector<2x10xf32>
    %340 = vector.extract_strided_slice %337 {offsets = [0, 20], sizes = [2, 10], strides = [1, 1]} : vector<2x40xf32> to vector<2x10xf32>
    %341 = vector.extract_strided_slice %336 {offsets = [0, 30], sizes = [2, 10], strides = [1, 1]} : vector<2x40xf32> to vector<2x10xf32>
    %342 = arith.mulf %339, %298 : vector<2x10xf32>
    %343 = arith.mulf %338, %340 : vector<2x10xf32>
    %344 = arith.addf %342, %343 : vector<2x10xf32>
    %345 = math.tanh %344 : vector<2x10xf32>
    %346 = arith.mulf %341, %345 : vector<2x10xf32>
    %cst_73 = arith.constant 0.000000e+00 : f32
    %347 = vector.shape_cast %327 : vector<2x1xi1> to vector<2x1xi1>
    %348 = vector.broadcast %347 : vector<2x1xi1> to vector<2x10xi1>
    %349 = vector.broadcast %cst_73 : f32 to vector<2x10xf32>
    %350 = arith.select %348, %346, %349 : vector<2x10xi1>, vector<2x10xf32>
    %c0_74 = arith.constant 0 : index
    %c4 = arith.constant 4 : index
    %c0_75 = arith.constant 0 : index
    %351 = vector.load %arg11[%c0_74, %c4, %c0_75] : memref<2x8x10xf32, #tpu.memory_space<vmem>>, vector<2x1x10xf32>
    %352 = vector.shape_cast %351 : vector<2x1x10xf32> to vector<2x10xf32>
    %353 = vector.shape_cast %350 : vector<2x10xf32> to vector<2x1x10xf32>
    tpu.vector_store %arg11[%c0_74, %c4, %c0_75], %353 {strides = array<i32>} : memref<2x8x10xf32, #tpu.memory_space<vmem>>, vector<2x1x10xf32>,
    %354 = vector.shape_cast %327 : vector<2x1xi1> to vector<2x1xi1>
    %355 = vector.broadcast %354 : vector<2x1xi1> to vector<2x10xi1>
    %356 = arith.select %355, %346, %295 : vector<2x10xi1>, vector<2x10xf32>
    %357 = vector.shape_cast %327 : vector<2x1xi1> to vector<2x1xi1>
    %358 = vector.broadcast %357 : vector<2x1xi1> to vector<2x10xi1>
    %359 = arith.select %358, %344, %298 : vector<2x10xi1>, vector<2x10xf32>
    %c6_i32 = arith.constant 6 : i32
    %360 = vector.broadcast %c6_i32 : i32 to vector<2x1xi32>
    %361 = arith.cmpi sgt, %1, %360 : vector<2x1xi32>
    %362 = vector.extract_strided_slice %19 {offsets = [6, 0, 0], sizes = [1, 2, 40], strides = [1, 1, 1]} : vector<8x2x40xf32> to vector<1x2x40xf32>
    %363 = vector.shape_cast %362 : vector<1x2x40xf32> to vector<2x40xf32>
    %cst_76 = arith.constant dense<0.000000e+00> : vector<2x40xf32>
    %364 = tpu.matmul %322, %2, %cst_76 {dimension_numbers = #tpu.dot_dimension_numbers<[1], [0], [0], [1], [0, 0, 1, 1], [], []>, precision = #tpu.contract_precision<fp32>} : vector<2x10xf32>, vector<10x40xf32>, vector<2x40xf32> -> vector<2x40xf32>
    %365 = arith.addf %363, %364 : vector<2x40xf32>
    %366 = arith.negf %365 : vector<2x40xf32>
    %367 = math.exp %366 : vector<2x40xf32>
    %cst_77 = arith.constant 1.000000e+00 : f32
    %368 = vector.broadcast %cst_77 : f32 to vector<2x40xf32>
    %369 = arith.addf %368, %367 : vector<2x40xf32>
    %370 = arith.divf %368, %369 : vector<2x40xf32>
    %371 = math.tanh %365 : vector<2x40xf32>
    %372 = vector.extract_strided_slice %370 {offsets = [0, 0], sizes = [2, 10], strides = [1, 1]} : vector<2x40xf32> to vector<2x10xf32>
    %373 = vector.extract_strided_slice %370 {offsets = [0, 10], sizes = [2, 10], strides = [1, 1]} : vector<2x40xf32> to vector<2x10xf32>
    %374 = vector.extract_strided_slice %371 {offsets = [0, 20], sizes = [2, 10], strides = [1, 1]} : vector<2x40xf32> to vector<2x10xf32>
    %375 = vector.extract_strided_slice %370 {offsets = [0, 30], sizes = [2, 10], strides = [1, 1]} : vector<2x40xf32> to vector<2x10xf32>
    %376 = arith.mulf %373, %325 : vector<2x10xf32>
    %377 = arith.mulf %372, %374 : vector<2x10xf32>
    %378 = arith.addf %376, %377 : vector<2x10xf32>
    %379 = math.tanh %378 : vector<2x10xf32>
    %380 = arith.mulf %375, %379 : vector<2x10xf32>
    %381 = vector.shape_cast %361 : vector<2x1xi1> to vector<2x1xi1>
    %382 = vector.broadcast %381 : vector<2x1xi1> to vector<2x10xi1>
    %383 = arith.select %382, %380, %322 : vector<2x10xi1>, vector<2x10xf32>
    %384 = vector.shape_cast %361 : vector<2x1xi1> to vector<2x1xi1>
    %385 = vector.broadcast %384 : vector<2x1xi1> to vector<2x10xi1>
    %386 = arith.select %385, %378, %325 : vector<2x10xi1>, vector<2x10xf32>
    %c5_i32_78 = arith.constant 5 : i32
    %387 = vector.broadcast %c5_i32_78 : i32 to vector<2x1xi32>
    %388 = arith.cmpi sgt, %1, %387 : vector<2x1xi32>
    %cst_79 = arith.constant dense<0.000000e+00> : vector<2x40xf32>
    %389 = tpu.matmul %319, %3, %cst_79 {dimension_numbers = #tpu.dot_dimension_numbers<[1], [0], [0], [1], [0, 0, 1, 1], [], []>, precision = #tpu.contract_precision<fp32>} : vector<2x10xf32>, vector<10x40xf32>, vector<2x40xf32> -> vector<2x40xf32>
    %cst_80 = arith.constant dense<0.000000e+00> : vector<2x40xf32>
    %390 = tpu.matmul %356, %4, %cst_80 {dimension_numbers = #tpu.dot_dimension_numbers<[1], [0], [0], [1], [0, 0, 1, 1], [], []>, precision = #tpu.contract_precision<fp32>} : vector<2x10xf32>, vector<10x40xf32>, vector<2x40xf32> -> vector<2x40xf32>
    %391 = arith.addf %389, %390 : vector<2x40xf32>
    %392 = arith.addf %391, %7 : vector<2x40xf32>
    %393 = arith.negf %392 : vector<2x40xf32>
    %394 = math.exp %393 : vector<2x40xf32>
    %cst_81 = arith.constant 1.000000e+00 : f32
    %395 = vector.broadcast %cst_81 : f32 to vector<2x40xf32>
    %396 = arith.addf %395, %394 : vector<2x40xf32>
    %397 = arith.divf %395, %396 : vector<2x40xf32>
    %398 = math.tanh %392 : vector<2x40xf32>
    %399 = vector.extract_strided_slice %397 {offsets = [0, 0], sizes = [2, 10], strides = [1, 1]} : vector<2x40xf32> to vector<2x10xf32>
    %400 = vector.extract_strided_slice %397 {offsets = [0, 10], sizes = [2, 10], strides = [1, 1]} : vector<2x40xf32> to vector<2x10xf32>
    %401 = vector.extract_strided_slice %398 {offsets = [0, 20], sizes = [2, 10], strides = [1, 1]} : vector<2x40xf32> to vector<2x10xf32>
    %402 = vector.extract_strided_slice %397 {offsets = [0, 30], sizes = [2, 10], strides = [1, 1]} : vector<2x40xf32> to vector<2x10xf32>
    %403 = arith.mulf %400, %359 : vector<2x10xf32>
    %404 = arith.mulf %399, %401 : vector<2x10xf32>
    %405 = arith.addf %403, %404 : vector<2x10xf32>
    %406 = math.tanh %405 : vector<2x10xf32>
    %407 = arith.mulf %402, %406 : vector<2x10xf32>
    %cst_82 = arith.constant 0.000000e+00 : f32
    %408 = vector.shape_cast %388 : vector<2x1xi1> to vector<2x1xi1>
    %409 = vector.broadcast %408 : vector<2x1xi1> to vector<2x10xi1>
    %410 = vector.broadcast %cst_82 : f32 to vector<2x10xf32>
    %411 = arith.select %409, %407, %410 : vector<2x10xi1>, vector<2x10xf32>
    %c0_83 = arith.constant 0 : index
    %c5 = arith.constant 5 : index
    %c0_84 = arith.constant 0 : index
    %412 = vector.load %arg11[%c0_83, %c5, %c0_84] : memref<2x8x10xf32, #tpu.memory_space<vmem>>, vector<2x1x10xf32>
    %413 = vector.shape_cast %412 : vector<2x1x10xf32> to vector<2x10xf32>
    %414 = vector.shape_cast %411 : vector<2x10xf32> to vector<2x1x10xf32>
    tpu.vector_store %arg11[%c0_83, %c5, %c0_84], %414 {strides = array<i32>} : memref<2x8x10xf32, #tpu.memory_space<vmem>>, vector<2x1x10xf32>,
    %415 = vector.shape_cast %388 : vector<2x1xi1> to vector<2x1xi1>
    %416 = vector.broadcast %415 : vector<2x1xi1> to vector<2x10xi1>
    %417 = arith.select %416, %407, %356 : vector<2x10xi1>, vector<2x10xf32>
    %418 = vector.shape_cast %388 : vector<2x1xi1> to vector<2x1xi1>
    %419 = vector.broadcast %418 : vector<2x1xi1> to vector<2x10xi1>
    %420 = arith.select %419, %405, %359 : vector<2x10xi1>, vector<2x10xf32>
    %c7_i32 = arith.constant 7 : i32
    %421 = vector.broadcast %c7_i32 : i32 to vector<2x1xi32>
    %422 = arith.cmpi sgt, %1, %421 : vector<2x1xi32>
    %423 = vector.extract_strided_slice %19 {offsets = [7, 0, 0], sizes = [1, 2, 40], strides = [1, 1, 1]} : vector<8x2x40xf32> to vector<1x2x40xf32>
    %424 = vector.shape_cast %423 : vector<1x2x40xf32> to vector<2x40xf32>
    %cst_85 = arith.constant dense<0.000000e+00> : vector<2x40xf32>
    %425 = tpu.matmul %383, %2, %cst_85 {dimension_numbers = #tpu.dot_dimension_numbers<[1], [0], [0], [1], [0, 0, 1, 1], [], []>, precision = #tpu.contract_precision<fp32>} : vector<2x10xf32>, vector<10x40xf32>, vector<2x40xf32> -> vector<2x40xf32>
    %426 = arith.addf %424, %425 : vector<2x40xf32>
    %427 = arith.negf %426 : vector<2x40xf32>
    %428 = math.exp %427 : vector<2x40xf32>
    %cst_86 = arith.constant 1.000000e+00 : f32
    %429 = vector.broadcast %cst_86 : f32 to vector<2x40xf32>
    %430 = arith.addf %429, %428 : vector<2x40xf32>
    %431 = arith.divf %429, %430 : vector<2x40xf32>
    %432 = math.tanh %426 : vector<2x40xf32>
    %433 = vector.extract_strided_slice %431 {offsets = [0, 0], sizes = [2, 10], strides = [1, 1]} : vector<2x40xf32> to vector<2x10xf32>
    %434 = vector.extract_strided_slice %431 {offsets = [0, 10], sizes = [2, 10], strides = [1, 1]} : vector<2x40xf32> to vector<2x10xf32>
    %435 = vector.extract_strided_slice %432 {offsets = [0, 20], sizes = [2, 10], strides = [1, 1]} : vector<2x40xf32> to vector<2x10xf32>
    %436 = vector.extract_strided_slice %431 {offsets = [0, 30], sizes = [2, 10], strides = [1, 1]} : vector<2x40xf32> to vector<2x10xf32>
    %437 = arith.mulf %434, %386 : vector<2x10xf32>
    %438 = arith.mulf %433, %435 : vector<2x10xf32>
    %439 = arith.addf %437, %438 : vector<2x10xf32>
    %440 = math.tanh %439 : vector<2x10xf32>
    %441 = arith.mulf %436, %440 : vector<2x10xf32>
    %442 = vector.shape_cast %422 : vector<2x1xi1> to vector<2x1xi1>
    %443 = vector.broadcast %442 : vector<2x1xi1> to vector<2x10xi1>
    %444 = arith.select %443, %441, %383 : vector<2x10xi1>, vector<2x10xf32>
    %445 = vector.shape_cast %422 : vector<2x1xi1> to vector<2x1xi1>
    %446 = vector.broadcast %445 : vector<2x1xi1> to vector<2x10xi1>
    %447 = arith.select %446, %439, %386 : vector<2x10xi1>, vector<2x10xf32>
    %c6_i32_87 = arith.constant 6 : i32
    %448 = vector.broadcast %c6_i32_87 : i32 to vector<2x1xi32>
    %449 = arith.cmpi sgt, %1, %448 : vector<2x1xi32>
    %cst_88 = arith.constant dense<0.000000e+00> : vector<2x40xf32>
    %450 = tpu.matmul %380, %3, %cst_88 {dimension_numbers = #tpu.dot_dimension_numbers<[1], [0], [0], [1], [0, 0, 1, 1], [], []>, precision = #tpu.contract_precision<fp32>} : vector<2x10xf32>, vector<10x40xf32>, vector<2x40xf32> -> vector<2x40xf32>
    %cst_89 = arith.constant dense<0.000000e+00> : vector<2x40xf32>
    %451 = tpu.matmul %417, %4, %cst_89 {dimension_numbers = #tpu.dot_dimension_numbers<[1], [0], [0], [1], [0, 0, 1, 1], [], []>, precision = #tpu.contract_precision<fp32>} : vector<2x10xf32>, vector<10x40xf32>, vector<2x40xf32> -> vector<2x40xf32>
    %452 = arith.addf %450, %451 : vector<2x40xf32>
    %453 = arith.addf %452, %7 : vector<2x40xf32>
    %454 = arith.negf %453 : vector<2x40xf32>
    %455 = math.exp %454 : vector<2x40xf32>
    %cst_90 = arith.constant 1.000000e+00 : f32
    %456 = vector.broadcast %cst_90 : f32 to vector<2x40xf32>
    %457 = arith.addf %456, %455 : vector<2x40xf32>
    %458 = arith.divf %456, %457 : vector<2x40xf32>
    %459 = math.tanh %453 : vector<2x40xf32>
    %460 = vector.extract_strided_slice %458 {offsets = [0, 0], sizes = [2, 10], strides = [1, 1]} : vector<2x40xf32> to vector<2x10xf32>
    %461 = vector.extract_strided_slice %458 {offsets = [0, 10], sizes = [2, 10], strides = [1, 1]} : vector<2x40xf32> to vector<2x10xf32>
    %462 = vector.extract_strided_slice %459 {offsets = [0, 20], sizes = [2, 10], strides = [1, 1]} : vector<2x40xf32> to vector<2x10xf32>
    %463 = vector.extract_strided_slice %458 {offsets = [0, 30], sizes = [2, 10], strides = [1, 1]} : vector<2x40xf32> to vector<2x10xf32>
    %464 = arith.mulf %461, %420 : vector<2x10xf32>
    %465 = arith.mulf %460, %462 : vector<2x10xf32>
    %466 = arith.addf %464, %465 : vector<2x10xf32>
    %467 = math.tanh %466 : vector<2x10xf32>
    %468 = arith.mulf %463, %467 : vector<2x10xf32>
    %cst_91 = arith.constant 0.000000e+00 : f32
    %469 = vector.shape_cast %449 : vector<2x1xi1> to vector<2x1xi1>
    %470 = vector.broadcast %469 : vector<2x1xi1> to vector<2x10xi1>
    %471 = vector.broadcast %cst_91 : f32 to vector<2x10xf32>
    %472 = arith.select %470, %468, %471 : vector<2x10xi1>, vector<2x10xf32>
    %c0_92 = arith.constant 0 : index
    %c6 = arith.constant 6 : index
    %c0_93 = arith.constant 0 : index
    %473 = vector.load %arg11[%c0_92, %c6, %c0_93] : memref<2x8x10xf32, #tpu.memory_space<vmem>>, vector<2x1x10xf32>
    %474 = vector.shape_cast %473 : vector<2x1x10xf32> to vector<2x10xf32>
    %475 = vector.shape_cast %472 : vector<2x10xf32> to vector<2x1x10xf32>
    tpu.vector_store %arg11[%c0_92, %c6, %c0_93], %475 {strides = array<i32>} : memref<2x8x10xf32, #tpu.memory_space<vmem>>, vector<2x1x10xf32>,
    %476 = vector.shape_cast %449 : vector<2x1xi1> to vector<2x1xi1>
    %477 = vector.broadcast %476 : vector<2x1xi1> to vector<2x10xi1>
    %478 = arith.select %477, %468, %417 : vector<2x10xi1>, vector<2x10xf32>
    %479 = vector.shape_cast %449 : vector<2x1xi1> to vector<2x1xi1>
    %480 = vector.broadcast %479 : vector<2x1xi1> to vector<2x10xi1>
    %481 = arith.select %480, %466, %420 : vector<2x10xi1>, vector<2x10xf32>
    %c7_i32_94 = arith.constant 7 : i32
    %482 = vector.broadcast %c7_i32_94 : i32 to vector<2x1xi32>
    %483 = arith.cmpi sgt, %1, %482 : vector<2x1xi32>
    %cst_95 = arith.constant dense<0.000000e+00> : vector<2x40xf32>
    %484 = tpu.matmul %441, %3, %cst_95 {dimension_numbers = #tpu.dot_dimension_numbers<[1], [0], [0], [1], [0, 0, 1, 1], [], []>, precision = #tpu.contract_precision<fp32>} : vector<2x10xf32>, vector<10x40xf32>, vector<2x40xf32> -> vector<2x40xf32>
    %cst_96 = arith.constant dense<0.000000e+00> : vector<2x40xf32>
    %485 = tpu.matmul %478, %4, %cst_96 {dimension_numbers = #tpu.dot_dimension_numbers<[1], [0], [0], [1], [0, 0, 1, 1], [], []>, precision = #tpu.contract_precision<fp32>} : vector<2x10xf32>, vector<10x40xf32>, vector<2x40xf32> -> vector<2x40xf32>
    %486 = arith.addf %484, %485 : vector<2x40xf32>
    %487 = arith.addf %486, %7 : vector<2x40xf32>
    %488 = arith.negf %487 : vector<2x40xf32>
    %489 = math.exp %488 : vector<2x40xf32>
    %cst_97 = arith.constant 1.000000e+00 : f32
    %490 = vector.broadcast %cst_97 : f32 to vector<2x40xf32>
    %491 = arith.addf %490, %489 : vector<2x40xf32>
    %492 = arith.divf %490, %491 : vector<2x40xf32>
    %493 = math.tanh %487 : vector<2x40xf32>
    %494 = vector.extract_strided_slice %492 {offsets = [0, 0], sizes = [2, 10], strides = [1, 1]} : vector<2x40xf32> to vector<2x10xf32>
    %495 = vector.extract_strided_slice %492 {offsets = [0, 10], sizes = [2, 10], strides = [1, 1]} : vector<2x40xf32> to vector<2x10xf32>
    %496 = vector.extract_strided_slice %493 {offsets = [0, 20], sizes = [2, 10], strides = [1, 1]} : vector<2x40xf32> to vector<2x10xf32>
    %497 = vector.extract_strided_slice %492 {offsets = [0, 30], sizes = [2, 10], strides = [1, 1]} : vector<2x40xf32> to vector<2x10xf32>
    %498 = arith.mulf %495, %481 : vector<2x10xf32>
    %499 = arith.mulf %494, %496 : vector<2x10xf32>
    %500 = arith.addf %498, %499 : vector<2x10xf32>
    %501 = math.tanh %500 : vector<2x10xf32>
    %502 = arith.mulf %497, %501 : vector<2x10xf32>
    %cst_98 = arith.constant 0.000000e+00 : f32
    %503 = vector.shape_cast %483 : vector<2x1xi1> to vector<2x1xi1>
    %504 = vector.broadcast %503 : vector<2x1xi1> to vector<2x10xi1>
    %505 = vector.broadcast %cst_98 : f32 to vector<2x10xf32>
    %506 = arith.select %504, %502, %505 : vector<2x10xi1>, vector<2x10xf32>
    %c0_99 = arith.constant 0 : index
    %c7 = arith.constant 7 : index
    %c0_100 = arith.constant 0 : index
    %507 = vector.load %arg11[%c0_99, %c7, %c0_100] : memref<2x8x10xf32, #tpu.memory_space<vmem>>, vector<2x1x10xf32>
    %508 = vector.shape_cast %507 : vector<2x1x10xf32> to vector<2x10xf32>
    %509 = vector.shape_cast %506 : vector<2x10xf32> to vector<2x1x10xf32>
    tpu.vector_store %arg11[%c0_99, %c7, %c0_100], %509 {strides = array<i32>} : memref<2x8x10xf32, #tpu.memory_space<vmem>>, vector<2x1x10xf32>,
    %510 = vector.shape_cast %483 : vector<2x1xi1> to vector<2x1xi1>
    %511 = vector.broadcast %510 : vector<2x1xi1> to vector<2x10xi1>
    %512 = arith.select %511, %502, %478 : vector<2x10xi1>, vector<2x10xf32>
    %513 = vector.shape_cast %483 : vector<2x1xi1> to vector<2x1xi1>
    %514 = vector.broadcast %513 : vector<2x1xi1> to vector<2x10xi1>
    %515 = arith.select %514, %500, %481 : vector<2x10xi1>, vector<2x10xf32>
    %c0_101 = arith.constant 0 : index
    %c0_102 = arith.constant 0 : index
    %c0_103 = arith.constant 0 : index
    %516 = vector.load %arg12[%c0_101, %c0_102, %c0_103] : memref<2x2x10xf32, #tpu.memory_space<vmem>>, vector<1x2x10xf32>
    %517 = vector.shape_cast %516 : vector<1x2x10xf32> to vector<2x10xf32>
    %518 = vector.shape_cast %444 : vector<2x10xf32> to vector<1x2x10xf32>
    tpu.vector_store %arg12[%c0_101, %c0_102, %c0_103], %518 {strides = array<i32>} : memref<2x2x10xf32, #tpu.memory_space<vmem>>, vector<1x2x10xf32>,
    %c1_104 = arith.constant 1 : index
    %c0_105 = arith.constant 0 : index
    %c0_106 = arith.constant 0 : index
    %519 = vector.load %arg12[%c1_104, %c0_105, %c0_106] : memref<2x2x10xf32, #tpu.memory_space<vmem>>, vector<1x2x10xf32>
    %520 = vector.shape_cast %519 : vector<1x2x10xf32> to vector<2x10xf32>
    %521 = vector.shape_cast %512 : vector<2x10xf32> to vector<1x2x10xf32>
    tpu.vector_store %arg12[%c1_104, %c0_105, %c0_106], %521 {strides = array<i32>} : memref<2x2x10xf32, #tpu.memory_space<vmem>>, vector<1x2x10xf32>,
    %c0_107 = arith.constant 0 : index
    %c0_108 = arith.constant 0 : index
    %c0_109 = arith.constant 0 : index
    %522 = vector.load %arg13[%c0_107, %c0_108, %c0_109] : memref<2x2x10xf32, #tpu.memory_space<vmem>>, vector<1x2x10xf32>
    %523 = vector.shape_cast %522 : vector<1x2x10xf32> to vector<2x10xf32>
    %524 = vector.shape_cast %447 : vector<2x10xf32> to vector<1x2x10xf32>
    tpu.vector_store %arg13[%c0_107, %c0_108, %c0_109], %524 {strides = array<i32>} : memref<2x2x10xf32, #tpu.memory_space<vmem>>, vector<1x2x10xf32>,
    %c1_110 = arith.constant 1 : index
    %c0_111 = arith.constant 0 : index
    %c0_112 = arith.constant 0 : index
    %525 = vector.load %arg13[%c1_110, %c0_111, %c0_112] : memref<2x2x10xf32, #tpu.memory_space<vmem>>, vector<1x2x10xf32>
    %526 = vector.shape_cast %525 : vector<1x2x10xf32> to vector<2x10xf32>
    %527 = vector.shape_cast %515 : vector<2x10xf32> to vector<1x2x10xf32>
    tpu.vector_store %arg13[%c1_110, %c0_111, %c0_112], %527 {strides = array<i32>} : memref<2x2x10xf32, #tpu.memory_space<vmem>>, vector<1x2x10xf32>,
    %c0_113 = arith.constant 0 : index
    %c0_114 = arith.constant 0 : index
    %c0_115 = arith.constant 0 : index
    %528 = vector.load %arg11[%c0_113, %c0_114, %c0_115] : memref<2x8x10xf32, #tpu.memory_space<vmem>>, vector<2x8x10xf32>
    %529 = tpu.iota {dimensions = array<i32: 1>} : vector<2x8x10xi32>
    %530 = vector.broadcast %0 : i32 to vector<2x8x10xi32>
    %531 = arith.cmpi slt, %529, %530 : vector<2x8x10xi32>
    %cst_116 = arith.constant -1.000000e+30 : f32
    %532 = vector.broadcast %cst_116 : f32 to vector<2x8x10xf32>
    %533 = arith.select %531, %528, %532 : vector<2x8x10xi1>, vector<2x8x10xf32>
    %cst_117 = arith.constant dense<0xFF800000> : vector<2x10xf32>
    %534 = vector.multi_reduction <maximumf>, %533, %cst_117 [1] : vector<2x8x10xf32> to vector<2x10xf32>
    %535 = vector.shape_cast %534 : vector<2x10xf32> to vector<2x1x10xf32>
    %536 = vector.broadcast %535 : vector<2x1x10xf32> to vector<2x8x10xf32>
    %537 = arith.subf %528, %536 : vector<2x8x10xf32>
    %538 = math.exp %537 : vector<2x8x10xf32>
    %cst_118 = arith.constant 0.000000e+00 : f32
    %539 = vector.broadcast %cst_118 : f32 to vector<2x8x10xf32>
    %540 = arith.select %531, %538, %539 : vector<2x8x10xi1>, vector<2x8x10xf32>
    %cst_119 = arith.constant dense<0.000000e+00> : vector<2x10xf32>
    %541 = vector.multi_reduction <add>, %540, %cst_119 [1] : vector<2x8x10xf32> to vector<2x10xf32>
    %542 = vector.shape_cast %541 : vector<2x10xf32> to vector<2x1x10xf32>
    %543 = vector.broadcast %535 : vector<2x1x10xf32> to vector<2x8x10xf32>
    %544 = arith.subf %528, %543 : vector<2x8x10xf32>
    %545 = math.log %542 : vector<2x1x10xf32>
    %546 = vector.broadcast %545 : vector<2x1x10xf32> to vector<2x8x10xf32>
    %547 = arith.subf %544, %546 : vector<2x8x10xf32>
    %cst_120 = arith.constant 0.000000e+00 : f32
    %548 = vector.broadcast %cst_120 : f32 to vector<2x8x10xf32>
    %549 = arith.select %531, %547, %548 : vector<2x8x10xi1>, vector<2x8x10xf32>
    %c0_121 = arith.constant 0 : index
    %c0_122 = arith.constant 0 : index
    %c0_123 = arith.constant 0 : index
    %550 = vector.load %arg11[%c0_121, %c0_122, %c0_123] : memref<2x8x10xf32, #tpu.memory_space<vmem>>, vector<2x8x10xf32>
    tpu.vector_store %arg11[%c0_121, %c0_122, %c0_123], %549 {strides = array<i32>} : memref<2x8x10xf32, #tpu.memory_space<vmem>>, vector<2x8x10xf32>,
    return
  }
}

</mosaic_0001>

<llo_original>
// kernel: _forward_jit.1
$region0: #{_forward_jit.1}
  #allocation0 [shape = 'u32[]', space=smem, size = 0x4, offset = 0x4, fixed_abs, tag = 'smem constant byte address 0x4 - core index']
  #allocation1 [shape = 'u32[72,128]{1,0:T(1,128)}', space=vmem, size = 0x9000, scoped, tag = 'internal scratch']
  #allocation2 [shape = 's32[1]{0:T(128)S(6)}', space=smem, size = 0x200, scoped, tag = 'scoped memory for _forward_jit.1']
  %s0 = inlined_call_operand.<no memory space> [shape: s32[1], index: 0, kind: input, shape index: {}]
  %s1 = inlined_call_operand.vmem [shape: s32[16,1], index: 1, kind: input, shape index: {}]
  %s2 = inlined_call_operand.vmem [shape: s32[2,1], index: 2, kind: input, shape index: {}]
  %s3 = inlined_call_operand.vmem [shape: f32[20,40], index: 3, kind: input, shape index: {}]
  %s4 = inlined_call_operand.hbm [shape: f32[10,40], index: 4, kind: input, shape index: {}]
  %s5 = inlined_call_operand.vmem [shape: f32[1,40], index: 5, kind: input, shape index: {}]
  %s6 = inlined_call_operand.hbm [shape: f32[10,40], index: 6, kind: input, shape index: {}]
  %s7 = inlined_call_operand.hbm [shape: f32[10,40], index: 7, kind: input, shape index: {}]
  %s8 = inlined_call_operand.vmem [shape: f32[1,40], index: 8, kind: input, shape index: {}]
  %s9 = inlined_call_operand.vmem [shape: f32[2,2,10], index: 9, kind: input, shape index: {}]
  %s10 = inlined_call_operand.vmem [shape: f32[2,2,10], index: 10, kind: input, shape index: {}]
  %s11 = inlined_call_operand.hbm [shape: f32[2,8,10], index: 11, kind: output, shape index: {0}]
  %s12 = inlined_call_operand.hbm [shape: f32[2,2,10], index: 12, kind: output, shape index: {1}]
  %s13 = inlined_call_operand.hbm [shape: f32[2,2,10], index: 13, kind: output, shape index: {2}]
  %14 = xla_tuple %s11, %s12, %s13
  %s15 = sld [smem:[#allocation0]]
  $region82: #{_forward_jit.1} parent=0
    _
  %s17 = ssub.s32 1, %s15
  %s18 = scalar_select 0, %s17, %s15
  %19 = sst [smem:[#allocation2]] %s0
  $region1: #{_forward_jit.1} parent=0
    #allocation3 [shape = 'u8[8192]{0}', space=vmem, size = 0x2000, scoped, tag = 'input window, operand 4, single buffered']
    #allocation4 [shape = 's32[1]{0}', space=sflag, size = 0x4, scoped, tag = 'scoped memory for _forward_jit.1']
    #allocation5 [shape = 's32[1]{0}', space=sflag, size = 0x4, scoped, tag = 'scoped memory for _forward_jit.1']
    #allocation6 [shape = 'u8[8192]{0}', space=vmem, size = 0x2000, scoped, tag = 'input window, operand 6, single buffered']
    #allocation7 [shape = 's32[1]{0}', space=sflag, size = 0x4, scoped, tag = 'scoped memory for _forward_jit.1']
    #allocation8 [shape = 'u8[8192]{0}', space=vmem, size = 0x2000, scoped, tag = 'input window, operand 7, single buffered']
    #allocation9 [shape = 'u8[8192]{0}', space=vmem, size = 0x2000, scoped, tag = 'output window, operand 0, single buffered']
    #allocation10 [shape = 'u8[2048]{0}', space=vmem, size = 0x800, scoped, tag = 'output window, operand 1, single buffered']
    #allocation11 [shape = 's32[1]{0}', space=sflag, size = 0x4, scoped, tag = 'scoped memory for _forward_jit.1']
    #allocation12 [shape = 'u8[2048]{0}', space=vmem, size = 0x800, scoped, tag = 'output window, operand 2, single buffered']
    %20 = vsyncpa [#allocation4], 0
    %21 = vsyncpa [#allocation7], 0
    %22 = vsyncpa [#allocation5], 0
    %23 = vsyncpa [#allocation11], 0
    // Predicated region
    $region2: #{_forward_jit.1} parent=1 // pred_check
      _
    $region3: #{_forward_jit.1} parent=1 // pred_check_branch
      %25 = sbr.rel (0) target = $region5
    $region4: #{_forward_jit.1} parent=1 // pred_region
      _
    $region5: #{_forward_jit.1} parent=1 // pred_fallthru
      _
    // Predicated region
    $region6: #{_forward_jit.1} parent=1 // pred_check
      _
    $region7: #{_forward_jit.1} parent=1 // pred_check_branch
      %27 = sbr.rel (0) target = $region9
    $region8: #{_forward_jit.1} parent=1 // pred_region
      _
    $region9: #{_forward_jit.1} parent=1 // pred_fallthru
      _
    // Predicated region
    $region10: #{_forward_jit.1} parent=1 // pred_check
      _
    $region11: #{_forward_jit.1} parent=1 // pred_check_branch
      %29 = sbr.rel (0) target = $region13
    $region12: #{_forward_jit.1} parent=1 // pred_region
      _
    $region13: #{_forward_jit.1} parent=1 // pred_fallthru
      _
    // Predicated region
    $region14: #{_forward_jit.1} parent=1 // pred_check
      _
    $region15: #{_forward_jit.1} parent=1 // pred_check_branch
      %31 = sbr.rel (0) target = $region17
    $region16: #{_forward_jit.1} parent=1 // pred_region
      _
    $region17: #{_forward_jit.1} parent=1 // pred_fallthru
      _
    // Predicated region
    $region18: #{_forward_jit.1} parent=1 // pred_check
      _
    $region19: #{_forward_jit.1} parent=1 // pred_check_branch
      %33 = sbr.rel (0) target = $region21
    $region20: #{_forward_jit.1} parent=1 // pred_region
      %35 = vsyncadd [#allocation4], 0
      %s36 = sshll.u32 %s4, 4
      %s37 = int_to_ptr.hbm [resolvable:$true] %s36
      %s38 = sshll.u32 [#allocation3], 4
      %s39 = int_to_ptr.vmem [resolvable:$true] %s38
      %44 = dma.hbm_to_vmem [thread:$0]  %s37, 256, %s39, [#allocation4], 128, 128, 8
    $region21: #{_forward_jit.1} parent=1 // pred_fallthru
      _
    // Predicated region
    $region22: #{_forward_jit.1} parent=1 // pred_check
      _
    $region23: #{_forward_jit.1} parent=1 // pred_check_branch
      %46 = sbr.rel (0) target = $region25
    $region24: #{_forward_jit.1} parent=1 // pred_region
      _
    $region25: #{_forward_jit.1} parent=1 // pred_fallthru
      _
    // Predicated region
    $region26: #{_forward_jit.1} parent=1 // pred_check
      _
    $region27: #{_forward_jit.1} parent=1 // pred_check_branch
      %48 = sbr.rel (0) target = $region29
    $region28: #{_forward_jit.1} parent=1 // pred_region
      %50 = vsyncadd [#allocation7], 0
      %s51 = sshll.u32 %s6, 4
      %s52 = int_to_ptr.hbm [resolvable:$true] %s51
      %s53 = sshll.u32 [#allocation6], 4
      %s54 = int_to_ptr.vmem [resolvable:$true] %s53
      %59 = dma.hbm_to_vmem [thread:$0]  %s52, 256, %s54, [#allocation7], 128, 128, 8
    $region29: #{_forward_jit.1} parent=1 // pred_fallthru
      _
    // Predicated region
    $region30: #{_forward_jit.1} parent=1 // pred_check
      _
    $region31: #{_forward_jit.1} parent=1 // pred_check_branch
      %61 = sbr.rel (0) target = $region33
    $region32: #{_forward_jit.1} parent=1 // pred_region
      %63 = vsyncadd [#allocation7], 0
      %s64 = sshll.u32 %s7, 4
      %s65 = int_to_ptr.hbm [resolvable:$true] %s64
      %s66 = sshll.u32 [#allocation8], 4
      %s67 = int_to_ptr.vmem [resolvable:$true] %s66
      %72 = dma.hbm_to_vmem [thread:$0]  %s65, 256, %s67, [#allocation7], 128, 128, 8
    $region33: #{_forward_jit.1} parent=1 // pred_fallthru
      _
    // Predicated region
    $region34: #{_forward_jit.1} parent=1 // pred_check
      _
    $region35: #{_forward_jit.1} parent=1 // pred_check_branch
      %74 = sbr.rel (0) target = $region37
    $region36: #{_forward_jit.1} parent=1 // pred_region
      _
    $region37: #{_forward_jit.1} parent=1 // pred_fallthru
      _
    // Predicated region
    $region38: #{_forward_jit.1} parent=1 // pred_check
      _
    $region39: #{_forward_jit.1} parent=1 // pred_check_branch
      %76 = sbr.rel (0) target = $region41
    $region40: #{_forward_jit.1} parent=1 // pred_region
      _
    $region41: #{_forward_jit.1} parent=1 // pred_fallthru
      _
    // Predicated region
    $region42: #{_forward_jit.1} parent=1 // pred_check
      _
    $region43: #{_forward_jit.1} parent=1 // pred_check_branch
      %78 = sbr.rel (0) target = $region45
    $region44: #{_forward_jit.1} parent=1 // pred_region
      _
    $region45: #{_forward_jit.1} parent=1 // pred_fallthru
      _
    // Predicated region
    $region46: #{_forward_jit.1} parent=1 // pred_check
      _
    $region47: #{_forward_jit.1} parent=1 // pred_check_branch
      %80 = sbr.rel (0) target = $region49
    $region48: #{_forward_jit.1} parent=1 // pred_region
      %82 = dma.done [#allocation4], 256
    $region49: #{_forward_jit.1} parent=1 // pred_fallthru
      _
    // Predicated region
    $region50: #{_forward_jit.1} parent=1 // pred_check
      _
    $region51: #{_forward_jit.1} parent=1 // pred_check_branch
      %84 = sbr.rel (0) target = $region53
    $region52: #{_forward_jit.1} parent=1 // pred_region
      %86 = dma.done [#allocation7], 256
    $region53: #{_forward_jit.1} parent=1 // pred_fallthru
      _
    // Predicated region
    $region54: #{_forward_jit.1} parent=1 // pred_check
      _
    $region55: #{_forward_jit.1} parent=1 // pred_check_branch
      %88 = sbr.rel (0) target = $region57
    $region56: #{_forward_jit.1} parent=1 // pred_region
      %90 = dma.done [#allocation7], 256
    $region57: #{_forward_jit.1} parent=1 // pred_fallthru
      _
    %s91 = sld [smem:[#allocation2]]
    %v92 = vld [vmem:[%s2] sm:$0x3]
    %v93 = vld [vmem:[#allocation3] sm:$0xff]
    %v94 = vld [vmem:[#allocation3 + $0x8] sm:$0x3]
    %v95 = vld [vmem:[#allocation6] sm:$0xff]
    %v96 = vld [vmem:[#allocation6 + $0x8] sm:$0x3]
    %v97 = vld [vmem:[#allocation8] sm:$0xff]
    %v98 = vld [vmem:[#allocation8 + $0x8] sm:$0x3]
    %v99 = vld [vmem:[%s8] sm:$0x1]
    %v101 = vperm.slane %v99, 0
    %v103 = vld [vmem:[%s1] sm:$0xff]
    %v104 = vld [vmem:[%s1 + $0x8] sm:$0xff]
    %v105 = vlaneseq
    %v106 = vand.u32 %v105, 127
    %107 = vset.pattern.permute.xlu0 0
    %108 = vperm.xlu0 %107, %v103
    %v109 = vpop.permute.xlu0 %108
    %110 = vset.pattern.permute.xlu0 0
    %111 = vperm.xlu0 %110, %v104
    %v112 = vpop.permute.xlu0 %111
    %vm113 = vcmp.eq.s32.totalorder %v106, %v109
    %vm114 = vcmp.eq.s32.totalorder %v106, %v112
    %v115 = vsel %vm113, 1, 0
    %v116 = vsel %vm114, 1, 0
    %v117 = vcvt.s32.f32 %v115
    %v118 = vcvt.s32.f32 %v116
    %v119 = vld [vmem:[%s3] sm:$0xff]
    %v120 = vld [vmem:[%s3 + $0x8] sm:$0xff]
    %v121 = vld [vmem:[%s3 + $0x10] sm:$0xf]
    %v122 = vld [vmem:[%s5] sm:$0x1]
    %v124 = vperm.slane %v122, 0
    %vm126 = vcmask 162816
    %v128 = vsel %vm126, %v117, 0
    %v131 = vsel %vm126, %v118, 0
    %vm133 = vcmask 1043456
    %v135 = vsel %vm133, %v121, 0
    %137 = vmatpush.msra.mxu0 0.0
    %138 = vmatpush.msra.mxu0 0.0
    %139 = vmatpush.msra.mxu0 0.0
    %140 = vmatpush.msra.mxu0 0.0
    %141 = vmatpush.msra.mxu0 0.0
    %142 = vmatpush.msra.mxu0 0.0
    %143 = vmatpush.msra.mxu0 0.0
    %144 = vmatpush.msra.mxu0 0.0
    %145 = vmatpush.msra.mxu0 0.0
    %146 = vmatpush.msra.mxu0 0.0
    %147 = vmatpush.msra.mxu0 0.0
    %148 = vmatpush.msra.mxu0 0.0
    %149 = vmatpush.msra.mxu0 0.0
    %v150 = vand.u32 %v135, 4294901760
    %151 = vmatpush.msra.mxu0 %v150
    %v152 = vand.u32 %v120, 4294901760
    %153 = vmatpush.msra.mxu0 %v152
    %v154 = vand.u32 %v119, 4294901760
    %155 = vmatpush.msra.mxu0 %v154
    %v156 = vand.u32 %v128, 4294901760
    %v157 = vsub.f32 %v128, %v156
    %v158 = vand.u32 %v157, 4294901760
    %v159 = vsub.f32 %v157, %v158
    %v160 = vand.u32 %v159, 4294901760
    %161 = vmatmul.f32.gmra.mxu0 %v160
    %v162 = vpop.f32.mrf.mxu0
    %v163 = vadd.f32 %v124, %v162
    %v164 = vand.u32 %v131, 4294901760
    %v165 = vsub.f32 %v131, %v164
    %v166 = vand.u32 %v165, 4294901760
    %v167 = vsub.f32 %v165, %v166
    %v168 = vand.u32 %v167, 4294901760
    %169 = vmatmul.f32.gmra.mxu0 %v168
    %v170 = vpop.f32.mrf.mxu0
    %v171 = vadd.f32 %v124, %v170
    %172 = vdwg.mxu0
    %173 = vmatpush.msra.mxu0 0.0
    %174 = vmatpush.msra.mxu0 0.0
    %175 = vmatpush.msra.mxu0 0.0
    %176 = vmatpush.msra.mxu0 0.0
    %177 = vmatpush.msra.mxu0 0.0
    %178 = vmatpush.msra.mxu0 0.0
    %179 = vmatpush.msra.mxu0 0.0
    %180 = vmatpush.msra.mxu0 0.0
    %181 = vmatpush.msra.mxu0 0.0
    %182 = vmatpush.msra.mxu0 0.0
    %183 = vmatpush.msra.mxu0 0.0
    %184 = vmatpush.msra.mxu0 0.0
    %185 = vmatpush.msra.mxu0 0.0
    %v186 = vand.u32 %v135, 4294901760
    %v187 = vsub.f32 %v135, %v186
    %v188 = vand.u32 %v187, 4294901760
    %v189 = vsub.f32 %v187, %v188
    %v190 = vand.u32 %v189, 4294901760
    %191 = vmatpush.msra.mxu0 %v190
    %v192 = vand.u32 %v120, 4294901760
    %v193 = vsub.f32 %v120, %v192
    %v194 = vand.u32 %v193, 4294901760
    %v195 = vsub.f32 %v193, %v194
    %v196 = vand.u32 %v195, 4294901760
    %197 = vmatpush.msra.mxu0 %v196
    %v198 = vand.u32 %v119, 4294901760
    %v199 = vsub.f32 %v119, %v198
    %v200 = vand.u32 %v199, 4294901760
    %v201 = vsub.f32 %v199, %v200
    %v202 = vand.u32 %v201, 4294901760
    %203 = vmatpush.msra.mxu0 %v202
    %v204 = vand.u32 %v128, 4294901760
    %205 = vmatmul.f32.gmra.mxu0 %v204
    %v206 = vpop.f32.mrf.mxu0
    %v207 = vadd.f32 %v163, %v206
    %v208 = vand.u32 %v131, 4294901760
    %209 = vmatmul.f32.gmra.mxu0 %v208
    %v210 = vpop.f32.mrf.mxu0
    %v211 = vadd.f32 %v171, %v210
    %212 = vdwg.mxu0
    %213 = vmatpush.msra.mxu0 0.0
    %214 = vmatpush.msra.mxu0 0.0
    %215 = vmatpush.msra.mxu0 0.0
    %216 = vmatpush.msra.mxu0 0.0
    %217 = vmatpush.msra.mxu0 0.0
    %218 = vmatpush.msra.mxu0 0.0
    %219 = vmatpush.msra.mxu0 0.0
    %220 = vmatpush.msra.mxu0 0.0
    %221 = vmatpush.msra.mxu0 0.0
    %222 = vmatpush.msra.mxu0 0.0
    %223 = vmatpush.msra.mxu0 0.0
    %224 = vmatpush.msra.mxu0 0.0
    %225 = vmatpush.msra.mxu0 0.0
    %v226 = vand.u32 %v135, 4294901760
    %v227 = vsub.f32 %v135, %v226
    %228 = vmatpush.msra.mxu0 %v227
    %v229 = vand.u32 %v120, 4294901760
    %v230 = vsub.f32 %v120, %v229
    %231 = vmatpush.msra.mxu0 %v230
    %v232 = vand.u32 %v119, 4294901760
    %v233 = vsub.f32 %v119, %v232
    %234 = vmatpush.msra.mxu0 %v233
    %v235 = vand.u32 %v128, 4294901760
    %v236 = vsub.f32 %v128, %v235
    %237 = vmatmul.f32.gmra.mxu0 %v236
    %v238 = vpop.f32.mrf.mxu0
    %v239 = vadd.f32 %v207, %v238
    %v240 = vand.u32 %v131, 4294901760
    %v241 = vsub.f32 %v131, %v240
    %242 = vmatmul.f32.gmra.mxu0 %v241
    %v243 = vpop.f32.mrf.mxu0
    %v244 = vadd.f32 %v211, %v243
    %245 = vdwg.mxu0
    %246 = vmatpush.msra.mxu0 0.0
    %247 = vmatpush.msra.mxu0 0.0
    %248 = vmatpush.msra.mxu0 0.0
    %249 = vmatpush.msra.mxu0 0.0
    %250 = vmatpush.msra.mxu0 0.0
    %251 = vmatpush.msra.mxu0 0.0
    %252 = vmatpush.msra.mxu0 0.0
    %253 = vmatpush.msra.mxu0 0.0
    %254 = vmatpush.msra.mxu0 0.0
    %255 = vmatpush.msra.mxu0 0.0
    %256 = vmatpush.msra.mxu0 0.0
    %257 = vmatpush.msra.mxu0 0.0
    %258 = vmatpush.msra.mxu0 0.0
    %v259 = vand.u32 %v135, 4294901760
    %260 = vmatpush.msra.mxu0 %v259
    %v261 = vand.u32 %v120, 4294901760
    %262 = vmatpush.msra.mxu0 %v261
    %v263 = vand.u32 %v119, 4294901760
    %264 = vmatpush.msra.mxu0 %v263
    %v265 = vand.u32 %v128, 4294901760
    %v266 = vsub.f32 %v128, %v265
    %v267 = vand.u32 %v266, 4294901760
    %268 = vmatmul.f32.gmra.mxu0 %v267
    %v269 = vpop.f32.mrf.mxu0
    %v270 = vadd.f32 %v239, %v269
    %v271 = vand.u32 %v131, 4294901760
    %v272 = vsub.f32 %v131, %v271
    %v273 = vand.u32 %v272, 4294901760
    %274 = vmatmul.f32.gmra.mxu0 %v273
    %v275 = vpop.f32.mrf.mxu0
    %v276 = vadd.f32 %v244, %v275
    %277 = vdwg.mxu0
    %278 = vmatpush.msra.mxu0 0.0
    %279 = vmatpush.msra.mxu0 0.0
    %280 = vmatpush.msra.mxu0 0.0
    %281 = vmatpush.msra.mxu0 0.0
    %282 = vmatpush.msra.mxu0 0.0
    %283 = vmatpush.msra.mxu0 0.0
    %284 = vmatpush.msra.mxu0 0.0
    %285 = vmatpush.msra.mxu0 0.0
    %286 = vmatpush.msra.mxu0 0.0
    %287 = vmatpush.msra.mxu0 0.0
    %288 = vmatpush.msra.mxu0 0.0
    %289 = vmatpush.msra.mxu0 0.0
    %290 = vmatpush.msra.mxu0 0.0
    %v291 = vand.u32 %v135, 4294901760
    %v292 = vsub.f32 %v135, %v291
    %v293 = vand.u32 %v292, 4294901760
    %294 = vmatpush.msra.mxu0 %v293
    %v295 = vand.u32 %v120, 4294901760
    %v296 = vsub.f32 %v120, %v295
    %v297 = vand.u32 %v296, 4294901760
    %298 = vmatpush.msra.mxu0 %v297
    %v299 = vand.u32 %v119, 4294901760
    %v300 = vsub.f32 %v119, %v299
    %v301 = vand.u32 %v300, 4294901760
    %302 = vmatpush.msra.mxu0 %v301
    %v303 = vand.u32 %v128, 4294901760
    %304 = vmatmul.f32.gmra.mxu0 %v303
    %v305 = vpop.f32.mrf.mxu0
    %v306 = vadd.f32 %v270, %v305
    %v307 = vand.u32 %v131, 4294901760
    %308 = vmatmul.f32.gmra.mxu0 %v307
    %v309 = vpop.f32.mrf.mxu0
    %v310 = vadd.f32 %v276, %v309
    %311 = vdwg.mxu0
    %312 = vmatpush.msra.mxu0 0.0
    %313 = vmatpush.msra.mxu0 0.0
    %314 = vmatpush.msra.mxu0 0.0
    %315 = vmatpush.msra.mxu0 0.0
    %316 = vmatpush.msra.mxu0 0.0
    %317 = vmatpush.msra.mxu0 0.0
    %318 = vmatpush.msra.mxu0 0.0
    %319 = vmatpush.msra.mxu0 0.0
    %320 = vmatpush.msra.mxu0 0.0
    %321 = vmatpush.msra.mxu0 0.0
    %322 = vmatpush.msra.mxu0 0.0
    %323 = vmatpush.msra.mxu0 0.0
    %324 = vmatpush.msra.mxu0 0.0
    %v325 = vand.u32 %v135, 4294901760
    %326 = vmatpush.msra.mxu0 %v325
    %v327 = vand.u32 %v120, 4294901760
    %328 = vmatpush.msra.mxu0 %v327
    %v329 = vand.u32 %v119, 4294901760
    %330 = vmatpush.msra.mxu0 %v329
    %v331 = vand.u32 %v128, 4294901760
    %332 = vmatmul.f32.gmra.mxu0 %v331
    %v333 = vpop.f32.mrf.mxu0
    %v334 = vadd.f32 %v306, %v333
    %v335 = vand.u32 %v131, 4294901760
    %336 = vmatmul.f32.gmra.mxu0 %v335
    %v337 = vpop.f32.mrf.mxu0
    %v338 = vadd.f32 %v310, %v337
    %339 = vdwg.mxu0
    %v342 = vrot.slane %v334, 2
    %v343 = vrot.slane %v334, 4
    %v344 = vrot.slane %v334, 6
    %v345 = vrot.slane %v338, 2
    %v346 = vrot.slane %v338, 4
    %v347 = vrot.slane %v338, 6
    %v354 = vld [vmem:[%s9] sm:$0x3]
    %v355 = vld [vmem:[%s10] sm:$0x3]
    %s356 = scalar_lea.vmem %s9, 2
    %v357 = vld [vmem:[%s356] sm:$0x3]
    %s358 = scalar_lea.vmem %s10, 2
    %v359 = vld [vmem:[%s358] sm:$0x3]
    %vm360 = vcmp.gt.s32.totalorder %v92, 0
    %vm361 = vcmask 80896
    %v363 = vsel %vm361, %v354, 0
    %vm365 = vcmask 1041408
    %v367 = vsel %vm365, %v94, 0
    %369 = vmatpush.msra.mxu0 0.0
    %370 = vmatpush.msra.mxu0 0.0
    %371 = vmatpush.msra.mxu0 0.0
    %372 = vmatpush.msra.mxu0 0.0
    %373 = vmatpush.msra.mxu0 0.0
    %374 = vmatpush.msra.mxu0 0.0
    %375 = vmatpush.msra.mxu0 0.0
    %376 = vmatpush.msra.mxu0 0.0
    %377 = vmatpush.msra.mxu0 0.0
    %378 = vmatpush.msra.mxu0 0.0
    %379 = vmatpush.msra.mxu0 0.0
    %380 = vmatpush.msra.mxu0 0.0
    %381 = vmatpush.msra.mxu0 0.0
    %382 = vmatpush.msra.mxu0 0.0
    %v383 = vand.u32 %v367, 4294901760
    %384 = vmatpush.msra.mxu0 %v383
    %v385 = vand.u32 %v93, 4294901760
    %386 = vmatpush.msra.mxu0 %v385
    %v387 = vand.u32 %v363, 4294901760
    %v388 = vsub.f32 %v363, %v387
    %v389 = vand.u32 %v388, 4294901760
    %v390 = vsub.f32 %v388, %v389
    %v391 = vand.u32 %v390, 4294901760
    %392 = vmatmul.f32.gmra.mxu0 %v391
    %v393 = vpop.f32.mrf.mxu0
    %v394 = vadd.f32 0.0, %v393
    %395 = vdwg.mxu0
    %396 = vmatpush.msra.mxu0 0.0
    %397 = vmatpush.msra.mxu0 0.0
    %398 = vmatpush.msra.mxu0 0.0
    %399 = vmatpush.msra.mxu0 0.0
    %400 = vmatpush.msra.mxu0 0.0
    %401 = vmatpush.msra.mxu0 0.0
    %402 = vmatpush.msra.mxu0 0.0
    %403 = vmatpush.msra.mxu0 0.0
    %404 = vmatpush.msra.mxu0 0.0
    %405 = vmatpush.msra.mxu0 0.0
    %406 = vmatpush.msra.mxu0 0.0
    %407 = vmatpush.msra.mxu0 0.0
    %408 = vmatpush.msra.mxu0 0.0
    %409 = vmatpush.msra.mxu0 0.0
    %v410 = vand.u32 %v367, 4294901760
    %v411 = vsub.f32 %v367, %v410
    %v412 = vand.u32 %v411, 4294901760
    %v413 = vsub.f32 %v411, %v412
    %v414 = vand.u32 %v413, 4294901760
    %415 = vmatpush.msra.mxu0 %v414
    %v416 = vand.u32 %v93, 4294901760
    %v417 = vsub.f32 %v93, %v416
    %v418 = vand.u32 %v417, 4294901760
    %v419 = vsub.f32 %v417, %v418
    %v420 = vand.u32 %v419, 4294901760
    %421 = vmatpush.msra.mxu0 %v420
    %v422 = vand.u32 %v363, 4294901760
    %423 = vmatmul.f32.gmra.mxu0 %v422
    %v424 = vpop.f32.mrf.mxu0
    %v425 = vadd.f32 %v394, %v424
    %426 = vdwg.mxu0
    %427 = vmatpush.msra.mxu0 0.0
    %428 = vmatpush.msra.mxu0 0.0
    %429 = vmatpush.msra.mxu0 0.0
    %430 = vmatpush.msra.mxu0 0.0
    %431 = vmatpush.msra.mxu0 0.0
    %432 = vmatpush.msra.mxu0 0.0
    %433 = vmatpush.msra.mxu0 0.0
    %434 = vmatpush.msra.mxu0 0.0
    %435 = vmatpush.msra.mxu0 0.0
    %436 = vmatpush.msra.mxu0 0.0
    %437 = vmatpush.msra.mxu0 0.0
    %438 = vmatpush.msra.mxu0 0.0
    %439 = vmatpush.msra.mxu0 0.0
    %440 = vmatpush.msra.mxu0 0.0
    %v441 = vand.u32 %v367, 4294901760
    %v442 = vsub.f32 %v367, %v441
    %443 = vmatpush.msra.mxu0 %v442
    %v444 = vand.u32 %v93, 4294901760
    %v445 = vsub.f32 %v93, %v444
    %446 = vmatpush.msra.mxu0 %v445
    %v447 = vand.u32 %v363, 4294901760
    %v448 = vsub.f32 %v363, %v447
    %449 = vmatmul.f32.gmra.mxu0 %v448
    %v450 = vpop.f32.mrf.mxu0
    %v451 = vadd.f32 %v425, %v450
    %452 = vdwg.mxu0
    %453 = vmatpush.msra.mxu0 0.0
    %454 = vmatpush.msra.mxu0 0.0
    %455 = vmatpush.msra.mxu0 0.0
    %456 = vmatpush.msra.mxu0 0.0
    %457 = vmatpush.msra.mxu0 0.0
    %458 = vmatpush.msra.mxu0 0.0
    %459 = vmatpush.msra.mxu0 0.0
    %460 = vmatpush.msra.mxu0 0.0
    %461 = vmatpush.msra.mxu0 0.0
    %462 = vmatpush.msra.mxu0 0.0
    %463 = vmatpush.msra.mxu0 0.0
    %464 = vmatpush.msra.mxu0 0.0
    %465 = vmatpush.msra.mxu0 0.0
    %466 = vmatpush.msra.mxu0 0.0
    %v467 = vand.u32 %v367, 4294901760
    %468 = vmatpush.msra.mxu0 %v467
    %v469 = vand.u32 %v93, 4294901760
    %470 = vmatpush.msra.mxu0 %v469
    %v471 = vand.u32 %v363, 4294901760
    %v472 = vsub.f32 %v363, %v471
    %v473 = vand.u32 %v472, 4294901760
    %474 = vmatmul.f32.gmra.mxu0 %v473
    %v475 = vpop.f32.mrf.mxu0
    %v476 = vadd.f32 %v451, %v475
    %477 = vdwg.mxu0
    %478 = vmatpush.msra.mxu0 0.0
    %479 = vmatpush.msra.mxu0 0.0
    %480 = vmatpush.msra.mxu0 0.0
    %481 = vmatpush.msra.mxu0 0.0
    %482 = vmatpush.msra.mxu0 0.0
    %483 = vmatpush.msra.mxu0 0.0
    %484 = vmatpush.msra.mxu0 0.0
    %485 = vmatpush.msra.mxu0 0.0
    %486 = vmatpush.msra.mxu0 0.0
    %487 = vmatpush.msra.mxu0 0.0
    %488 = vmatpush.msra.mxu0 0.0
    %489 = vmatpush.msra.mxu0 0.0
    %490 = vmatpush.msra.mxu0 0.0
    %491 = vmatpush.msra.mxu0 0.0
    %v492 = vand.u32 %v367, 4294901760
    %v493 = vsub.f32 %v367, %v492
    %v494 = vand.u32 %v493, 4294901760
    %495 = vmatpush.msra.mxu0 %v494
    %v496 = vand.u32 %v93, 4294901760
    %v497 = vsub.f32 %v93, %v496
    %v498 = vand.u32 %v497, 4294901760
    %499 = vmatpush.msra.mxu0 %v498
    %v500 = vand.u32 %v363, 4294901760
    %501 = vmatmul.f32.gmra.mxu0 %v500
    %v502 = vpop.f32.mrf.mxu0
    %v503 = vadd.f32 %v476, %v502
    %504 = vdwg.mxu0
    %505 = vmatpush.msra.mxu0 0.0
    %506 = vmatpush.msra.mxu0 0.0
    %507 = vmatpush.msra.mxu0 0.0
    %508 = vmatpush.msra.mxu0 0.0
    %509 = vmatpush.msra.mxu0 0.0
    %510 = vmatpush.msra.mxu0 0.0
    %511 = vmatpush.msra.mxu0 0.0
    %512 = vmatpush.msra.mxu0 0.0
    %513 = vmatpush.msra.mxu0 0.0
    %514 = vmatpush.msra.mxu0 0.0
    %515 = vmatpush.msra.mxu0 0.0
    %516 = vmatpush.msra.mxu0 0.0
    %517 = vmatpush.msra.mxu0 0.0
    %518 = vmatpush.msra.mxu0 0.0
    %v519 = vand.u32 %v367, 4294901760
    %520 = vmatpush.msra.mxu0 %v519
    %v521 = vand.u32 %v93, 4294901760
    %522 = vmatpush.msra.mxu0 %v521
    %v523 = vand.u32 %v363, 4294901760
    %524 = vmatmul.f32.gmra.mxu0 %v523
    %v525 = vpop.f32.mrf.mxu0
    %v526 = vadd.f32 %v503, %v525
    %527 = vdwg.mxu0
    %v528 = vadd.f32 %v334, %v526
    %v529 = vxor.u32 %v528, 2147483648
    %v530 = vmul.f32 %v529, 1.442695
    %v531 = vpow.pop %v530
    %v532 = vadd.f32 %v531, 1.0
    %v533 = vrcp.pop %v532
    %v534 = vmul.f32 %v532, %v533
    %v535 = vsub.f32 1.0, %v534
    %v536 = vmul.f32 %v533, %v535
    %v537 = vadd.f32 %v533, %v536
    %vm538 = vweird.f32 %v532
    %vm539 = vweird.f32 %v533
    %vm540 = vmor %vm538, %vm539
    %v541 = vsel %vm540, %v533, %v537
    %v542 = vand.u32 2147483647, %v532
    %vm543 = vcmp.eq.f32.partialorder %v542, 8.507059e+37
    %v544 = vand.u32 %v532, 2147483648
    %v545 = vor.u32 1.1754944e-38, %v544
    %v546 = vsel %vm543, %v545, %v541
    %v547 = vmul.f32 1.0, %v546
    %v548 = vtanh.pop %v528
    %550 = vrot.lane.b32.xlu0 %v355, 10
    %v551 = vpop.permute.xlu0 %550
    %v553 = vmul.f32 %v547, %v551
    %555 = vrot.lane.b32.xlu0 %v548, 108
    %v556 = vpop.permute.xlu0 %555
    %v558 = vmul.f32 %v547, %v556
    %560 = vrot.lane.b32.xlu0 %v558, 10
    %v561 = vpop.permute.xlu0 %560
    %v563 = vadd.f32 %v553, %v561
    %v564 = vtanh.pop %v563
    %566 = vrot.lane.b32.xlu0 %v564, 20
    %v567 = vpop.permute.xlu0 %566
    %v569 = vmul.f32 %v547, %v567
    %v570 = vsel %vm360, 1, 0
    %571 = vset.pattern.permute.xlu0 0
    %572 = vperm.xlu0 %571, %v570
    %v573 = vpop.permute.xlu0 %572
    %vm574 = vcmp.eq.s32.totalorder %v573, 1
    %576 = vst [vmem:[#allocation1] ss:$4 sm:$0xff] %v569
    %v577 = vld.sshfl [vmem:[#allocation1] sm:$0xff pattern:$0x73625140]
    %578 = vrot.lane.b32.xlu0 %v577, 98
    %v579 = vpop.permute.xlu0 %578
    %v581 = vsel %vm574, %v579, %v354
    %583 = vst [vmem:[#allocation1] ss:$4 sm:$0xff] %v563
    %v584 = vld.sshfl [vmem:[#allocation1] sm:$0xff pattern:$0x73625140]
    %585 = vrot.lane.b32.xlu0 %v584, 118
    %v586 = vpop.permute.xlu0 %585
    %v588 = vsel %vm574, %v586, %v355
    %vm589 = vcmp.gt.s32.totalorder %v92, 1
    %v591 = vsel %vm361, %v581, 0
    %593 = vmatpush.msra.mxu0 0.0
    %594 = vmatpush.msra.mxu0 0.0
    %595 = vmatpush.msra.mxu0 0.0
    %596 = vmatpush.msra.mxu0 0.0
    %597 = vmatpush.msra.mxu0 0.0
    %598 = vmatpush.msra.mxu0 0.0
    %599 = vmatpush.msra.mxu0 0.0
    %600 = vmatpush.msra.mxu0 0.0
    %601 = vmatpush.msra.mxu0 0.0
    %602 = vmatpush.msra.mxu0 0.0
    %603 = vmatpush.msra.mxu0 0.0
    %604 = vmatpush.msra.mxu0 0.0
    %605 = vmatpush.msra.mxu0 0.0
    %606 = vmatpush.msra.mxu0 0.0
    %v607 = vand.u32 %v367, 4294901760
    %608 = vmatpush.msra.mxu0 %v607
    %v609 = vand.u32 %v93, 4294901760
    %610 = vmatpush.msra.mxu0 %v609
    %v611 = vand.u32 %v591, 4294901760
    %v612 = vsub.f32 %v591, %v611
    %v613 = vand.u32 %v612, 4294901760
    %v614 = vsub.f32 %v612, %v613
    %v615 = vand.u32 %v614, 4294901760
    %616 = vmatmul.f32.gmra.mxu0 %v615
    %v617 = vpop.f32.mrf.mxu0
    %v618 = vadd.f32 0.0, %v617
    %619 = vdwg.mxu0
    %620 = vmatpush.msra.mxu0 0.0
    %621 = vmatpush.msra.mxu0 0.0
    %622 = vmatpush.msra.mxu0 0.0
    %623 = vmatpush.msra.mxu0 0.0
    %624 = vmatpush.msra.mxu0 0.0
    %625 = vmatpush.msra.mxu0 0.0
    %626 = vmatpush.msra.mxu0 0.0
    %627 = vmatpush.msra.mxu0 0.0
    %628 = vmatpush.msra.mxu0 0.0
    %629 = vmatpush.msra.mxu0 0.0
    %630 = vmatpush.msra.mxu0 0.0
    %631 = vmatpush.msra.mxu0 0.0
    %632 = vmatpush.msra.mxu0 0.0
    %633 = vmatpush.msra.mxu0 0.0
    %v634 = vand.u32 %v367, 4294901760
    %v635 = vsub.f32 %v367, %v634
    %v636 = vand.u32 %v635, 4294901760
    %v637 = vsub.f32 %v635, %v636
    %v638 = vand.u32 %v637, 4294901760
    %639 = vmatpush.msra.mxu0 %v638
    %v640 = vand.u32 %v93, 4294901760
    %v641 = vsub.f32 %v93, %v640
    %v642 = vand.u32 %v641, 4294901760
    %v643 = vsub.f32 %v641, %v642
    %v644 = vand.u32 %v643, 4294901760
    %645 = vmatpush.msra.mxu0 %v644
    %v646 = vand.u32 %v591, 4294901760
    %647 = vmatmul.f32.gmra.mxu0 %v646
    %v648 = vpop.f32.mrf.mxu0
    %v649 = vadd.f32 %v618, %v648
    %650 = vdwg.mxu0
    %651 = vmatpush.msra.mxu0 0.0
    %652 = vmatpush.msra.mxu0 0.0
    %653 = vmatpush.msra.mxu0 0.0
    %654 = vmatpush.msra.mxu0 0.0
    %655 = vmatpush.msra.mxu0 0.0
    %656 = vmatpush.msra.mxu0 0.0
    %657 = vmatpush.msra.mxu0 0.0
    %658 = vmatpush.msra.mxu0 0.0
    %659 = vmatpush.msra.mxu0 0.0
    %660 = vmatpush.msra.mxu0 0.0
    %661 = vmatpush.msra.mxu0 0.0
    %662 = vmatpush.msra.mxu0 0.0
    %663 = vmatpush.msra.mxu0 0.0
    %664 = vmatpush.msra.mxu0 0.0
    %v665 = vand.u32 %v367, 4294901760
    %v666 = vsub.f32 %v367, %v665
    %667 = vmatpush.msra.mxu0 %v666
    %v668 = vand.u32 %v93, 4294901760
    %v669 = vsub.f32 %v93, %v668
    %670 = vmatpush.msra.mxu0 %v669
    %v671 = vand.u32 %v591, 4294901760
    %v672 = vsub.f32 %v591, %v671
    %673 = vmatmul.f32.gmra.mxu0 %v672
    %v674 = vpop.f32.mrf.mxu0
    %v675 = vadd.f32 %v649, %v674
    %676 = vdwg.mxu0
    %677 = vmatpush.msra.mxu0 0.0
    %678 = vmatpush.msra.mxu0 0.0
    %679 = vmatpush.msra.mxu0 0.0
    %680 = vmatpush.msra.mxu0 0.0
    %681 = vmatpush.msra.mxu0 0.0
    %682 = vmatpush.msra.mxu0 0.0
    %683 = vmatpush.msra.mxu0 0.0
    %684 = vmatpush.msra.mxu0 0.0
    %685 = vmatpush.msra.mxu0 0.0
    %686 = vmatpush.msra.mxu0 0.0
    %687 = vmatpush.msra.mxu0 0.0
    %688 = vmatpush.msra.mxu0 0.0
    %689 = vmatpush.msra.mxu0 0.0
    %690 = vmatpush.msra.mxu0 0.0
    %v691 = vand.u32 %v367, 4294901760
    %692 = vmatpush.msra.mxu0 %v691
    %v693 = vand.u32 %v93, 4294901760
    %694 = vmatpush.msra.mxu0 %v693
    %v695 = vand.u32 %v591, 4294901760
    %v696 = vsub.f32 %v591, %v695
    %v697 = vand.u32 %v696, 4294901760
    %698 = vmatmul.f32.gmra.mxu0 %v697
    %v699 = vpop.f32.mrf.mxu0
    %v700 = vadd.f32 %v675, %v699
    %701 = vdwg.mxu0
    %702 = vmatpush.msra.mxu0 0.0
    %703 = vmatpush.msra.mxu0 0.0
    %704 = vmatpush.msra.mxu0 0.0
    %705 = vmatpush.msra.mxu0 0.0
    %706 = vmatpush.msra.mxu0 0.0
    %707 = vmatpush.msra.mxu0 0.0
    %708 = vmatpush.msra.mxu0 0.0
    %709 = vmatpush.msra.mxu0 0.0
    %710 = vmatpush.msra.mxu0 0.0
    %711 = vmatpush.msra.mxu0 0.0
    %712 = vmatpush.msra.mxu0 0.0
    %713 = vmatpush.msra.mxu0 0.0
    %714 = vmatpush.msra.mxu0 0.0
    %715 = vmatpush.msra.mxu0 0.0
    %v716 = vand.u32 %v367, 4294901760
    %v717 = vsub.f32 %v367, %v716
    %v718 = vand.u32 %v717, 4294901760
    %719 = vmatpush.msra.mxu0 %v718
    %v720 = vand.u32 %v93, 4294901760
    %v721 = vsub.f32 %v93, %v720
    %v722 = vand.u32 %v721, 4294901760
    %723 = vmatpush.msra.mxu0 %v722
    %v724 = vand.u32 %v591, 4294901760
    %725 = vmatmul.f32.gmra.mxu0 %v724
    %v726 = vpop.f32.mrf.mxu0
    %v727 = vadd.f32 %v700, %v726
    %728 = vdwg.mxu0
    %729 = vmatpush.msra.mxu0 0.0
    %730 = vmatpush.msra.mxu0 0.0
    %731 = vmatpush.msra.mxu0 0.0
    %732 = vmatpush.msra.mxu0 0.0
    %733 = vmatpush.msra.mxu0 0.0
    %734 = vmatpush.msra.mxu0 0.0
    %735 = vmatpush.msra.mxu0 0.0
    %736 = vmatpush.msra.mxu0 0.0
    %737 = vmatpush.msra.mxu0 0.0
    %738 = vmatpush.msra.mxu0 0.0
    %739 = vmatpush.msra.mxu0 0.0
    %740 = vmatpush.msra.mxu0 0.0
    %741 = vmatpush.msra.mxu0 0.0
    %742 = vmatpush.msra.mxu0 0.0
    %v743 = vand.u32 %v367, 4294901760
    %744 = vmatpush.msra.mxu0 %v743
    %v745 = vand.u32 %v93, 4294901760
    %746 = vmatpush.msra.mxu0 %v745
    %v747 = vand.u32 %v591, 4294901760
    %748 = vmatmul.f32.gmra.mxu0 %v747
    %v749 = vpop.f32.mrf.mxu0
    %v750 = vadd.f32 %v727, %v749
    %751 = vdwg.mxu0
    %v752 = vadd.f32 %v342, %v750
    %v753 = vxor.u32 %v752, 2147483648
    %v754 = vmul.f32 %v753, 1.442695
    %v755 = vpow.pop %v754
    %v756 = vadd.f32 %v755, 1.0
    %v757 = vrcp.pop %v756
    %v758 = vmul.f32 %v756, %v757
    %v759 = vsub.f32 1.0, %v758
    %v760 = vmul.f32 %v757, %v759
    %v761 = vadd.f32 %v757, %v760
    %vm762 = vweird.f32 %v756
    %vm763 = vweird.f32 %v757
    %vm764 = vmor %vm762, %vm763
    %v765 = vsel %vm764, %v757, %v761
    %v766 = vand.u32 2147483647, %v756
    %vm767 = vcmp.eq.f32.partialorder %v766, 8.507059e+37
    %v768 = vand.u32 %v756, 2147483648
    %v769 = vor.u32 1.1754944e-38, %v768
    %v770 = vsel %vm767, %v769, %v765
    %v771 = vmul.f32 1.0, %v770
    %v772 = vtanh.pop %v752
    %774 = vrot.lane.b32.xlu0 %v588, 10
    %v775 = vpop.permute.xlu0 %774
    %v777 = vmul.f32 %v771, %v775
    %779 = vrot.lane.b32.xlu0 %v772, 108
    %v780 = vpop.permute.xlu0 %779
    %v782 = vmul.f32 %v771, %v780
    %784 = vrot.lane.b32.xlu0 %v782, 10
    %v785 = vpop.permute.xlu0 %784
    %v787 = vadd.f32 %v777, %v785
    %v788 = vtanh.pop %v787
    %790 = vrot.lane.b32.xlu0 %v788, 20
    %v791 = vpop.permute.xlu0 %790
    %v793 = vmul.f32 %v771, %v791
    %v794 = vsel %vm589, 1, 0
    %795 = vset.pattern.permute.xlu0 0
    %796 = vperm.xlu0 %795, %v794
    %v797 = vpop.permute.xlu0 %796
    %vm798 = vcmp.eq.s32.totalorder %v797, 1
    %800 = vst [vmem:[#allocation1] ss:$4 sm:$0xff] %v793
    %v801 = vld.sshfl [vmem:[#allocation1] sm:$0xff pattern:$0x73625140]
    %802 = vrot.lane.b32.xlu0 %v801, 98
    %v803 = vpop.permute.xlu0 %802
    %v805 = vsel %vm798, %v803, %v581
    %807 = vst [vmem:[#allocation1] ss:$4 sm:$0xff] %v787
    %v808 = vld.sshfl [vmem:[#allocation1] sm:$0xff pattern:$0x73625140]
    %809 = vrot.lane.b32.xlu0 %v808, 118
    %v810 = vpop.permute.xlu0 %809
    %v812 = vsel %vm798, %v810, %v588
    %v814 = vsel %vm361, %v357, 0
    %v817 = vsel %vm365, %v98, 0
    %819 = vmatpush.msra.mxu0 0.0
    %820 = vmatpush.msra.mxu0 0.0
    %821 = vmatpush.msra.mxu0 0.0
    %822 = vmatpush.msra.mxu0 0.0
    %823 = vmatpush.msra.mxu0 0.0
    %824 = vmatpush.msra.mxu0 0.0
    %825 = vmatpush.msra.mxu0 0.0
    %826 = vmatpush.msra.mxu0 0.0
    %827 = vmatpush.msra.mxu0 0.0
    %828 = vmatpush.msra.mxu0 0.0
    %829 = vmatpush.msra.mxu0 0.0
    %830 = vmatpush.msra.mxu0 0.0
    %831 = vmatpush.msra.mxu0 0.0
    %832 = vmatpush.msra.mxu0 0.0
    %v833 = vand.u32 %v817, 4294901760
    %834 = vmatpush.msra.mxu0 %v833
    %v835 = vand.u32 %v97, 4294901760
    %836 = vmatpush.msra.mxu0 %v835
    %v837 = vand.u32 %v814, 4294901760
    %v838 = vsub.f32 %v814, %v837
    %v839 = vand.u32 %v838, 4294901760
    %v840 = vsub.f32 %v838, %v839
    %v841 = vand.u32 %v840, 4294901760
    %842 = vmatmul.f32.gmra.mxu0 %v841
    %v843 = vpop.f32.mrf.mxu0
    %v844 = vadd.f32 0.0, %v843
    %845 = vdwg.mxu0
    %846 = vmatpush.msra.mxu0 0.0
    %847 = vmatpush.msra.mxu0 0.0
    %848 = vmatpush.msra.mxu0 0.0
    %849 = vmatpush.msra.mxu0 0.0
    %850 = vmatpush.msra.mxu0 0.0
    %851 = vmatpush.msra.mxu0 0.0
    %852 = vmatpush.msra.mxu0 0.0
    %853 = vmatpush.msra.mxu0 0.0
    %854 = vmatpush.msra.mxu0 0.0
    %855 = vmatpush.msra.mxu0 0.0
    %856 = vmatpush.msra.mxu0 0.0
    %857 = vmatpush.msra.mxu0 0.0
    %858 = vmatpush.msra.mxu0 0.0
    %859 = vmatpush.msra.mxu0 0.0
    %v860 = vand.u32 %v817, 4294901760
    %v861 = vsub.f32 %v817, %v860
    %v862 = vand.u32 %v861, 4294901760
    %v863 = vsub.f32 %v861, %v862
    %v864 = vand.u32 %v863, 4294901760
    %865 = vmatpush.msra.mxu0 %v864
    %v866 = vand.u32 %v97, 4294901760
    %v867 = vsub.f32 %v97, %v866
    %v868 = vand.u32 %v867, 4294901760
    %v869 = vsub.f32 %v867, %v868
    %v870 = vand.u32 %v869, 4294901760
    %871 = vmatpush.msra.mxu0 %v870
    %v872 = vand.u32 %v814, 4294901760
    %873 = vmatmul.f32.gmra.mxu0 %v872
    %v874 = vpop.f32.mrf.mxu0
    %v875 = vadd.f32 %v844, %v874
    %876 = vdwg.mxu0
    %877 = vmatpush.msra.mxu0 0.0
    %878 = vmatpush.msra.mxu0 0.0
    %879 = vmatpush.msra.mxu0 0.0
    %880 = vmatpush.msra.mxu0 0.0
    %881 = vmatpush.msra.mxu0 0.0
    %882 = vmatpush.msra.mxu0 0.0
    %883 = vmatpush.msra.mxu0 0.0
    %884 = vmatpush.msra.mxu0 0.0
    %885 = vmatpush.msra.mxu0 0.0
    %886 = vmatpush.msra.mxu0 0.0
    %887 = vmatpush.msra.mxu0 0.0
    %888 = vmatpush.msra.mxu0 0.0
    %889 = vmatpush.msra.mxu0 0.0
    %890 = vmatpush.msra.mxu0 0.0
    %v891 = vand.u32 %v817, 4294901760
    %v892 = vsub.f32 %v817, %v891
    %893 = vmatpush.msra.mxu0 %v892
    %v894 = vand.u32 %v97, 4294901760
    %v895 = vsub.f32 %v97, %v894
    %896 = vmatpush.msra.mxu0 %v895
    %v897 = vand.u32 %v814, 4294901760
    %v898 = vsub.f32 %v814, %v897
    %899 = vmatmul.f32.gmra.mxu0 %v898
    %v900 = vpop.f32.mrf.mxu0
    %v901 = vadd.f32 %v875, %v900
    %902 = vdwg.mxu0
    %903 = vmatpush.msra.mxu0 0.0
    %904 = vmatpush.msra.mxu0 0.0
    %905 = vmatpush.msra.mxu0 0.0
    %906 = vmatpush.msra.mxu0 0.0
    %907 = vmatpush.msra.mxu0 0.0
    %908 = vmatpush.msra.mxu0 0.0
    %909 = vmatpush.msra.mxu0 0.0
    %910 = vmatpush.msra.mxu0 0.0
    %911 = vmatpush.msra.mxu0 0.0
    %912 = vmatpush.msra.mxu0 0.0
    %913 = vmatpush.msra.mxu0 0.0
    %914 = vmatpush.msra.mxu0 0.0
    %915 = vmatpush.msra.mxu0 0.0
    %916 = vmatpush.msra.mxu0 0.0
    %v917 = vand.u32 %v817, 4294901760
    %918 = vmatpush.msra.mxu0 %v917
    %v919 = vand.u32 %v97, 4294901760
    %920 = vmatpush.msra.mxu0 %v919
    %v921 = vand.u32 %v814, 4294901760
    %v922 = vsub.f32 %v814, %v921
    %v923 = vand.u32 %v922, 4294901760
    %924 = vmatmul.f32.gmra.mxu0 %v923
    %v925 = vpop.f32.mrf.mxu0
    %v926 = vadd.f32 %v901, %v925
    %927 = vdwg.mxu0
    %928 = vmatpush.msra.mxu0 0.0
    %929 = vmatpush.msra.mxu0 0.0
    %930 = vmatpush.msra.mxu0 0.0
    %931 = vmatpush.msra.mxu0 0.0
    %932 = vmatpush.msra.mxu0 0.0
    %933 = vmatpush.msra.mxu0 0.0
    %934 = vmatpush.msra.mxu0 0.0
    %935 = vmatpush.msra.mxu0 0.0
    %936 = vmatpush.msra.mxu0 0.0
    %937 = vmatpush.msra.mxu0 0.0
    %938 = vmatpush.msra.mxu0 0.0
    %939 = vmatpush.msra.mxu0 0.0
    %940 = vmatpush.msra.mxu0 0.0
    %941 = vmatpush.msra.mxu0 0.0
    %v942 = vand.u32 %v817, 4294901760
    %v943 = vsub.f32 %v817, %v942
    %v944 = vand.u32 %v943, 4294901760
    %945 = vmatpush.msra.mxu0 %v944
    %v946 = vand.u32 %v97, 4294901760
    %v947 = vsub.f32 %v97, %v946
    %v948 = vand.u32 %v947, 4294901760
    %949 = vmatpush.msra.mxu0 %v948
    %v950 = vand.u32 %v814, 4294901760
    %951 = vmatmul.f32.gmra.mxu0 %v950
    %v952 = vpop.f32.mrf.mxu0
    %v953 = vadd.f32 %v926, %v952
    %954 = vdwg.mxu0
    %955 = vmatpush.msra.mxu0 0.0
    %956 = vmatpush.msra.mxu0 0.0
    %957 = vmatpush.msra.mxu0 0.0
    %958 = vmatpush.msra.mxu0 0.0
    %959 = vmatpush.msra.mxu0 0.0
    %960 = vmatpush.msra.mxu0 0.0
    %961 = vmatpush.msra.mxu0 0.0
    %962 = vmatpush.msra.mxu0 0.0
    %963 = vmatpush.msra.mxu0 0.0
    %964 = vmatpush.msra.mxu0 0.0
    %965 = vmatpush.msra.mxu0 0.0
    %966 = vmatpush.msra.mxu0 0.0
    %967 = vmatpush.msra.mxu0 0.0
    %968 = vmatpush.msra.mxu0 0.0
    %v969 = vand.u32 %v817, 4294901760
    %970 = vmatpush.msra.mxu0 %v969
    %v971 = vand.u32 %v97, 4294901760
    %972 = vmatpush.msra.mxu0 %v971
    %v973 = vand.u32 %v814, 4294901760
    %974 = vmatmul.f32.gmra.mxu0 %v973
    %v975 = vpop.f32.mrf.mxu0
    %v976 = vadd.f32 %v953, %v975
    %977 = vdwg.mxu0
    %978 = vst [vmem:[#allocation1] ss:$4 sm:$0xff] %v569
    %v979 = vld.sshfl [vmem:[#allocation1] sm:$0xff pattern:$0x73625140]
    %980 = vrot.lane.b32.xlu0 %v979, 98
    %v981 = vpop.permute.xlu0 %980
    %v982 = vsel %vm361, %v981, 0
    %v985 = vsel %vm365, %v96, 0
    %987 = vmatpush.msra.mxu0 0.0
    %988 = vmatpush.msra.mxu0 0.0
    %989 = vmatpush.msra.mxu0 0.0
    %990 = vmatpush.msra.mxu0 0.0
    %991 = vmatpush.msra.mxu0 0.0
    %992 = vmatpush.msra.mxu0 0.0
    %993 = vmatpush.msra.mxu0 0.0
    %994 = vmatpush.msra.mxu0 0.0
    %995 = vmatpush.msra.mxu0 0.0
    %996 = vmatpush.msra.mxu0 0.0
    %997 = vmatpush.msra.mxu0 0.0
    %998 = vmatpush.msra.mxu0 0.0
    %999 = vmatpush.msra.mxu0 0.0
    %1000 = vmatpush.msra.mxu0 0.0
    %v1001 = vand.u32 %v985, 4294901760
    %1002 = vmatpush.msra.mxu0 %v1001
    %v1003 = vand.u32 %v95, 4294901760
    %1004 = vmatpush.msra.mxu0 %v1003
    %v1005 = vand.u32 %v982, 4294901760
    %v1006 = vsub.f32 %v982, %v1005
    %v1007 = vand.u32 %v1006, 4294901760
    %v1008 = vsub.f32 %v1006, %v1007
    %v1009 = vand.u32 %v1008, 4294901760
    %1010 = vmatmul.f32.gmra.mxu0 %v1009
    %v1011 = vpop.f32.mrf.mxu0
    %v1012 = vadd.f32 %v976, %v1011
    %1013 = vdwg.mxu0
    %1014 = vmatpush.msra.mxu0 0.0
    %1015 = vmatpush.msra.mxu0 0.0
    %1016 = vmatpush.msra.mxu0 0.0
    %1017 = vmatpush.msra.mxu0 0.0
    %1018 = vmatpush.msra.mxu0 0.0
    %1019 = vmatpush.msra.mxu0 0.0
    %1020 = vmatpush.msra.mxu0 0.0
    %1021 = vmatpush.msra.mxu0 0.0
    %1022 = vmatpush.msra.mxu0 0.0
    %1023 = vmatpush.msra.mxu0 0.0
    %1024 = vmatpush.msra.mxu0 0.0
    %1025 = vmatpush.msra.mxu0 0.0
    %1026 = vmatpush.msra.mxu0 0.0
    %1027 = vmatpush.msra.mxu0 0.0
    %v1028 = vand.u32 %v985, 4294901760
    %v1029 = vsub.f32 %v985, %v1028
    %v1030 = vand.u32 %v1029, 4294901760
    %v1031 = vsub.f32 %v1029, %v1030
    %v1032 = vand.u32 %v1031, 4294901760
    %1033 = vmatpush.msra.mxu0 %v1032
    %v1034 = vand.u32 %v95, 4294901760
    %v1035 = vsub.f32 %v95, %v1034
    %v1036 = vand.u32 %v1035, 4294901760
    %v1037 = vsub.f32 %v1035, %v1036
    %v1038 = vand.u32 %v1037, 4294901760
    %1039 = vmatpush.msra.mxu0 %v1038
    %v1040 = vand.u32 %v982, 4294901760
    %1041 = vmatmul.f32.gmra.mxu0 %v1040
    %v1042 = vpop.f32.mrf.mxu0
    %v1043 = vadd.f32 %v1012, %v1042
    %1044 = vdwg.mxu0
    %1045 = vmatpush.msra.mxu0 0.0
    %1046 = vmatpush.msra.mxu0 0.0
    %1047 = vmatpush.msra.mxu0 0.0
    %1048 = vmatpush.msra.mxu0 0.0
    %1049 = vmatpush.msra.mxu0 0.0
    %1050 = vmatpush.msra.mxu0 0.0
    %1051 = vmatpush.msra.mxu0 0.0
    %1052 = vmatpush.msra.mxu0 0.0
    %1053 = vmatpush.msra.mxu0 0.0
    %1054 = vmatpush.msra.mxu0 0.0
    %1055 = vmatpush.msra.mxu0 0.0
    %1056 = vmatpush.msra.mxu0 0.0
    %1057 = vmatpush.msra.mxu0 0.0
    %1058 = vmatpush.msra.mxu0 0.0
    %v1059 = vand.u32 %v985, 4294901760
    %v1060 = vsub.f32 %v985, %v1059
    %1061 = vmatpush.msra.mxu0 %v1060
    %v1062 = vand.u32 %v95, 4294901760
    %v1063 = vsub.f32 %v95, %v1062
    %1064 = vmatpush.msra.mxu0 %v1063
    %v1065 = vand.u32 %v982, 4294901760
    %v1066 = vsub.f32 %v982, %v1065
    %1067 = vmatmul.f32.gmra.mxu0 %v1066
    %v1068 = vpop.f32.mrf.mxu0
    %v1069 = vadd.f32 %v1043, %v1068
    %1070 = vdwg.mxu0
    %1071 = vmatpush.msra.mxu0 0.0
    %1072 = vmatpush.msra.mxu0 0.0
    %1073 = vmatpush.msra.mxu0 0.0
    %1074 = vmatpush.msra.mxu0 0.0
    %1075 = vmatpush.msra.mxu0 0.0
    %1076 = vmatpush.msra.mxu0 0.0
    %1077 = vmatpush.msra.mxu0 0.0
    %1078 = vmatpush.msra.mxu0 0.0
    %1079 = vmatpush.msra.mxu0 0.0
    %1080 = vmatpush.msra.mxu0 0.0
    %1081 = vmatpush.msra.mxu0 0.0
    %1082 = vmatpush.msra.mxu0 0.0
    %1083 = vmatpush.msra.mxu0 0.0
    %1084 = vmatpush.msra.mxu0 0.0
    %v1085 = vand.u32 %v985, 4294901760
    %1086 = vmatpush.msra.mxu0 %v1085
    %v1087 = vand.u32 %v95, 4294901760
    %1088 = vmatpush.msra.mxu0 %v1087
    %v1089 = vand.u32 %v982, 4294901760
    %v1090 = vsub.f32 %v982, %v1089
    %v1091 = vand.u32 %v1090, 4294901760
    %1092 = vmatmul.f32.gmra.mxu0 %v1091
    %v1093 = vpop.f32.mrf.mxu0
    %v1094 = vadd.f32 %v1069, %v1093
    %1095 = vdwg.mxu0
    %1096 = vmatpush.msra.mxu0 0.0
    %1097 = vmatpush.msra.mxu0 0.0
    %1098 = vmatpush.msra.mxu0 0.0
    %1099 = vmatpush.msra.mxu0 0.0
    %1100 = vmatpush.msra.mxu0 0.0
    %1101 = vmatpush.msra.mxu0 0.0
    %1102 = vmatpush.msra.mxu0 0.0
    %1103 = vmatpush.msra.mxu0 0.0
    %1104 = vmatpush.msra.mxu0 0.0
    %1105 = vmatpush.msra.mxu0 0.0
    %1106 = vmatpush.msra.mxu0 0.0
    %1107 = vmatpush.msra.mxu0 0.0
    %1108 = vmatpush.msra.mxu0 0.0
    %1109 = vmatpush.msra.mxu0 0.0
    %v1110 = vand.u32 %v985, 4294901760
    %v1111 = vsub.f32 %v985, %v1110
    %v1112 = vand.u32 %v1111, 4294901760
    %1113 = vmatpush.msra.mxu0 %v1112
    %v1114 = vand.u32 %v95, 4294901760
    %v1115 = vsub.f32 %v95, %v1114
    %v1116 = vand.u32 %v1115, 4294901760
    %1117 = vmatpush.msra.mxu0 %v1116
    %v1118 = vand.u32 %v982, 4294901760
    %1119 = vmatmul.f32.gmra.mxu0 %v1118
    %v1120 = vpop.f32.mrf.mxu0
    %v1121 = vadd.f32 %v1094, %v1120
    %1122 = vdwg.mxu0
    %1123 = vmatpush.msra.mxu0 0.0
    %1124 = vmatpush.msra.mxu0 0.0
    %1125 = vmatpush.msra.mxu0 0.0
    %1126 = vmatpush.msra.mxu0 0.0
    %1127 = vmatpush.msra.mxu0 0.0
    %1128 = vmatpush.msra.mxu0 0.0
    %1129 = vmatpush.msra.mxu0 0.0
    %1130 = vmatpush.msra.mxu0 0.0
    %1131 = vmatpush.msra.mxu0 0.0
    %1132 = vmatpush.msra.mxu0 0.0
    %1133 = vmatpush.msra.mxu0 0.0
    %1134 = vmatpush.msra.mxu0 0.0
    %1135 = vmatpush.msra.mxu0 0.0
    %1136 = vmatpush.msra.mxu0 0.0
    %v1137 = vand.u32 %v985, 4294901760
    %1138 = vmatpush.msra.mxu0 %v1137
    %v1139 = vand.u32 %v95, 4294901760
    %1140 = vmatpush.msra.mxu0 %v1139
    %v1141 = vand.u32 %v982, 4294901760
    %1142 = vmatmul.f32.gmra.mxu0 %v1141
    %v1143 = vpop.f32.mrf.mxu0
    %v1144 = vadd.f32 %v1121, %v1143
    %1145 = vdwg.mxu0
    %v1146 = vadd.f32 %v1144, %v101
    %v1147 = vxor.u32 %v1146, 2147483648
    %v1148 = vmul.f32 %v1147, 1.442695
    %v1149 = vpow.pop %v1148
    %v1150 = vadd.f32 %v1149, 1.0
    %v1151 = vrcp.pop %v1150
    %v1152 = vmul.f32 %v1150, %v1151
    %v1153 = vsub.f32 1.0, %v1152
    %v1154 = vmul.f32 %v1151, %v1153
    %v1155 = vadd.f32 %v1151, %v1154
    %vm1156 = vweird.f32 %v1150
    %vm1157 = vweird.f32 %v1151
    %vm1158 = vmor %vm1156, %vm1157
    %v1159 = vsel %vm1158, %v1151, %v1155
    %v1160 = vand.u32 2147483647, %v1150
    %vm1161 = vcmp.eq.f32.partialorder %v1160, 8.507059e+37
    %v1162 = vand.u32 %v1150, 2147483648
    %v1163 = vor.u32 1.1754944e-38, %v1162
    %v1164 = vsel %vm1161, %v1163, %v1159
    %v1165 = vmul.f32 1.0, %v1164
    %v1166 = vtanh.pop %v1146
    %1168 = vrot.lane.b32.xlu0 %v359, 10
    %v1169 = vpop.permute.xlu0 %1168
    %v1171 = vmul.f32 %v1165, %v1169
    %1173 = vrot.lane.b32.xlu0 %v1166, 108
    %v1174 = vpop.permute.xlu0 %1173
    %v1176 = vmul.f32 %v1165, %v1174
    %1178 = vrot.lane.b32.xlu0 %v1176, 10
    %v1179 = vpop.permute.xlu0 %1178
    %v1181 = vadd.f32 %v1171, %v1179
    %v1182 = vtanh.pop %v1181
    %1184 = vrot.lane.b32.xlu0 %v1182, 20
    %v1185 = vpop.permute.xlu0 %1184
    %v1187 = vmul.f32 %v1165, %v1185
    %v1188 = vsel %vm574, %v1187, 0.0
    %v1190 = vrot.slane %v1188, 1
    %v1191 = vperm.slane %v1188, 0
    %v1192 = vperm.slane %v1190, 0
    %1193 = vrot.lane.b32.xlu0 %v1191, 98
    %v1194 = vpop.permute.xlu0 %1193
    %1195 = vrot.lane.b32.xlu0 %v1192, 98
    %v1196 = vpop.permute.xlu0 %1195
    %vm1199 = vcmask 73728
    %1200 = vst.msk [vmem:[#allocation9] sm:$0x1] %vm1199, %v1194
    %1201 = vst.msk [vmem:[#allocation9 + $0x8] sm:$0x1] %vm1199, %v1196
    %1202 = vrot.lane.b32.xlu0 %v357, 30
    %v1203 = vpop.permute.xlu0 %1202
    %v1205 = vsel %vm574, %v1187, %v1203
    %v1206 = vsel %vm574, %v1181, %v1169
    %vm1207 = vcmp.gt.s32.totalorder %v92, 2
    %v1209 = vsel %vm361, %v805, 0
    %1211 = vmatpush.msra.mxu0 0.0
    %1212 = vmatpush.msra.mxu0 0.0
    %1213 = vmatpush.msra.mxu0 0.0
    %1214 = vmatpush.msra.mxu0 0.0
    %1215 = vmatpush.msra.mxu0 0.0
    %1216 = vmatpush.msra.mxu0 0.0
    %1217 = vmatpush.msra.mxu0 0.0
    %1218 = vmatpush.msra.mxu0 0.0
    %1219 = vmatpush.msra.mxu0 0.0
    %1220 = vmatpush.msra.mxu0 0.0
    %1221 = vmatpush.msra.mxu0 0.0
    %1222 = vmatpush.msra.mxu0 0.0
    %1223 = vmatpush.msra.mxu0 0.0
    %1224 = vmatpush.msra.mxu0 0.0
    %v1225 = vand.u32 %v367, 4294901760
    %1226 = vmatpush.msra.mxu0 %v1225
    %v1227 = vand.u32 %v93, 4294901760
    %1228 = vmatpush.msra.mxu0 %v1227
    %v1229 = vand.u32 %v1209, 4294901760
    %v1230 = vsub.f32 %v1209, %v1229
    %v1231 = vand.u32 %v1230, 4294901760
    %v1232 = vsub.f32 %v1230, %v1231
    %v1233 = vand.u32 %v1232, 4294901760
    %1234 = vmatmul.f32.gmra.mxu0 %v1233
    %v1235 = vpop.f32.mrf.mxu0
    %v1236 = vadd.f32 0.0, %v1235
    %1237 = vdwg.mxu0
    %1238 = vmatpush.msra.mxu0 0.0
    %1239 = vmatpush.msra.mxu0 0.0
    %1240 = vmatpush.msra.mxu0 0.0
    %1241 = vmatpush.msra.mxu0 0.0
    %1242 = vmatpush.msra.mxu0 0.0
    %1243 = vmatpush.msra.mxu0 0.0
    %1244 = vmatpush.msra.mxu0 0.0
    %1245 = vmatpush.msra.mxu0 0.0
    %1246 = vmatpush.msra.mxu0 0.0
    %1247 = vmatpush.msra.mxu0 0.0
    %1248 = vmatpush.msra.mxu0 0.0
    %1249 = vmatpush.msra.mxu0 0.0
    %1250 = vmatpush.msra.mxu0 0.0
    %1251 = vmatpush.msra.mxu0 0.0
    %v1252 = vand.u32 %v367, 4294901760
    %v1253 = vsub.f32 %v367, %v1252
    %v1254 = vand.u32 %v1253, 4294901760
    %v1255 = vsub.f32 %v1253, %v1254
    %v1256 = vand.u32 %v1255, 4294901760
    %1257 = vmatpush.msra.mxu0 %v1256
    %v1258 = vand.u32 %v93, 4294901760
    %v1259 = vsub.f32 %v93, %v1258
    %v1260 = vand.u32 %v1259, 4294901760
    %v1261 = vsub.f32 %v1259, %v1260
    %v1262 = vand.u32 %v1261, 4294901760
    %1263 = vmatpush.msra.mxu0 %v1262
    %v1264 = vand.u32 %v1209, 4294901760
    %1265 = vmatmul.f32.gmra.mxu0 %v1264
    %v1266 = vpop.f32.mrf.mxu0
    %v1267 = vadd.f32 %v1236, %v1266
    %1268 = vdwg.mxu0
    %1269 = vmatpush.msra.mxu0 0.0
    %1270 = vmatpush.msra.mxu0 0.0
    %1271 = vmatpush.msra.mxu0 0.0
    %1272 = vmatpush.msra.mxu0 0.0
    %1273 = vmatpush.msra.mxu0 0.0
    %1274 = vmatpush.msra.mxu0 0.0
    %1275 = vmatpush.msra.mxu0 0.0
    %1276 = vmatpush.msra.mxu0 0.0
    %1277 = vmatpush.msra.mxu0 0.0
    %1278 = vmatpush.msra.mxu0 0.0
    %1279 = vmatpush.msra.mxu0 0.0
    %1280 = vmatpush.msra.mxu0 0.0
    %1281 = vmatpush.msra.mxu0 0.0
    %1282 = vmatpush.msra.mxu0 0.0
    %v1283 = vand.u32 %v367, 4294901760
    %v1284 = vsub.f32 %v367, %v1283
    %1285 = vmatpush.msra.mxu0 %v1284
    %v1286 = vand.u32 %v93, 4294901760
    %v1287 = vsub.f32 %v93, %v1286
    %1288 = vmatpush.msra.mxu0 %v1287
    %v1289 = vand.u32 %v1209, 4294901760
    %v1290 = vsub.f32 %v1209, %v1289
    %1291 = vmatmul.f32.gmra.mxu0 %v1290
    %v1292 = vpop.f32.mrf.mxu0
    %v1293 = vadd.f32 %v1267, %v1292
    %1294 = vdwg.mxu0
    %1295 = vmatpush.msra.mxu0 0.0
    %1296 = vmatpush.msra.mxu0 0.0
    %1297 = vmatpush.msra.mxu0 0.0
    %1298 = vmatpush.msra.mxu0 0.0
    %1299 = vmatpush.msra.mxu0 0.0
    %1300 = vmatpush.msra.mxu0 0.0
    %1301 = vmatpush.msra.mxu0 0.0
    %1302 = vmatpush.msra.mxu0 0.0
    %1303 = vmatpush.msra.mxu0 0.0
    %1304 = vmatpush.msra.mxu0 0.0
    %1305 = vmatpush.msra.mxu0 0.0
    %1306 = vmatpush.msra.mxu0 0.0
    %1307 = vmatpush.msra.mxu0 0.0
    %1308 = vmatpush.msra.mxu0 0.0
    %v1309 = vand.u32 %v367, 4294901760
    %1310 = vmatpush.msra.mxu0 %v1309
    %v1311 = vand.u32 %v93, 4294901760
    %1312 = vmatpush.msra.mxu0 %v1311
    %v1313 = vand.u32 %v1209, 4294901760
    %v1314 = vsub.f32 %v1209, %v1313
    %v1315 = vand.u32 %v1314, 4294901760
    %1316 = vmatmul.f32.gmra.mxu0 %v1315
    %v1317 = vpop.f32.mrf.mxu0
    %v1318 = vadd.f32 %v1293, %v1317
    %1319 = vdwg.mxu0
    %1320 = vmatpush.msra.mxu0 0.0
    %1321 = vmatpush.msra.mxu0 0.0
    %1322 = vmatpush.msra.mxu0 0.0
    %1323 = vmatpush.msra.mxu0 0.0
    %1324 = vmatpush.msra.mxu0 0.0
    %1325 = vmatpush.msra.mxu0 0.0
    %1326 = vmatpush.msra.mxu0 0.0
    %1327 = vmatpush.msra.mxu0 0.0
    %1328 = vmatpush.msra.mxu0 0.0
    %1329 = vmatpush.msra.mxu0 0.0
    %1330 = vmatpush.msra.mxu0 0.0
    %1331 = vmatpush.msra.mxu0 0.0
    %1332 = vmatpush.msra.mxu0 0.0
    %1333 = vmatpush.msra.mxu0 0.0
    %v1334 = vand.u32 %v367, 4294901760
    %v1335 = vsub.f32 %v367, %v1334
    %v1336 = vand.u32 %v1335, 4294901760
    %1337 = vmatpush.msra.mxu0 %v1336
    %v1338 = vand.u32 %v93, 4294901760
    %v1339 = vsub.f32 %v93, %v1338
    %v1340 = vand.u32 %v1339, 4294901760
    %1341 = vmatpush.msra.mxu0 %v1340
    %v1342 = vand.u32 %v1209, 4294901760
    %1343 = vmatmul.f32.gmra.mxu0 %v1342
    %v1344 = vpop.f32.mrf.mxu0
    %v1345 = vadd.f32 %v1318, %v1344
    %1346 = vdwg.mxu0
    %1347 = vmatpush.msra.mxu0 0.0
    %1348 = vmatpush.msra.mxu0 0.0
    %1349 = vmatpush.msra.mxu0 0.0
    %1350 = vmatpush.msra.mxu0 0.0
    %1351 = vmatpush.msra.mxu0 0.0
    %1352 = vmatpush.msra.mxu0 0.0
    %1353 = vmatpush.msra.mxu0 0.0
    %1354 = vmatpush.msra.mxu0 0.0
    %1355 = vmatpush.msra.mxu0 0.0
    %1356 = vmatpush.msra.mxu0 0.0
    %1357 = vmatpush.msra.mxu0 0.0
    %1358 = vmatpush.msra.mxu0 0.0
    %1359 = vmatpush.msra.mxu0 0.0
    %1360 = vmatpush.msra.mxu0 0.0
    %v1361 = vand.u32 %v367, 4294901760
    %1362 = vmatpush.msra.mxu0 %v1361
    %v1363 = vand.u32 %v93, 4294901760
    %1364 = vmatpush.msra.mxu0 %v1363
    %v1365 = vand.u32 %v1209, 4294901760
    %1366 = vmatmul.f32.gmra.mxu0 %v1365
    %v1367 = vpop.f32.mrf.mxu0
    %v1368 = vadd.f32 %v1345, %v1367
    %1369 = vdwg.mxu0
    %v1370 = vadd.f32 %v343, %v1368
    %v1371 = vxor.u32 %v1370, 2147483648
    %v1372 = vmul.f32 %v1371, 1.442695
    %v1373 = vpow.pop %v1372
    %v1374 = vadd.f32 %v1373, 1.0
    %v1375 = vrcp.pop %v1374
    %v1376 = vmul.f32 %v1374, %v1375
    %v1377 = vsub.f32 1.0, %v1376
    %v1378 = vmul.f32 %v1375, %v1377
    %v1379 = vadd.f32 %v1375, %v1378
    %vm1380 = vweird.f32 %v1374
    %vm1381 = vweird.f32 %v1375
    %vm1382 = vmor %vm1380, %vm1381
    %v1383 = vsel %vm1382, %v1375, %v1379
    %v1384 = vand.u32 2147483647, %v1374
    %vm1385 = vcmp.eq.f32.partialorder %v1384, 8.507059e+37
    %v1386 = vand.u32 %v1374, 2147483648
    %v1387 = vor.u32 1.1754944e-38, %v1386
    %v1388 = vsel %vm1385, %v1387, %v1383
    %v1389 = vmul.f32 1.0, %v1388
    %v1390 = vtanh.pop %v1370
    %1392 = vrot.lane.b32.xlu0 %v812, 10
    %v1393 = vpop.permute.xlu0 %1392
    %v1395 = vmul.f32 %v1389, %v1393
    %1397 = vrot.lane.b32.xlu0 %v1390, 108
    %v1398 = vpop.permute.xlu0 %1397
    %v1400 = vmul.f32 %v1389, %v1398
    %1402 = vrot.lane.b32.xlu0 %v1400, 10
    %v1403 = vpop.permute.xlu0 %1402
    %v1405 = vadd.f32 %v1395, %v1403
    %v1406 = vtanh.pop %v1405
    %1408 = vrot.lane.b32.xlu0 %v1406, 20
    %v1409 = vpop.permute.xlu0 %1408
    %v1411 = vmul.f32 %v1389, %v1409
    %v1412 = vsel %vm1207, 1, 0
    %1413 = vset.pattern.permute.xlu0 0
    %1414 = vperm.xlu0 %1413, %v1412
    %v1415 = vpop.permute.xlu0 %1414
    %vm1416 = vcmp.eq.s32.totalorder %v1415, 1
    %1418 = vst [vmem:[#allocation1] ss:$4 sm:$0xff] %v1411
    %v1419 = vld.sshfl [vmem:[#allocation1] sm:$0xff pattern:$0x73625140]
    %1420 = vrot.lane.b32.xlu0 %v1419, 98
    %v1421 = vpop.permute.xlu0 %1420
    %v1423 = vsel %vm1416, %v1421, %v805
    %1425 = vst [vmem:[#allocation1] ss:$4 sm:$0xff] %v1405
    %v1426 = vld.sshfl [vmem:[#allocation1] sm:$0xff pattern:$0x73625140]
    %1427 = vrot.lane.b32.xlu0 %v1426, 118
    %v1428 = vpop.permute.xlu0 %1427
    %v1430 = vsel %vm1416, %v1428, %v812
    %1432 = vrot.lane.b32.xlu0 %v1205, 98
    %v1433 = vpop.permute.xlu0 %1432
    %v1434 = vsel %vm361, %v1433, 0
    %1436 = vmatpush.msra.mxu0 0.0
    %1437 = vmatpush.msra.mxu0 0.0
    %1438 = vmatpush.msra.mxu0 0.0
    %1439 = vmatpush.msra.mxu0 0.0
    %1440 = vmatpush.msra.mxu0 0.0
    %1441 = vmatpush.msra.mxu0 0.0
    %1442 = vmatpush.msra.mxu0 0.0
    %1443 = vmatpush.msra.mxu0 0.0
    %1444 = vmatpush.msra.mxu0 0.0
    %1445 = vmatpush.msra.mxu0 0.0
    %1446 = vmatpush.msra.mxu0 0.0
    %1447 = vmatpush.msra.mxu0 0.0
    %1448 = vmatpush.msra.mxu0 0.0
    %1449 = vmatpush.msra.mxu0 0.0
    %v1450 = vand.u32 %v817, 4294901760
    %1451 = vmatpush.msra.mxu0 %v1450
    %v1452 = vand.u32 %v97, 4294901760
    %1453 = vmatpush.msra.mxu0 %v1452
    %v1454 = vand.u32 %v1434, 4294901760
    %v1455 = vsub.f32 %v1434, %v1454
    %v1456 = vand.u32 %v1455, 4294901760
    %v1457 = vsub.f32 %v1455, %v1456
    %v1458 = vand.u32 %v1457, 4294901760
    %1459 = vmatmul.f32.gmra.mxu0 %v1458
    %v1460 = vpop.f32.mrf.mxu0
    %v1461 = vadd.f32 0.0, %v1460
    %1462 = vdwg.mxu0
    %1463 = vmatpush.msra.mxu0 0.0
    %1464 = vmatpush.msra.mxu0 0.0
    %1465 = vmatpush.msra.mxu0 0.0
    %1466 = vmatpush.msra.mxu0 0.0
    %1467 = vmatpush.msra.mxu0 0.0
    %1468 = vmatpush.msra.mxu0 0.0
    %1469 = vmatpush.msra.mxu0 0.0
    %1470 = vmatpush.msra.mxu0 0.0
    %1471 = vmatpush.msra.mxu0 0.0
    %1472 = vmatpush.msra.mxu0 0.0
    %1473 = vmatpush.msra.mxu0 0.0
    %1474 = vmatpush.msra.mxu0 0.0
    %1475 = vmatpush.msra.mxu0 0.0
    %1476 = vmatpush.msra.mxu0 0.0
    %v1477 = vand.u32 %v817, 4294901760
    %v1478 = vsub.f32 %v817, %v1477
    %v1479 = vand.u32 %v1478, 4294901760
    %v1480 = vsub.f32 %v1478, %v1479
    %v1481 = vand.u32 %v1480, 4294901760
    %1482 = vmatpush.msra.mxu0 %v1481
    %v1483 = vand.u32 %v97, 4294901760
    %v1484 = vsub.f32 %v97, %v1483
    %v1485 = vand.u32 %v1484, 4294901760
    %v1486 = vsub.f32 %v1484, %v1485
    %v1487 = vand.u32 %v1486, 4294901760
    %1488 = vmatpush.msra.mxu0 %v1487
    %v1489 = vand.u32 %v1434, 4294901760
    %1490 = vmatmul.f32.gmra.mxu0 %v1489
    %v1491 = vpop.f32.mrf.mxu0
    %v1492 = vadd.f32 %v1461, %v1491
    %1493 = vdwg.mxu0
    %1494 = vmatpush.msra.mxu0 0.0
    %1495 = vmatpush.msra.mxu0 0.0
    %1496 = vmatpush.msra.mxu0 0.0
    %1497 = vmatpush.msra.mxu0 0.0
    %1498 = vmatpush.msra.mxu0 0.0
    %1499 = vmatpush.msra.mxu0 0.0
    %1500 = vmatpush.msra.mxu0 0.0
    %1501 = vmatpush.msra.mxu0 0.0
    %1502 = vmatpush.msra.mxu0 0.0
    %1503 = vmatpush.msra.mxu0 0.0
    %1504 = vmatpush.msra.mxu0 0.0
    %1505 = vmatpush.msra.mxu0 0.0
    %1506 = vmatpush.msra.mxu0 0.0
    %1507 = vmatpush.msra.mxu0 0.0
    %v1508 = vand.u32 %v817, 4294901760
    %v1509 = vsub.f32 %v817, %v1508
    %1510 = vmatpush.msra.mxu0 %v1509
    %v1511 = vand.u32 %v97, 4294901760
    %v1512 = vsub.f32 %v97, %v1511
    %1513 = vmatpush.msra.mxu0 %v1512
    %v1514 = vand.u32 %v1434, 4294901760
    %v1515 = vsub.f32 %v1434, %v1514
    %1516 = vmatmul.f32.gmra.mxu0 %v1515
    %v1517 = vpop.f32.mrf.mxu0
    %v1518 = vadd.f32 %v1492, %v1517
    %1519 = vdwg.mxu0
    %1520 = vmatpush.msra.mxu0 0.0
    %1521 = vmatpush.msra.mxu0 0.0
    %1522 = vmatpush.msra.mxu0 0.0
    %1523 = vmatpush.msra.mxu0 0.0
    %1524 = vmatpush.msra.mxu0 0.0
    %1525 = vmatpush.msra.mxu0 0.0
    %1526 = vmatpush.msra.mxu0 0.0
    %1527 = vmatpush.msra.mxu0 0.0
    %1528 = vmatpush.msra.mxu0 0.0
    %1529 = vmatpush.msra.mxu0 0.0
    %1530 = vmatpush.msra.mxu0 0.0
    %1531 = vmatpush.msra.mxu0 0.0
    %1532 = vmatpush.msra.mxu0 0.0
    %1533 = vmatpush.msra.mxu0 0.0
    %v1534 = vand.u32 %v817, 4294901760
    %1535 = vmatpush.msra.mxu0 %v1534
    %v1536 = vand.u32 %v97, 4294901760
    %1537 = vmatpush.msra.mxu0 %v1536
    %v1538 = vand.u32 %v1434, 4294901760
    %v1539 = vsub.f32 %v1434, %v1538
    %v1540 = vand.u32 %v1539, 4294901760
    %1541 = vmatmul.f32.gmra.mxu0 %v1540
    %v1542 = vpop.f32.mrf.mxu0
    %v1543 = vadd.f32 %v1518, %v1542
    %1544 = vdwg.mxu0
    %1545 = vmatpush.msra.mxu0 0.0
    %1546 = vmatpush.msra.mxu0 0.0
    %1547 = vmatpush.msra.mxu0 0.0
    %1548 = vmatpush.msra.mxu0 0.0
    %1549 = vmatpush.msra.mxu0 0.0
    %1550 = vmatpush.msra.mxu0 0.0
    %1551 = vmatpush.msra.mxu0 0.0
    %1552 = vmatpush.msra.mxu0 0.0
    %1553 = vmatpush.msra.mxu0 0.0
    %1554 = vmatpush.msra.mxu0 0.0
    %1555 = vmatpush.msra.mxu0 0.0
    %1556 = vmatpush.msra.mxu0 0.0
    %1557 = vmatpush.msra.mxu0 0.0
    %1558 = vmatpush.msra.mxu0 0.0
    %v1559 = vand.u32 %v817, 4294901760
    %v1560 = vsub.f32 %v817, %v1559
    %v1561 = vand.u32 %v1560, 4294901760
    %1562 = vmatpush.msra.mxu0 %v1561
    %v1563 = vand.u32 %v97, 4294901760
    %v1564 = vsub.f32 %v97, %v1563
    %v1565 = vand.u32 %v1564, 4294901760
    %1566 = vmatpush.msra.mxu0 %v1565
    %v1567 = vand.u32 %v1434, 4294901760
    %1568 = vmatmul.f32.gmra.mxu0 %v1567
    %v1569 = vpop.f32.mrf.mxu0
    %v1570 = vadd.f32 %v1543, %v1569
    %1571 = vdwg.mxu0
    %1572 = vmatpush.msra.mxu0 0.0
    %1573 = vmatpush.msra.mxu0 0.0
    %1574 = vmatpush.msra.mxu0 0.0
    %1575 = vmatpush.msra.mxu0 0.0
    %1576 = vmatpush.msra.mxu0 0.0
    %1577 = vmatpush.msra.mxu0 0.0
    %1578 = vmatpush.msra.mxu0 0.0
    %1579 = vmatpush.msra.mxu0 0.0
    %1580 = vmatpush.msra.mxu0 0.0
    %1581 = vmatpush.msra.mxu0 0.0
    %1582 = vmatpush.msra.mxu0 0.0
    %1583 = vmatpush.msra.mxu0 0.0
    %1584 = vmatpush.msra.mxu0 0.0
    %1585 = vmatpush.msra.mxu0 0.0
    %v1586 = vand.u32 %v817, 4294901760
    %1587 = vmatpush.msra.mxu0 %v1586
    %v1588 = vand.u32 %v97, 4294901760
    %1589 = vmatpush.msra.mxu0 %v1588
    %v1590 = vand.u32 %v1434, 4294901760
    %1591 = vmatmul.f32.gmra.mxu0 %v1590
    %v1592 = vpop.f32.mrf.mxu0
    %v1593 = vadd.f32 %v1570, %v1592
    %1594 = vdwg.mxu0
    %1595 = vst [vmem:[#allocation1] ss:$4 sm:$0xff] %v793
    %v1596 = vld.sshfl [vmem:[#allocation1] sm:$0xff pattern:$0x73625140]
    %1597 = vrot.lane.b32.xlu0 %v1596, 98
    %v1598 = vpop.permute.xlu0 %1597
    %v1599 = vsel %vm361, %v1598, 0
    %1601 = vmatpush.msra.mxu0 0.0
    %1602 = vmatpush.msra.mxu0 0.0
    %1603 = vmatpush.msra.mxu0 0.0
    %1604 = vmatpush.msra.mxu0 0.0
    %1605 = vmatpush.msra.mxu0 0.0
    %1606 = vmatpush.msra.mxu0 0.0
    %1607 = vmatpush.msra.mxu0 0.0
    %1608 = vmatpush.msra.mxu0 0.0
    %1609 = vmatpush.msra.mxu0 0.0
    %1610 = vmatpush.msra.mxu0 0.0
    %1611 = vmatpush.msra.mxu0 0.0
    %1612 = vmatpush.msra.mxu0 0.0
    %1613 = vmatpush.msra.mxu0 0.0
    %1614 = vmatpush.msra.mxu0 0.0
    %v1615 = vand.u32 %v985, 4294901760
    %1616 = vmatpush.msra.mxu0 %v1615
    %v1617 = vand.u32 %v95, 4294901760
    %1618 = vmatpush.msra.mxu0 %v1617
    %v1619 = vand.u32 %v1599, 4294901760
    %v1620 = vsub.f32 %v1599, %v1619
    %v1621 = vand.u32 %v1620, 4294901760
    %v1622 = vsub.f32 %v1620, %v1621
    %v1623 = vand.u32 %v1622, 4294901760
    %1624 = vmatmul.f32.gmra.mxu0 %v1623
    %v1625 = vpop.f32.mrf.mxu0
    %v1626 = vadd.f32 %v1593, %v1625
    %1627 = vdwg.mxu0
    %1628 = vmatpush.msra.mxu0 0.0
    %1629 = vmatpush.msra.mxu0 0.0
    %1630 = vmatpush.msra.mxu0 0.0
    %1631 = vmatpush.msra.mxu0 0.0
    %1632 = vmatpush.msra.mxu0 0.0
    %1633 = vmatpush.msra.mxu0 0.0
    %1634 = vmatpush.msra.mxu0 0.0
    %1635 = vmatpush.msra.mxu0 0.0
    %1636 = vmatpush.msra.mxu0 0.0
    %1637 = vmatpush.msra.mxu0 0.0
    %1638 = vmatpush.msra.mxu0 0.0
    %1639 = vmatpush.msra.mxu0 0.0
    %1640 = vmatpush.msra.mxu0 0.0
    %1641 = vmatpush.msra.mxu0 0.0
    %v1642 = vand.u32 %v985, 4294901760
    %v1643 = vsub.f32 %v985, %v1642
    %v1644 = vand.u32 %v1643, 4294901760
    %v1645 = vsub.f32 %v1643, %v1644
    %v1646 = vand.u32 %v1645, 4294901760
    %1647 = vmatpush.msra.mxu0 %v1646
    %v1648 = vand.u32 %v95, 4294901760
    %v1649 = vsub.f32 %v95, %v1648
    %v1650 = vand.u32 %v1649, 4294901760
    %v1651 = vsub.f32 %v1649, %v1650
    %v1652 = vand.u32 %v1651, 4294901760
    %1653 = vmatpush.msra.mxu0 %v1652
    %v1654 = vand.u32 %v1599, 4294901760
    %1655 = vmatmul.f32.gmra.mxu0 %v1654
    %v1656 = vpop.f32.mrf.mxu0
    %v1657 = vadd.f32 %v1626, %v1656
    %1658 = vdwg.mxu0
    %1659 = vmatpush.msra.mxu0 0.0
    %1660 = vmatpush.msra.mxu0 0.0
    %1661 = vmatpush.msra.mxu0 0.0
    %1662 = vmatpush.msra.mxu0 0.0
    %1663 = vmatpush.msra.mxu0 0.0
    %1664 = vmatpush.msra.mxu0 0.0
    %1665 = vmatpush.msra.mxu0 0.0
    %1666 = vmatpush.msra.mxu0 0.0
    %1667 = vmatpush.msra.mxu0 0.0
    %1668 = vmatpush.msra.mxu0 0.0
    %1669 = vmatpush.msra.mxu0 0.0
    %1670 = vmatpush.msra.mxu0 0.0
    %1671 = vmatpush.msra.mxu0 0.0
    %1672 = vmatpush.msra.mxu0 0.0
    %v1673 = vand.u32 %v985, 4294901760
    %v1674 = vsub.f32 %v985, %v1673
    %1675 = vmatpush.msra.mxu0 %v1674
    %v1676 = vand.u32 %v95, 4294901760
    %v1677 = vsub.f32 %v95, %v1676
    %1678 = vmatpush.msra.mxu0 %v1677
    %v1679 = vand.u32 %v1599, 4294901760
    %v1680 = vsub.f32 %v1599, %v1679
    %1681 = vmatmul.f32.gmra.mxu0 %v1680
    %v1682 = vpop.f32.mrf.mxu0
    %v1683 = vadd.f32 %v1657, %v1682
    %1684 = vdwg.mxu0
    %1685 = vmatpush.msra.mxu0 0.0
    %1686 = vmatpush.msra.mxu0 0.0
    %1687 = vmatpush.msra.mxu0 0.0
    %1688 = vmatpush.msra.mxu0 0.0
    %1689 = vmatpush.msra.mxu0 0.0
    %1690 = vmatpush.msra.mxu0 0.0
    %1691 = vmatpush.msra.mxu0 0.0
    %1692 = vmatpush.msra.mxu0 0.0
    %1693 = vmatpush.msra.mxu0 0.0
    %1694 = vmatpush.msra.mxu0 0.0
    %1695 = vmatpush.msra.mxu0 0.0
    %1696 = vmatpush.msra.mxu0 0.0
    %1697 = vmatpush.msra.mxu0 0.0
    %1698 = vmatpush.msra.mxu0 0.0
    %v1699 = vand.u32 %v985, 4294901760
    %1700 = vmatpush.msra.mxu0 %v1699
    %v1701 = vand.u32 %v95, 4294901760
    %1702 = vmatpush.msra.mxu0 %v1701
    %v1703 = vand.u32 %v1599, 4294901760
    %v1704 = vsub.f32 %v1599, %v1703
    %v1705 = vand.u32 %v1704, 4294901760
    %1706 = vmatmul.f32.gmra.mxu0 %v1705
    %v1707 = vpop.f32.mrf.mxu0
    %v1708 = vadd.f32 %v1683, %v1707
    %1709 = vdwg.mxu0
    %1710 = vmatpush.msra.mxu0 0.0
    %1711 = vmatpush.msra.mxu0 0.0
    %1712 = vmatpush.msra.mxu0 0.0
    %1713 = vmatpush.msra.mxu0 0.0
    %1714 = vmatpush.msra.mxu0 0.0
    %1715 = vmatpush.msra.mxu0 0.0
    %1716 = vmatpush.msra.mxu0 0.0
    %1717 = vmatpush.msra.mxu0 0.0
    %1718 = vmatpush.msra.mxu0 0.0
    %1719 = vmatpush.msra.mxu0 0.0
    %1720 = vmatpush.msra.mxu0 0.0
    %1721 = vmatpush.msra.mxu0 0.0
    %1722 = vmatpush.msra.mxu0 0.0
    %1723 = vmatpush.msra.mxu0 0.0
    %v1724 = vand.u32 %v985, 4294901760
    %v1725 = vsub.f32 %v985, %v1724
    %v1726 = vand.u32 %v1725, 4294901760
    %1727 = vmatpush.msra.mxu0 %v1726
    %v1728 = vand.u32 %v95, 4294901760
    %v1729 = vsub.f32 %v95, %v1728
    %v1730 = vand.u32 %v1729, 4294901760
    %1731 = vmatpush.msra.mxu0 %v1730
    %v1732 = vand.u32 %v1599, 4294901760
    %1733 = vmatmul.f32.gmra.mxu0 %v1732
    %v1734 = vpop.f32.mrf.mxu0
    %v1735 = vadd.f32 %v1708, %v1734
    %1736 = vdwg.mxu0
    %1737 = vmatpush.msra.mxu0 0.0
    %1738 = vmatpush.msra.mxu0 0.0
    %1739 = vmatpush.msra.mxu0 0.0
    %1740 = vmatpush.msra.mxu0 0.0
    %1741 = vmatpush.msra.mxu0 0.0
    %1742 = vmatpush.msra.mxu0 0.0
    %1743 = vmatpush.msra.mxu0 0.0
    %1744 = vmatpush.msra.mxu0 0.0
    %1745 = vmatpush.msra.mxu0 0.0
    %1746 = vmatpush.msra.mxu0 0.0
    %1747 = vmatpush.msra.mxu0 0.0
    %1748 = vmatpush.msra.mxu0 0.0
    %1749 = vmatpush.msra.mxu0 0.0
    %1750 = vmatpush.msra.mxu0 0.0
    %v1751 = vand.u32 %v985, 4294901760
    %1752 = vmatpush.msra.mxu0 %v1751
    %v1753 = vand.u32 %v95, 4294901760
    %1754 = vmatpush.msra.mxu0 %v1753
    %v1755 = vand.u32 %v1599, 4294901760
    %1756 = vmatmul.f32.gmra.mxu0 %v1755
    %v1757 = vpop.f32.mrf.mxu0
    %v1758 = vadd.f32 %v1735, %v1757
    %1759 = vdwg.mxu0
    %v1760 = vadd.f32 %v1758, %v101
    %v1761 = vxor.u32 %v1760, 2147483648
    %v1762 = vmul.f32 %v1761, 1.442695
    %v1763 = vpow.pop %v1762
    %v1764 = vadd.f32 %v1763, 1.0
    %v1765 = vrcp.pop %v1764
    %v1766 = vmul.f32 %v1764, %v1765
    %v1767 = vsub.f32 1.0, %v1766
    %v1768 = vmul.f32 %v1765, %v1767
    %v1769 = vadd.f32 %v1765, %v1768
    %vm1770 = vweird.f32 %v1764
    %vm1771 = vweird.f32 %v1765
    %vm1772 = vmor %vm1770, %vm1771
    %v1773 = vsel %vm1772, %v1765, %v1769
    %v1774 = vand.u32 2147483647, %v1764
    %vm1775 = vcmp.eq.f32.partialorder %v1774, 8.507059e+37
    %v1776 = vand.u32 %v1764, 2147483648
    %v1777 = vor.u32 1.1754944e-38, %v1776
    %v1778 = vsel %vm1775, %v1777, %v1773
    %v1779 = vmul.f32 1.0, %v1778
    %v1780 = vtanh.pop %v1760
    %v1781 = vmul.f32 %v1779, %v1206
    %1783 = vrot.lane.b32.xlu0 %v1780, 108
    %v1784 = vpop.permute.xlu0 %1783
    %v1786 = vmul.f32 %v1779, %v1784
    %1788 = vrot.lane.b32.xlu0 %v1786, 10
    %v1789 = vpop.permute.xlu0 %1788
    %v1791 = vadd.f32 %v1781, %v1789
    %v1792 = vtanh.pop %v1791
    %1794 = vrot.lane.b32.xlu0 %v1792, 20
    %v1795 = vpop.permute.xlu0 %1794
    %v1797 = vmul.f32 %v1779, %v1795
    %v1798 = vsel %vm798, %v1797, 0.0
    %v1800 = vrot.slane %v1798, 1
    %v1801 = vperm.slane %v1798, 0
    %v1802 = vperm.slane %v1800, 0
    %1803 = vrot.lane.b32.xlu0 %v1801, 98
    %v1804 = vpop.permute.xlu0 %1803
    %1805 = vrot.lane.b32.xlu0 %v1802, 98
    %v1806 = vpop.permute.xlu0 %1805
    %1809 = vst.msk [vmem:[#allocation9 + $0x1] sm:$0x1] %vm1199, %v1804
    %1810 = vst.msk [vmem:[#allocation9 + $0x9] sm:$0x1] %vm1199, %v1806
    %v1811 = vsel %vm798, %v1797, %v1205
    %v1812 = vsel %vm798, %v1791, %v1206
    %vm1813 = vcmp.gt.s32.totalorder %v92, 3
    %v1815 = vsel %vm361, %v1423, 0
    %1817 = vmatpush.msra.mxu0 0.0
    %1818 = vmatpush.msra.mxu0 0.0
    %1819 = vmatpush.msra.mxu0 0.0
    %1820 = vmatpush.msra.mxu0 0.0
    %1821 = vmatpush.msra.mxu0 0.0
    %1822 = vmatpush.msra.mxu0 0.0
    %1823 = vmatpush.msra.mxu0 0.0
    %1824 = vmatpush.msra.mxu0 0.0
    %1825 = vmatpush.msra.mxu0 0.0
    %1826 = vmatpush.msra.mxu0 0.0
    %1827 = vmatpush.msra.mxu0 0.0
    %1828 = vmatpush.msra.mxu0 0.0
    %1829 = vmatpush.msra.mxu0 0.0
    %1830 = vmatpush.msra.mxu0 0.0
    %v1831 = vand.u32 %v367, 4294901760
    %1832 = vmatpush.msra.mxu0 %v1831
    %v1833 = vand.u32 %v93, 4294901760
    %1834 = vmatpush.msra.mxu0 %v1833
    %v1835 = vand.u32 %v1815, 4294901760
    %v1836 = vsub.f32 %v1815, %v1835
    %v1837 = vand.u32 %v1836, 4294901760
    %v1838 = vsub.f32 %v1836, %v1837
    %v1839 = vand.u32 %v1838, 4294901760
    %1840 = vmatmul.f32.gmra.mxu0 %v1839
    %v1841 = vpop.f32.mrf.mxu0
    %v1842 = vadd.f32 0.0, %v1841
    %1843 = vdwg.mxu0
    %1844 = vmatpush.msra.mxu0 0.0
    %1845 = vmatpush.msra.mxu0 0.0
    %1846 = vmatpush.msra.mxu0 0.0
    %1847 = vmatpush.msra.mxu0 0.0
    %1848 = vmatpush.msra.mxu0 0.0
    %1849 = vmatpush.msra.mxu0 0.0
    %1850 = vmatpush.msra.mxu0 0.0
    %1851 = vmatpush.msra.mxu0 0.0
    %1852 = vmatpush.msra.mxu0 0.0
    %1853 = vmatpush.msra.mxu0 0.0
    %1854 = vmatpush.msra.mxu0 0.0
    %1855 = vmatpush.msra.mxu0 0.0
    %1856 = vmatpush.msra.mxu0 0.0
    %1857 = vmatpush.msra.mxu0 0.0
    %v1858 = vand.u32 %v367, 4294901760
    %v1859 = vsub.f32 %v367, %v1858
    %v1860 = vand.u32 %v1859, 4294901760
    %v1861 = vsub.f32 %v1859, %v1860
    %v1862 = vand.u32 %v1861, 4294901760
    %1863 = vmatpush.msra.mxu0 %v1862
    %v1864 = vand.u32 %v93, 4294901760
    %v1865 = vsub.f32 %v93, %v1864
    %v1866 = vand.u32 %v1865, 4294901760
    %v1867 = vsub.f32 %v1865, %v1866
    %v1868 = vand.u32 %v1867, 4294901760
    %1869 = vmatpush.msra.mxu0 %v1868
    %v1870 = vand.u32 %v1815, 4294901760
    %1871 = vmatmul.f32.gmra.mxu0 %v1870
    %v1872 = vpop.f32.mrf.mxu0
    %v1873 = vadd.f32 %v1842, %v1872
    %1874 = vdwg.mxu0
    %1875 = vmatpush.msra.mxu0 0.0
    %1876 = vmatpush.msra.mxu0 0.0
    %1877 = vmatpush.msra.mxu0 0.0
    %1878 = vmatpush.msra.mxu0 0.0
    %1879 = vmatpush.msra.mxu0 0.0
    %1880 = vmatpush.msra.mxu0 0.0
    %1881 = vmatpush.msra.mxu0 0.0
    %1882 = vmatpush.msra.mxu0 0.0
    %1883 = vmatpush.msra.mxu0 0.0
    %1884 = vmatpush.msra.mxu0 0.0
    %1885 = vmatpush.msra.mxu0 0.0
    %1886 = vmatpush.msra.mxu0 0.0
    %1887 = vmatpush.msra.mxu0 0.0
    %1888 = vmatpush.msra.mxu0 0.0
    %v1889 = vand.u32 %v367, 4294901760
    %v1890 = vsub.f32 %v367, %v1889
    %1891 = vmatpush.msra.mxu0 %v1890
    %v1892 = vand.u32 %v93, 4294901760
    %v1893 = vsub.f32 %v93, %v1892
    %1894 = vmatpush.msra.mxu0 %v1893
    %v1895 = vand.u32 %v1815, 4294901760
    %v1896 = vsub.f32 %v1815, %v1895
    %1897 = vmatmul.f32.gmra.mxu0 %v1896
    %v1898 = vpop.f32.mrf.mxu0
    %v1899 = vadd.f32 %v1873, %v1898
    %1900 = vdwg.mxu0
    %1901 = vmatpush.msra.mxu0 0.0
    %1902 = vmatpush.msra.mxu0 0.0
    %1903 = vmatpush.msra.mxu0 0.0
    %1904 = vmatpush.msra.mxu0 0.0
    %1905 = vmatpush.msra.mxu0 0.0
    %1906 = vmatpush.msra.mxu0 0.0
    %1907 = vmatpush.msra.mxu0 0.0
    %1908 = vmatpush.msra.mxu0 0.0
    %1909 = vmatpush.msra.mxu0 0.0
    %1910 = vmatpush.msra.mxu0 0.0
    %1911 = vmatpush.msra.mxu0 0.0
    %1912 = vmatpush.msra.mxu0 0.0
    %1913 = vmatpush.msra.mxu0 0.0
    %1914 = vmatpush.msra.mxu0 0.0
    %v1915 = vand.u32 %v367, 4294901760
    %1916 = vmatpush.msra.mxu0 %v1915
    %v1917 = vand.u32 %v93, 4294901760
    %1918 = vmatpush.msra.mxu0 %v1917
    %v1919 = vand.u32 %v1815, 4294901760
    %v1920 = vsub.f32 %v1815, %v1919
    %v1921 = vand.u32 %v1920, 4294901760
    %1922 = vmatmul.f32.gmra.mxu0 %v1921
    %v1923 = vpop.f32.mrf.mxu0
    %v1924 = vadd.f32 %v1899, %v1923
    %1925 = vdwg.mxu0
    %1926 = vmatpush.msra.mxu0 0.0
    %1927 = vmatpush.msra.mxu0 0.0
    %1928 = vmatpush.msra.mxu0 0.0
    %1929 = vmatpush.msra.mxu0 0.0
    %1930 = vmatpush.msra.mxu0 0.0
    %1931 = vmatpush.msra.mxu0 0.0
    %1932 = vmatpush.msra.mxu0 0.0
    %1933 = vmatpush.msra.mxu0 0.0
    %1934 = vmatpush.msra.mxu0 0.0
    %1935 = vmatpush.msra.mxu0 0.0
    %1936 = vmatpush.msra.mxu0 0.0
    %1937 = vmatpush.msra.mxu0 0.0
    %1938 = vmatpush.msra.mxu0 0.0
    %1939 = vmatpush.msra.mxu0 0.0
    %v1940 = vand.u32 %v367, 4294901760
    %v1941 = vsub.f32 %v367, %v1940
    %v1942 = vand.u32 %v1941, 4294901760
    %1943 = vmatpush.msra.mxu0 %v1942
    %v1944 = vand.u32 %v93, 4294901760
    %v1945 = vsub.f32 %v93, %v1944
    %v1946 = vand.u32 %v1945, 4294901760
    %1947 = vmatpush.msra.mxu0 %v1946
    %v1948 = vand.u32 %v1815, 4294901760
    %1949 = vmatmul.f32.gmra.mxu0 %v1948
    %v1950 = vpop.f32.mrf.mxu0
    %v1951 = vadd.f32 %v1924, %v1950
    %1952 = vdwg.mxu0
    %1953 = vmatpush.msra.mxu0 0.0
    %1954 = vmatpush.msra.mxu0 0.0
    %1955 = vmatpush.msra.mxu0 0.0
    %1956 = vmatpush.msra.mxu0 0.0
    %1957 = vmatpush.msra.mxu0 0.0
    %1958 = vmatpush.msra.mxu0 0.0
    %1959 = vmatpush.msra.mxu0 0.0
    %1960 = vmatpush.msra.mxu0 0.0
    %1961 = vmatpush.msra.mxu0 0.0
    %1962 = vmatpush.msra.mxu0 0.0
    %1963 = vmatpush.msra.mxu0 0.0
    %1964 = vmatpush.msra.mxu0 0.0
    %1965 = vmatpush.msra.mxu0 0.0
    %1966 = vmatpush.msra.mxu0 0.0
    %v1967 = vand.u32 %v367, 4294901760
    %1968 = vmatpush.msra.mxu0 %v1967
    %v1969 = vand.u32 %v93, 4294901760
    %1970 = vmatpush.msra.mxu0 %v1969
    %v1971 = vand.u32 %v1815, 4294901760
    %1972 = vmatmul.f32.gmra.mxu0 %v1971
    %v1973 = vpop.f32.mrf.mxu0
    %v1974 = vadd.f32 %v1951, %v1973
    %1975 = vdwg.mxu0
    %v1976 = vadd.f32 %v344, %v1974
    %v1977 = vxor.u32 %v1976, 2147483648
    %v1978 = vmul.f32 %v1977, 1.442695
    %v1979 = vpow.pop %v1978
    %v1980 = vadd.f32 %v1979, 1.0
    %v1981 = vrcp.pop %v1980
    %v1982 = vmul.f32 %v1980, %v1981
    %v1983 = vsub.f32 1.0, %v1982
    %v1984 = vmul.f32 %v1981, %v1983
    %v1985 = vadd.f32 %v1981, %v1984
    %vm1986 = vweird.f32 %v1980
    %vm1987 = vweird.f32 %v1981
    %vm1988 = vmor %vm1986, %vm1987
    %v1989 = vsel %vm1988, %v1981, %v1985
    %v1990 = vand.u32 2147483647, %v1980
    %vm1991 = vcmp.eq.f32.partialorder %v1990, 8.507059e+37
    %v1992 = vand.u32 %v1980, 2147483648
    %v1993 = vor.u32 1.1754944e-38, %v1992
    %v1994 = vsel %vm1991, %v1993, %v1989
    %v1995 = vmul.f32 1.0, %v1994
    %v1996 = vtanh.pop %v1976
    %1998 = vrot.lane.b32.xlu0 %v1430, 10
    %v1999 = vpop.permute.xlu0 %1998
    %v2001 = vmul.f32 %v1995, %v1999
    %2003 = vrot.lane.b32.xlu0 %v1996, 108
    %v2004 = vpop.permute.xlu0 %2003
    %v2006 = vmul.f32 %v1995, %v2004
    %2008 = vrot.lane.b32.xlu0 %v2006, 10
    %v2009 = vpop.permute.xlu0 %2008
    %v2011 = vadd.f32 %v2001, %v2009
    %v2012 = vtanh.pop %v2011
    %2014 = vrot.lane.b32.xlu0 %v2012, 20
    %v2015 = vpop.permute.xlu0 %2014
    %v2017 = vmul.f32 %v1995, %v2015
    %v2018 = vsel %vm1813, 1, 0
    %2019 = vset.pattern.permute.xlu0 0
    %2020 = vperm.xlu0 %2019, %v2018
    %v2021 = vpop.permute.xlu0 %2020
    %vm2022 = vcmp.eq.s32.totalorder %v2021, 1
    %2024 = vst [vmem:[#allocation1] ss:$4 sm:$0xff] %v2017
    %v2025 = vld.sshfl [vmem:[#allocation1] sm:$0xff pattern:$0x73625140]
    %2026 = vrot.lane.b32.xlu0 %v2025, 98
    %v2027 = vpop.permute.xlu0 %2026
    %v2029 = vsel %vm2022, %v2027, %v1423
    %2031 = vst [vmem:[#allocation1] ss:$4 sm:$0xff] %v2011
    %v2032 = vld.sshfl [vmem:[#allocation1] sm:$0xff pattern:$0x73625140]
    %2033 = vrot.lane.b32.xlu0 %v2032, 118
    %v2034 = vpop.permute.xlu0 %2033
    %v2036 = vsel %vm2022, %v2034, %v1430
    %2038 = vrot.lane.b32.xlu0 %v1811, 98
    %v2039 = vpop.permute.xlu0 %2038
    %v2040 = vsel %vm361, %v2039, 0
    %2042 = vmatpush.msra.mxu0 0.0
    %2043 = vmatpush.msra.mxu0 0.0
    %2044 = vmatpush.msra.mxu0 0.0
    %2045 = vmatpush.msra.mxu0 0.0
    %2046 = vmatpush.msra.mxu0 0.0
    %2047 = vmatpush.msra.mxu0 0.0
    %2048 = vmatpush.msra.mxu0 0.0
    %2049 = vmatpush.msra.mxu0 0.0
    %2050 = vmatpush.msra.mxu0 0.0
    %2051 = vmatpush.msra.mxu0 0.0
    %2052 = vmatpush.msra.mxu0 0.0
    %2053 = vmatpush.msra.mxu0 0.0
    %2054 = vmatpush.msra.mxu0 0.0
    %2055 = vmatpush.msra.mxu0 0.0
    %v2056 = vand.u32 %v817, 4294901760
    %2057 = vmatpush.msra.mxu0 %v2056
    %v2058 = vand.u32 %v97, 4294901760
    %2059 = vmatpush.msra.mxu0 %v2058
    %v2060 = vand.u32 %v2040, 4294901760
    %v2061 = vsub.f32 %v2040, %v2060
    %v2062 = vand.u32 %v2061, 4294901760
    %v2063 = vsub.f32 %v2061, %v2062
    %v2064 = vand.u32 %v2063, 4294901760
    %2065 = vmatmul.f32.gmra.mxu0 %v2064
    %v2066 = vpop.f32.mrf.mxu0
    %v2067 = vadd.f32 0.0, %v2066
    %2068 = vdwg.mxu0
    %2069 = vmatpush.msra.mxu0 0.0
    %2070 = vmatpush.msra.mxu0 0.0
    %2071 = vmatpush.msra.mxu0 0.0
    %2072 = vmatpush.msra.mxu0 0.0
    %2073 = vmatpush.msra.mxu0 0.0
    %2074 = vmatpush.msra.mxu0 0.0
    %2075 = vmatpush.msra.mxu0 0.0
    %2076 = vmatpush.msra.mxu0 0.0
    %2077 = vmatpush.msra.mxu0 0.0
    %2078 = vmatpush.msra.mxu0 0.0
    %2079 = vmatpush.msra.mxu0 0.0
    %2080 = vmatpush.msra.mxu0 0.0
    %2081 = vmatpush.msra.mxu0 0.0
    %2082 = vmatpush.msra.mxu0 0.0
    %v2083 = vand.u32 %v817, 4294901760
    %v2084 = vsub.f32 %v817, %v2083
    %v2085 = vand.u32 %v2084, 4294901760
    %v2086 = vsub.f32 %v2084, %v2085
    %v2087 = vand.u32 %v2086, 4294901760
    %2088 = vmatpush.msra.mxu0 %v2087
    %v2089 = vand.u32 %v97, 4294901760
    %v2090 = vsub.f32 %v97, %v2089
    %v2091 = vand.u32 %v2090, 4294901760
    %v2092 = vsub.f32 %v2090, %v2091
    %v2093 = vand.u32 %v2092, 4294901760
    %2094 = vmatpush.msra.mxu0 %v2093
    %v2095 = vand.u32 %v2040, 4294901760
    %2096 = vmatmul.f32.gmra.mxu0 %v2095
    %v2097 = vpop.f32.mrf.mxu0
    %v2098 = vadd.f32 %v2067, %v2097
    %2099 = vdwg.mxu0
    %2100 = vmatpush.msra.mxu0 0.0
    %2101 = vmatpush.msra.mxu0 0.0
    %2102 = vmatpush.msra.mxu0 0.0
    %2103 = vmatpush.msra.mxu0 0.0
    %2104 = vmatpush.msra.mxu0 0.0
    %2105 = vmatpush.msra.mxu0 0.0
    %2106 = vmatpush.msra.mxu0 0.0
    %2107 = vmatpush.msra.mxu0 0.0
    %2108 = vmatpush.msra.mxu0 0.0
    %2109 = vmatpush.msra.mxu0 0.0
    %2110 = vmatpush.msra.mxu0 0.0
    %2111 = vmatpush.msra.mxu0 0.0
    %2112 = vmatpush.msra.mxu0 0.0
    %2113 = vmatpush.msra.mxu0 0.0
    %v2114 = vand.u32 %v817, 4294901760
    %v2115 = vsub.f32 %v817, %v2114
    %2116 = vmatpush.msra.mxu0 %v2115
    %v2117 = vand.u32 %v97, 4294901760
    %v2118 = vsub.f32 %v97, %v2117
    %2119 = vmatpush.msra.mxu0 %v2118
    %v2120 = vand.u32 %v2040, 4294901760
    %v2121 = vsub.f32 %v2040, %v2120
    %2122 = vmatmul.f32.gmra.mxu0 %v2121
    %v2123 = vpop.f32.mrf.mxu0
    %v2124 = vadd.f32 %v2098, %v2123
    %2125 = vdwg.mxu0
    %2126 = vmatpush.msra.mxu0 0.0
    %2127 = vmatpush.msra.mxu0 0.0
    %2128 = vmatpush.msra.mxu0 0.0
    %2129 = vmatpush.msra.mxu0 0.0
    %2130 = vmatpush.msra.mxu0 0.0
    %2131 = vmatpush.msra.mxu0 0.0
    %2132 = vmatpush.msra.mxu0 0.0
    %2133 = vmatpush.msra.mxu0 0.0
    %2134 = vmatpush.msra.mxu0 0.0
    %2135 = vmatpush.msra.mxu0 0.0
    %2136 = vmatpush.msra.mxu0 0.0
    %2137 = vmatpush.msra.mxu0 0.0
    %2138 = vmatpush.msra.mxu0 0.0
    %2139 = vmatpush.msra.mxu0 0.0
    %v2140 = vand.u32 %v817, 4294901760
    %2141 = vmatpush.msra.mxu0 %v2140
    %v2142 = vand.u32 %v97, 4294901760
    %2143 = vmatpush.msra.mxu0 %v2142
    %v2144 = vand.u32 %v2040, 4294901760
    %v2145 = vsub.f32 %v2040, %v2144
    %v2146 = vand.u32 %v2145, 4294901760
    %2147 = vmatmul.f32.gmra.mxu0 %v2146
    %v2148 = vpop.f32.mrf.mxu0
    %v2149 = vadd.f32 %v2124, %v2148
    %2150 = vdwg.mxu0
    %2151 = vmatpush.msra.mxu0 0.0
    %2152 = vmatpush.msra.mxu0 0.0
    %2153 = vmatpush.msra.mxu0 0.0
    %2154 = vmatpush.msra.mxu0 0.0
    %2155 = vmatpush.msra.mxu0 0.0
    %2156 = vmatpush.msra.mxu0 0.0
    %2157 = vmatpush.msra.mxu0 0.0
    %2158 = vmatpush.msra.mxu0 0.0
    %2159 = vmatpush.msra.mxu0 0.0
    %2160 = vmatpush.msra.mxu0 0.0
    %2161 = vmatpush.msra.mxu0 0.0
    %2162 = vmatpush.msra.mxu0 0.0
    %2163 = vmatpush.msra.mxu0 0.0
    %2164 = vmatpush.msra.mxu0 0.0
    %v2165 = vand.u32 %v817, 4294901760
    %v2166 = vsub.f32 %v817, %v2165
    %v2167 = vand.u32 %v2166, 4294901760
    %2168 = vmatpush.msra.mxu0 %v2167
    %v2169 = vand.u32 %v97, 4294901760
    %v2170 = vsub.f32 %v97, %v2169
    %v2171 = vand.u32 %v2170, 4294901760
    %2172 = vmatpush.msra.mxu0 %v2171
    %v2173 = vand.u32 %v2040, 4294901760
    %2174 = vmatmul.f32.gmra.mxu0 %v2173
    %v2175 = vpop.f32.mrf.mxu0
    %v2176 = vadd.f32 %v2149, %v2175
    %2177 = vdwg.mxu0
    %2178 = vmatpush.msra.mxu0 0.0
    %2179 = vmatpush.msra.mxu0 0.0
    %2180 = vmatpush.msra.mxu0 0.0
    %2181 = vmatpush.msra.mxu0 0.0
    %2182 = vmatpush.msra.mxu0 0.0
    %2183 = vmatpush.msra.mxu0 0.0
    %2184 = vmatpush.msra.mxu0 0.0
    %2185 = vmatpush.msra.mxu0 0.0
    %2186 = vmatpush.msra.mxu0 0.0
    %2187 = vmatpush.msra.mxu0 0.0
    %2188 = vmatpush.msra.mxu0 0.0
    %2189 = vmatpush.msra.mxu0 0.0
    %2190 = vmatpush.msra.mxu0 0.0
    %2191 = vmatpush.msra.mxu0 0.0
    %v2192 = vand.u32 %v817, 4294901760
    %2193 = vmatpush.msra.mxu0 %v2192
    %v2194 = vand.u32 %v97, 4294901760
    %2195 = vmatpush.msra.mxu0 %v2194
    %v2196 = vand.u32 %v2040, 4294901760
    %2197 = vmatmul.f32.gmra.mxu0 %v2196
    %v2198 = vpop.f32.mrf.mxu0
    %v2199 = vadd.f32 %v2176, %v2198
    %2200 = vdwg.mxu0
    %2201 = vst [vmem:[#allocation1] ss:$4 sm:$0xff] %v1411
    %v2202 = vld.sshfl [vmem:[#allocation1] sm:$0xff pattern:$0x73625140]
    %2203 = vrot.lane.b32.xlu0 %v2202, 98
    %v2204 = vpop.permute.xlu0 %2203
    %v2205 = vsel %vm361, %v2204, 0
    %2207 = vmatpush.msra.mxu0 0.0
    %2208 = vmatpush.msra.mxu0 0.0
    %2209 = vmatpush.msra.mxu0 0.0
    %2210 = vmatpush.msra.mxu0 0.0
    %2211 = vmatpush.msra.mxu0 0.0
    %2212 = vmatpush.msra.mxu0 0.0
    %2213 = vmatpush.msra.mxu0 0.0
    %2214 = vmatpush.msra.mxu0 0.0
    %2215 = vmatpush.msra.mxu0 0.0
    %2216 = vmatpush.msra.mxu0 0.0
    %2217 = vmatpush.msra.mxu0 0.0
    %2218 = vmatpush.msra.mxu0 0.0
    %2219 = vmatpush.msra.mxu0 0.0
    %2220 = vmatpush.msra.mxu0 0.0
    %v2221 = vand.u32 %v985, 4294901760
    %2222 = vmatpush.msra.mxu0 %v2221
    %v2223 = vand.u32 %v95, 4294901760
    %2224 = vmatpush.msra.mxu0 %v2223
    %v2225 = vand.u32 %v2205, 4294901760
    %v2226 = vsub.f32 %v2205, %v2225
    %v2227 = vand.u32 %v2226, 4294901760
    %v2228 = vsub.f32 %v2226, %v2227
    %v2229 = vand.u32 %v2228, 4294901760
    %2230 = vmatmul.f32.gmra.mxu0 %v2229
    %v2231 = vpop.f32.mrf.mxu0
    %v2232 = vadd.f32 %v2199, %v2231
    %2233 = vdwg.mxu0
    %2234 = vmatpush.msra.mxu0 0.0
    %2235 = vmatpush.msra.mxu0 0.0
    %2236 = vmatpush.msra.mxu0 0.0
    %2237 = vmatpush.msra.mxu0 0.0
    %2238 = vmatpush.msra.mxu0 0.0
    %2239 = vmatpush.msra.mxu0 0.0
    %2240 = vmatpush.msra.mxu0 0.0
    %2241 = vmatpush.msra.mxu0 0.0
    %2242 = vmatpush.msra.mxu0 0.0
    %2243 = vmatpush.msra.mxu0 0.0
    %2244 = vmatpush.msra.mxu0 0.0
    %2245 = vmatpush.msra.mxu0 0.0
    %2246 = vmatpush.msra.mxu0 0.0
    %2247 = vmatpush.msra.mxu0 0.0
    %v2248 = vand.u32 %v985, 4294901760
    %v2249 = vsub.f32 %v985, %v2248
    %v2250 = vand.u32 %v2249, 4294901760
    %v2251 = vsub.f32 %v2249, %v2250
    %v2252 = vand.u32 %v2251, 4294901760
    %2253 = vmatpush.msra.mxu0 %v2252
    %v2254 = vand.u32 %v95, 4294901760
    %v2255 = vsub.f32 %v95, %v2254
    %v2256 = vand.u32 %v2255, 4294901760
    %v2257 = vsub.f32 %v2255, %v2256
    %v2258 = vand.u32 %v2257, 4294901760
    %2259 = vmatpush.msra.mxu0 %v2258
    %v2260 = vand.u32 %v2205, 4294901760
    %2261 = vmatmul.f32.gmra.mxu0 %v2260
    %v2262 = vpop.f32.mrf.mxu0
    %v2263 = vadd.f32 %v2232, %v2262
    %2264 = vdwg.mxu0
    %2265 = vmatpush.msra.mxu0 0.0
    %2266 = vmatpush.msra.mxu0 0.0
    %2267 = vmatpush.msra.mxu0 0.0
    %2268 = vmatpush.msra.mxu0 0.0
    %2269 = vmatpush.msra.mxu0 0.0
    %2270 = vmatpush.msra.mxu0 0.0
    %2271 = vmatpush.msra.mxu0 0.0
    %2272 = vmatpush.msra.mxu0 0.0
    %2273 = vmatpush.msra.mxu0 0.0
    %2274 = vmatpush.msra.mxu0 0.0
    %2275 = vmatpush.msra.mxu0 0.0
    %2276 = vmatpush.msra.mxu0 0.0
    %2277 = vmatpush.msra.mxu0 0.0
    %2278 = vmatpush.msra.mxu0 0.0
    %v2279 = vand.u32 %v985, 4294901760
    %v2280 = vsub.f32 %v985, %v2279
    %2281 = vmatpush.msra.mxu0 %v2280
    %v2282 = vand.u32 %v95, 4294901760
    %v2283 = vsub.f32 %v95, %v2282
    %2284 = vmatpush.msra.mxu0 %v2283
    %v2285 = vand.u32 %v2205, 4294901760
    %v2286 = vsub.f32 %v2205, %v2285
    %2287 = vmatmul.f32.gmra.mxu0 %v2286
    %v2288 = vpop.f32.mrf.mxu0
    %v2289 = vadd.f32 %v2263, %v2288
    %2290 = vdwg.mxu0
    %2291 = vmatpush.msra.mxu0 0.0
    %2292 = vmatpush.msra.mxu0 0.0
    %2293 = vmatpush.msra.mxu0 0.0
    %2294 = vmatpush.msra.mxu0 0.0
    %2295 = vmatpush.msra.mxu0 0.0
    %2296 = vmatpush.msra.mxu0 0.0
    %2297 = vmatpush.msra.mxu0 0.0
    %2298 = vmatpush.msra.mxu0 0.0
    %2299 = vmatpush.msra.mxu0 0.0
    %2300 = vmatpush.msra.mxu0 0.0
    %2301 = vmatpush.msra.mxu0 0.0
    %2302 = vmatpush.msra.mxu0 0.0
    %2303 = vmatpush.msra.mxu0 0.0
    %2304 = vmatpush.msra.mxu0 0.0
    %v2305 = vand.u32 %v985, 4294901760
    %2306 = vmatpush.msra.mxu0 %v2305
    %v2307 = vand.u32 %v95, 4294901760
    %2308 = vmatpush.msra.mxu0 %v2307
    %v2309 = vand.u32 %v2205, 4294901760
    %v2310 = vsub.f32 %v2205, %v2309
    %v2311 = vand.u32 %v2310, 4294901760
    %2312 = vmatmul.f32.gmra.mxu0 %v2311
    %v2313 = vpop.f32.mrf.mxu0
    %v2314 = vadd.f32 %v2289, %v2313
    %2315 = vdwg.mxu0
    %2316 = vmatpush.msra.mxu0 0.0
    %2317 = vmatpush.msra.mxu0 0.0
    %2318 = vmatpush.msra.mxu0 0.0
    %2319 = vmatpush.msra.mxu0 0.0
    %2320 = vmatpush.msra.mxu0 0.0
    %2321 = vmatpush.msra.mxu0 0.0
    %2322 = vmatpush.msra.mxu0 0.0
    %2323 = vmatpush.msra.mxu0 0.0
    %2324 = vmatpush.msra.mxu0 0.0
    %2325 = vmatpush.msra.mxu0 0.0
    %2326 = vmatpush.msra.mxu0 0.0
    %2327 = vmatpush.msra.mxu0 0.0
    %2328 = vmatpush.msra.mxu0 0.0
    %2329 = vmatpush.msra.mxu0 0.0
    %v2330 = vand.u32 %v985, 4294901760
    %v2331 = vsub.f32 %v985, %v2330
    %v2332 = vand.u32 %v2331, 4294901760
    %2333 = vmatpush.msra.mxu0 %v2332
    %v2334 = vand.u32 %v95, 4294901760
    %v2335 = vsub.f32 %v95, %v2334
    %v2336 = vand.u32 %v2335, 4294901760
    %2337 = vmatpush.msra.mxu0 %v2336
    %v2338 = vand.u32 %v2205, 4294901760
    %2339 = vmatmul.f32.gmra.mxu0 %v2338
    %v2340 = vpop.f32.mrf.mxu0
    %v2341 = vadd.f32 %v2314, %v2340
    %2342 = vdwg.mxu0
    %2343 = vmatpush.msra.mxu0 0.0
    %2344 = vmatpush.msra.mxu0 0.0
    %2345 = vmatpush.msra.mxu0 0.0
    %2346 = vmatpush.msra.mxu0 0.0
    %2347 = vmatpush.msra.mxu0 0.0
    %2348 = vmatpush.msra.mxu0 0.0
    %2349 = vmatpush.msra.mxu0 0.0
    %2350 = vmatpush.msra.mxu0 0.0
    %2351 = vmatpush.msra.mxu0 0.0
    %2352 = vmatpush.msra.mxu0 0.0
    %2353 = vmatpush.msra.mxu0 0.0
    %2354 = vmatpush.msra.mxu0 0.0
    %2355 = vmatpush.msra.mxu0 0.0
    %2356 = vmatpush.msra.mxu0 0.0
    %v2357 = vand.u32 %v985, 4294901760
    %2358 = vmatpush.msra.mxu0 %v2357
    %v2359 = vand.u32 %v95, 4294901760
    %2360 = vmatpush.msra.mxu0 %v2359
    %v2361 = vand.u32 %v2205, 4294901760
    %2362 = vmatmul.f32.gmra.mxu0 %v2361
    %v2363 = vpop.f32.mrf.mxu0
    %v2364 = vadd.f32 %v2341, %v2363
    %2365 = vdwg.mxu0
    %v2366 = vadd.f32 %v2364, %v101
    %v2367 = vxor.u32 %v2366, 2147483648
    %v2368 = vmul.f32 %v2367, 1.442695
    %v2369 = vpow.pop %v2368
    %v2370 = vadd.f32 %v2369, 1.0
    %v2371 = vrcp.pop %v2370
    %v2372 = vmul.f32 %v2370, %v2371
    %v2373 = vsub.f32 1.0, %v2372
    %v2374 = vmul.f32 %v2371, %v2373
    %v2375 = vadd.f32 %v2371, %v2374
    %vm2376 = vweird.f32 %v2370
    %vm2377 = vweird.f32 %v2371
    %vm2378 = vmor %vm2376, %vm2377
    %v2379 = vsel %vm2378, %v2371, %v2375
    %v2380 = vand.u32 2147483647, %v2370
    %vm2381 = vcmp.eq.f32.partialorder %v2380, 8.507059e+37
    %v2382 = vand.u32 %v2370, 2147483648
    %v2383 = vor.u32 1.1754944e-38, %v2382
    %v2384 = vsel %vm2381, %v2383, %v2379
    %v2385 = vmul.f32 1.0, %v2384
    %v2386 = vtanh.pop %v2366
    %v2387 = vmul.f32 %v2385, %v1812
    %2389 = vrot.lane.b32.xlu0 %v2386, 108
    %v2390 = vpop.permute.xlu0 %2389
    %v2392 = vmul.f32 %v2385, %v2390
    %2394 = vrot.lane.b32.xlu0 %v2392, 10
    %v2395 = vpop.permute.xlu0 %2394
    %v2397 = vadd.f32 %v2387, %v2395
    %v2398 = vtanh.pop %v2397
    %2400 = vrot.lane.b32.xlu0 %v2398, 20
    %v2401 = vpop.permute.xlu0 %2400
    %v2403 = vmul.f32 %v2385, %v2401
    %v2404 = vsel %vm1416, %v2403, 0.0
    %v2406 = vrot.slane %v2404, 1
    %v2407 = vperm.slane %v2404, 0
    %v2408 = vperm.slane %v2406, 0
    %2409 = vrot.lane.b32.xlu0 %v2407, 98
    %v2410 = vpop.permute.xlu0 %2409
    %2411 = vrot.lane.b32.xlu0 %v2408, 98
    %v2412 = vpop.permute.xlu0 %2411
    %2415 = vst.msk [vmem:[#allocation9 + $0x2] sm:$0x1] %vm1199, %v2410
    %2416 = vst.msk [vmem:[#allocation9 + $0xa] sm:$0x1] %vm1199, %v2412
    %v2417 = vsel %vm1416, %v2403, %v1811
    %v2418 = vsel %vm1416, %v2397, %v1812
    %vm2419 = vcmp.gt.s32.totalorder %v92, 4
    %v2421 = vsel %vm361, %v2029, 0
    %2423 = vmatpush.msra.mxu0 0.0
    %2424 = vmatpush.msra.mxu0 0.0
    %2425 = vmatpush.msra.mxu0 0.0
    %2426 = vmatpush.msra.mxu0 0.0
    %2427 = vmatpush.msra.mxu0 0.0
    %2428 = vmatpush.msra.mxu0 0.0
    %2429 = vmatpush.msra.mxu0 0.0
    %2430 = vmatpush.msra.mxu0 0.0
    %2431 = vmatpush.msra.mxu0 0.0
    %2432 = vmatpush.msra.mxu0 0.0
    %2433 = vmatpush.msra.mxu0 0.0
    %2434 = vmatpush.msra.mxu0 0.0
    %2435 = vmatpush.msra.mxu0 0.0
    %2436 = vmatpush.msra.mxu0 0.0
    %v2437 = vand.u32 %v367, 4294901760
    %2438 = vmatpush.msra.mxu0 %v2437
    %v2439 = vand.u32 %v93, 4294901760
    %2440 = vmatpush.msra.mxu0 %v2439
    %v2441 = vand.u32 %v2421, 4294901760
    %v2442 = vsub.f32 %v2421, %v2441
    %v2443 = vand.u32 %v2442, 4294901760
    %v2444 = vsub.f32 %v2442, %v2443
    %v2445 = vand.u32 %v2444, 4294901760
    %2446 = vmatmul.f32.gmra.mxu0 %v2445
    %v2447 = vpop.f32.mrf.mxu0
    %v2448 = vadd.f32 0.0, %v2447
    %2449 = vdwg.mxu0
    %2450 = vmatpush.msra.mxu0 0.0
    %2451 = vmatpush.msra.mxu0 0.0
    %2452 = vmatpush.msra.mxu0 0.0
    %2453 = vmatpush.msra.mxu0 0.0
    %2454 = vmatpush.msra.mxu0 0.0
    %2455 = vmatpush.msra.mxu0 0.0
    %2456 = vmatpush.msra.mxu0 0.0
    %2457 = vmatpush.msra.mxu0 0.0
    %2458 = vmatpush.msra.mxu0 0.0
    %2459 = vmatpush.msra.mxu0 0.0
    %2460 = vmatpush.msra.mxu0 0.0
    %2461 = vmatpush.msra.mxu0 0.0
    %2462 = vmatpush.msra.mxu0 0.0
    %2463 = vmatpush.msra.mxu0 0.0
    %v2464 = vand.u32 %v367, 4294901760
    %v2465 = vsub.f32 %v367, %v2464
    %v2466 = vand.u32 %v2465, 4294901760
    %v2467 = vsub.f32 %v2465, %v2466
    %v2468 = vand.u32 %v2467, 4294901760
    %2469 = vmatpush.msra.mxu0 %v2468
    %v2470 = vand.u32 %v93, 4294901760
    %v2471 = vsub.f32 %v93, %v2470
    %v2472 = vand.u32 %v2471, 4294901760
    %v2473 = vsub.f32 %v2471, %v2472
    %v2474 = vand.u32 %v2473, 4294901760
    %2475 = vmatpush.msra.mxu0 %v2474
    %v2476 = vand.u32 %v2421, 4294901760
    %2477 = vmatmul.f32.gmra.mxu0 %v2476
    %v2478 = vpop.f32.mrf.mxu0
    %v2479 = vadd.f32 %v2448, %v2478
    %2480 = vdwg.mxu0
    %2481 = vmatpush.msra.mxu0 0.0
    %2482 = vmatpush.msra.mxu0 0.0
    %2483 = vmatpush.msra.mxu0 0.0
    %2484 = vmatpush.msra.mxu0 0.0
    %2485 = vmatpush.msra.mxu0 0.0
    %2486 = vmatpush.msra.mxu0 0.0
    %2487 = vmatpush.msra.mxu0 0.0
    %2488 = vmatpush.msra.mxu0 0.0
    %2489 = vmatpush.msra.mxu0 0.0
    %2490 = vmatpush.msra.mxu0 0.0
    %2491 = vmatpush.msra.mxu0 0.0
    %2492 = vmatpush.msra.mxu0 0.0
    %2493 = vmatpush.msra.mxu0 0.0
    %2494 = vmatpush.msra.mxu0 0.0
    %v2495 = vand.u32 %v367, 4294901760
    %v2496 = vsub.f32 %v367, %v2495
    %2497 = vmatpush.msra.mxu0 %v2496
    %v2498 = vand.u32 %v93, 4294901760
    %v2499 = vsub.f32 %v93, %v2498
    %2500 = vmatpush.msra.mxu0 %v2499
    %v2501 = vand.u32 %v2421, 4294901760
    %v2502 = vsub.f32 %v2421, %v2501
    %2503 = vmatmul.f32.gmra.mxu0 %v2502
    %v2504 = vpop.f32.mrf.mxu0
    %v2505 = vadd.f32 %v2479, %v2504
    %2506 = vdwg.mxu0
    %2507 = vmatpush.msra.mxu0 0.0
    %2508 = vmatpush.msra.mxu0 0.0
    %2509 = vmatpush.msra.mxu0 0.0
    %2510 = vmatpush.msra.mxu0 0.0
    %2511 = vmatpush.msra.mxu0 0.0
    %2512 = vmatpush.msra.mxu0 0.0
    %2513 = vmatpush.msra.mxu0 0.0
    %2514 = vmatpush.msra.mxu0 0.0
    %2515 = vmatpush.msra.mxu0 0.0
    %2516 = vmatpush.msra.mxu0 0.0
    %2517 = vmatpush.msra.mxu0 0.0
    %2518 = vmatpush.msra.mxu0 0.0
    %2519 = vmatpush.msra.mxu0 0.0
    %2520 = vmatpush.msra.mxu0 0.0
    %v2521 = vand.u32 %v367, 4294901760
    %2522 = vmatpush.msra.mxu0 %v2521
    %v2523 = vand.u32 %v93, 4294901760
    %2524 = vmatpush.msra.mxu0 %v2523
    %v2525 = vand.u32 %v2421, 4294901760
    %v2526 = vsub.f32 %v2421, %v2525
    %v2527 = vand.u32 %v2526, 4294901760
    %2528 = vmatmul.f32.gmra.mxu0 %v2527
    %v2529 = vpop.f32.mrf.mxu0
    %v2530 = vadd.f32 %v2505, %v2529
    %2531 = vdwg.mxu0
    %2532 = vmatpush.msra.mxu0 0.0
    %2533 = vmatpush.msra.mxu0 0.0
    %2534 = vmatpush.msra.mxu0 0.0
    %2535 = vmatpush.msra.mxu0 0.0
    %2536 = vmatpush.msra.mxu0 0.0
    %2537 = vmatpush.msra.mxu0 0.0
    %2538 = vmatpush.msra.mxu0 0.0
    %2539 = vmatpush.msra.mxu0 0.0
    %2540 = vmatpush.msra.mxu0 0.0
    %2541 = vmatpush.msra.mxu0 0.0
    %2542 = vmatpush.msra.mxu0 0.0
    %2543 = vmatpush.msra.mxu0 0.0
    %2544 = vmatpush.msra.mxu0 0.0
    %2545 = vmatpush.msra.mxu0 0.0
    %v2546 = vand.u32 %v367, 4294901760
    %v2547 = vsub.f32 %v367, %v2546
    %v2548 = vand.u32 %v2547, 4294901760
    %2549 = vmatpush.msra.mxu0 %v2548
    %v2550 = vand.u32 %v93, 4294901760
    %v2551 = vsub.f32 %v93, %v2550
    %v2552 = vand.u32 %v2551, 4294901760
    %2553 = vmatpush.msra.mxu0 %v2552
    %v2554 = vand.u32 %v2421, 4294901760
    %2555 = vmatmul.f32.gmra.mxu0 %v2554
    %v2556 = vpop.f32.mrf.mxu0
    %v2557 = vadd.f32 %v2530, %v2556
    %2558 = vdwg.mxu0
    %2559 = vmatpush.msra.mxu0 0.0
    %2560 = vmatpush.msra.mxu0 0.0
    %2561 = vmatpush.msra.mxu0 0.0
    %2562 = vmatpush.msra.mxu0 0.0
    %2563 = vmatpush.msra.mxu0 0.0
    %2564 = vmatpush.msra.mxu0 0.0
    %2565 = vmatpush.msra.mxu0 0.0
    %2566 = vmatpush.msra.mxu0 0.0
    %2567 = vmatpush.msra.mxu0 0.0
    %2568 = vmatpush.msra.mxu0 0.0
    %2569 = vmatpush.msra.mxu0 0.0
    %2570 = vmatpush.msra.mxu0 0.0
    %2571 = vmatpush.msra.mxu0 0.0
    %2572 = vmatpush.msra.mxu0 0.0
    %v2573 = vand.u32 %v367, 4294901760
    %2574 = vmatpush.msra.mxu0 %v2573
    %v2575 = vand.u32 %v93, 4294901760
    %2576 = vmatpush.msra.mxu0 %v2575
    %v2577 = vand.u32 %v2421, 4294901760
    %2578 = vmatmul.f32.gmra.mxu0 %v2577
    %v2579 = vpop.f32.mrf.mxu0
    %v2580 = vadd.f32 %v2557, %v2579
    %2581 = vdwg.mxu0
    %v2582 = vadd.f32 %v338, %v2580
    %v2583 = vxor.u32 %v2582, 2147483648
    %v2584 = vmul.f32 %v2583, 1.442695
    %v2585 = vpow.pop %v2584
    %v2586 = vadd.f32 %v2585, 1.0
    %v2587 = vrcp.pop %v2586
    %v2588 = vmul.f32 %v2586, %v2587
    %v2589 = vsub.f32 1.0, %v2588
    %v2590 = vmul.f32 %v2587, %v2589
    %v2591 = vadd.f32 %v2587, %v2590
    %vm2592 = vweird.f32 %v2586
    %vm2593 = vweird.f32 %v2587
    %vm2594 = vmor %vm2592, %vm2593
    %v2595 = vsel %vm2594, %v2587, %v2591
    %v2596 = vand.u32 2147483647, %v2586
    %vm2597 = vcmp.eq.f32.partialorder %v2596, 8.507059e+37
    %v2598 = vand.u32 %v2586, 2147483648
    %v2599 = vor.u32 1.1754944e-38, %v2598
    %v2600 = vsel %vm2597, %v2599, %v2595
    %v2601 = vmul.f32 1.0, %v2600
    %v2602 = vtanh.pop %v2582
    %2604 = vrot.lane.b32.xlu0 %v2036, 10
    %v2605 = vpop.permute.xlu0 %2604
    %v2607 = vmul.f32 %v2601, %v2605
    %2609 = vrot.lane.b32.xlu0 %v2602, 108
    %v2610 = vpop.permute.xlu0 %2609
    %v2612 = vmul.f32 %v2601, %v2610
    %2614 = vrot.lane.b32.xlu0 %v2612, 10
    %v2615 = vpop.permute.xlu0 %2614
    %v2617 = vadd.f32 %v2607, %v2615
    %v2618 = vtanh.pop %v2617
    %2620 = vrot.lane.b32.xlu0 %v2618, 20
    %v2621 = vpop.permute.xlu0 %2620
    %v2623 = vmul.f32 %v2601, %v2621
    %v2624 = vsel %vm2419, 1, 0
    %2625 = vset.pattern.permute.xlu0 0
    %2626 = vperm.xlu0 %2625, %v2624
    %v2627 = vpop.permute.xlu0 %2626
    %vm2628 = vcmp.eq.s32.totalorder %v2627, 1
    %2630 = vst [vmem:[#allocation1] ss:$4 sm:$0xff] %v2623
    %v2631 = vld.sshfl [vmem:[#allocation1] sm:$0xff pattern:$0x73625140]
    %2632 = vrot.lane.b32.xlu0 %v2631, 98
    %v2633 = vpop.permute.xlu0 %2632
    %v2635 = vsel %vm2628, %v2633, %v2029
    %2637 = vst [vmem:[#allocation1] ss:$4 sm:$0xff] %v2617
    %v2638 = vld.sshfl [vmem:[#allocation1] sm:$0xff pattern:$0x73625140]
    %2639 = vrot.lane.b32.xlu0 %v2638, 118
    %v2640 = vpop.permute.xlu0 %2639
    %v2642 = vsel %vm2628, %v2640, %v2036
    %2644 = vrot.lane.b32.xlu0 %v2417, 98
    %v2645 = vpop.permute.xlu0 %2644
    %v2646 = vsel %vm361, %v2645, 0
    %2648 = vmatpush.msra.mxu0 0.0
    %2649 = vmatpush.msra.mxu0 0.0
    %2650 = vmatpush.msra.mxu0 0.0
    %2651 = vmatpush.msra.mxu0 0.0
    %2652 = vmatpush.msra.mxu0 0.0
    %2653 = vmatpush.msra.mxu0 0.0
    %2654 = vmatpush.msra.mxu0 0.0
    %2655 = vmatpush.msra.mxu0 0.0
    %2656 = vmatpush.msra.mxu0 0.0
    %2657 = vmatpush.msra.mxu0 0.0
    %2658 = vmatpush.msra.mxu0 0.0
    %2659 = vmatpush.msra.mxu0 0.0
    %2660 = vmatpush.msra.mxu0 0.0
    %2661 = vmatpush.msra.mxu0 0.0
    %v2662 = vand.u32 %v817, 4294901760
    %2663 = vmatpush.msra.mxu0 %v2662
    %v2664 = vand.u32 %v97, 4294901760
    %2665 = vmatpush.msra.mxu0 %v2664
    %v2666 = vand.u32 %v2646, 4294901760
    %v2667 = vsub.f32 %v2646, %v2666
    %v2668 = vand.u32 %v2667, 4294901760
    %v2669 = vsub.f32 %v2667, %v2668
    %v2670 = vand.u32 %v2669, 4294901760
    %2671 = vmatmul.f32.gmra.mxu0 %v2670
    %v2672 = vpop.f32.mrf.mxu0
    %v2673 = vadd.f32 0.0, %v2672
    %2674 = vdwg.mxu0
    %2675 = vmatpush.msra.mxu0 0.0
    %2676 = vmatpush.msra.mxu0 0.0
    %2677 = vmatpush.msra.mxu0 0.0
    %2678 = vmatpush.msra.mxu0 0.0
    %2679 = vmatpush.msra.mxu0 0.0
    %2680 = vmatpush.msra.mxu0 0.0
    %2681 = vmatpush.msra.mxu0 0.0
    %2682 = vmatpush.msra.mxu0 0.0
    %2683 = vmatpush.msra.mxu0 0.0
    %2684 = vmatpush.msra.mxu0 0.0
    %2685 = vmatpush.msra.mxu0 0.0
    %2686 = vmatpush.msra.mxu0 0.0
    %2687 = vmatpush.msra.mxu0 0.0
    %2688 = vmatpush.msra.mxu0 0.0
    %v2689 = vand.u32 %v817, 4294901760
    %v2690 = vsub.f32 %v817, %v2689
    %v2691 = vand.u32 %v2690, 4294901760
    %v2692 = vsub.f32 %v2690, %v2691
    %v2693 = vand.u32 %v2692, 4294901760
    %2694 = vmatpush.msra.mxu0 %v2693
    %v2695 = vand.u32 %v97, 4294901760
    %v2696 = vsub.f32 %v97, %v2695
    %v2697 = vand.u32 %v2696, 4294901760
    %v2698 = vsub.f32 %v2696, %v2697
    %v2699 = vand.u32 %v2698, 4294901760
    %2700 = vmatpush.msra.mxu0 %v2699
    %v2701 = vand.u32 %v2646, 4294901760
    %2702 = vmatmul.f32.gmra.mxu0 %v2701
    %v2703 = vpop.f32.mrf.mxu0
    %v2704 = vadd.f32 %v2673, %v2703
    %2705 = vdwg.mxu0
    %2706 = vmatpush.msra.mxu0 0.0
    %2707 = vmatpush.msra.mxu0 0.0
    %2708 = vmatpush.msra.mxu0 0.0
    %2709 = vmatpush.msra.mxu0 0.0
    %2710 = vmatpush.msra.mxu0 0.0
    %2711 = vmatpush.msra.mxu0 0.0
    %2712 = vmatpush.msra.mxu0 0.0
    %2713 = vmatpush.msra.mxu0 0.0
    %2714 = vmatpush.msra.mxu0 0.0
    %2715 = vmatpush.msra.mxu0 0.0
    %2716 = vmatpush.msra.mxu0 0.0
    %2717 = vmatpush.msra.mxu0 0.0
    %2718 = vmatpush.msra.mxu0 0.0
    %2719 = vmatpush.msra.mxu0 0.0
    %v2720 = vand.u32 %v817, 4294901760
    %v2721 = vsub.f32 %v817, %v2720
    %2722 = vmatpush.msra.mxu0 %v2721
    %v2723 = vand.u32 %v97, 4294901760
    %v2724 = vsub.f32 %v97, %v2723
    %2725 = vmatpush.msra.mxu0 %v2724
    %v2726 = vand.u32 %v2646, 4294901760
    %v2727 = vsub.f32 %v2646, %v2726
    %2728 = vmatmul.f32.gmra.mxu0 %v2727
    %v2729 = vpop.f32.mrf.mxu0
    %v2730 = vadd.f32 %v2704, %v2729
    %2731 = vdwg.mxu0
    %2732 = vmatpush.msra.mxu0 0.0
    %2733 = vmatpush.msra.mxu0 0.0
    %2734 = vmatpush.msra.mxu0 0.0
    %2735 = vmatpush.msra.mxu0 0.0
    %2736 = vmatpush.msra.mxu0 0.0
    %2737 = vmatpush.msra.mxu0 0.0
    %2738 = vmatpush.msra.mxu0 0.0
    %2739 = vmatpush.msra.mxu0 0.0
    %2740 = vmatpush.msra.mxu0 0.0
    %2741 = vmatpush.msra.mxu0 0.0
    %2742 = vmatpush.msra.mxu0 0.0
    %2743 = vmatpush.msra.mxu0 0.0
    %2744 = vmatpush.msra.mxu0 0.0
    %2745 = vmatpush.msra.mxu0 0.0
    %v2746 = vand.u32 %v817, 4294901760
    %2747 = vmatpush.msra.mxu0 %v2746
    %v2748 = vand.u32 %v97, 4294901760
    %2749 = vmatpush.msra.mxu0 %v2748
    %v2750 = vand.u32 %v2646, 4294901760
    %v2751 = vsub.f32 %v2646, %v2750
    %v2752 = vand.u32 %v2751, 4294901760
    %2753 = vmatmul.f32.gmra.mxu0 %v2752
    %v2754 = vpop.f32.mrf.mxu0
    %v2755 = vadd.f32 %v2730, %v2754
    %2756 = vdwg.mxu0
    %2757 = vmatpush.msra.mxu0 0.0
    %2758 = vmatpush.msra.mxu0 0.0
    %2759 = vmatpush.msra.mxu0 0.0
    %2760 = vmatpush.msra.mxu0 0.0
    %2761 = vmatpush.msra.mxu0 0.0
    %2762 = vmatpush.msra.mxu0 0.0
    %2763 = vmatpush.msra.mxu0 0.0
    %2764 = vmatpush.msra.mxu0 0.0
    %2765 = vmatpush.msra.mxu0 0.0
    %2766 = vmatpush.msra.mxu0 0.0
    %2767 = vmatpush.msra.mxu0 0.0
    %2768 = vmatpush.msra.mxu0 0.0
    %2769 = vmatpush.msra.mxu0 0.0
    %2770 = vmatpush.msra.mxu0 0.0
    %v2771 = vand.u32 %v817, 4294901760
    %v2772 = vsub.f32 %v817, %v2771
    %v2773 = vand.u32 %v2772, 4294901760
    %2774 = vmatpush.msra.mxu0 %v2773
    %v2775 = vand.u32 %v97, 4294901760
    %v2776 = vsub.f32 %v97, %v2775
    %v2777 = vand.u32 %v2776, 4294901760
    %2778 = vmatpush.msra.mxu0 %v2777
    %v2779 = vand.u32 %v2646, 4294901760
    %2780 = vmatmul.f32.gmra.mxu0 %v2779
    %v2781 = vpop.f32.mrf.mxu0
    %v2782 = vadd.f32 %v2755, %v2781
    %2783 = vdwg.mxu0
    %2784 = vmatpush.msra.mxu0 0.0
    %2785 = vmatpush.msra.mxu0 0.0
    %2786 = vmatpush.msra.mxu0 0.0
    %2787 = vmatpush.msra.mxu0 0.0
    %2788 = vmatpush.msra.mxu0 0.0
    %2789 = vmatpush.msra.mxu0 0.0
    %2790 = vmatpush.msra.mxu0 0.0
    %2791 = vmatpush.msra.mxu0 0.0
    %2792 = vmatpush.msra.mxu0 0.0
    %2793 = vmatpush.msra.mxu0 0.0
    %2794 = vmatpush.msra.mxu0 0.0
    %2795 = vmatpush.msra.mxu0 0.0
    %2796 = vmatpush.msra.mxu0 0.0
    %2797 = vmatpush.msra.mxu0 0.0
    %v2798 = vand.u32 %v817, 4294901760
    %2799 = vmatpush.msra.mxu0 %v2798
    %v2800 = vand.u32 %v97, 4294901760
    %2801 = vmatpush.msra.mxu0 %v2800
    %v2802 = vand.u32 %v2646, 4294901760
    %2803 = vmatmul.f32.gmra.mxu0 %v2802
    %v2804 = vpop.f32.mrf.mxu0
    %v2805 = vadd.f32 %v2782, %v2804
    %2806 = vdwg.mxu0
    %2807 = vst [vmem:[#allocation1] ss:$4 sm:$0xff] %v2017
    %v2808 = vld.sshfl [vmem:[#allocation1] sm:$0xff pattern:$0x73625140]
    %2809 = vrot.lane.b32.xlu0 %v2808, 98
    %v2810 = vpop.permute.xlu0 %2809
    %v2811 = vsel %vm361, %v2810, 0
    %2813 = vmatpush.msra.mxu0 0.0
    %2814 = vmatpush.msra.mxu0 0.0
    %2815 = vmatpush.msra.mxu0 0.0
    %2816 = vmatpush.msra.mxu0 0.0
    %2817 = vmatpush.msra.mxu0 0.0
    %2818 = vmatpush.msra.mxu0 0.0
    %2819 = vmatpush.msra.mxu0 0.0
    %2820 = vmatpush.msra.mxu0 0.0
    %2821 = vmatpush.msra.mxu0 0.0
    %2822 = vmatpush.msra.mxu0 0.0
    %2823 = vmatpush.msra.mxu0 0.0
    %2824 = vmatpush.msra.mxu0 0.0
    %2825 = vmatpush.msra.mxu0 0.0
    %2826 = vmatpush.msra.mxu0 0.0
    %v2827 = vand.u32 %v985, 4294901760
    %2828 = vmatpush.msra.mxu0 %v2827
    %v2829 = vand.u32 %v95, 4294901760
    %2830 = vmatpush.msra.mxu0 %v2829
    %v2831 = vand.u32 %v2811, 4294901760
    %v2832 = vsub.f32 %v2811, %v2831
    %v2833 = vand.u32 %v2832, 4294901760
    %v2834 = vsub.f32 %v2832, %v2833
    %v2835 = vand.u32 %v2834, 4294901760
    %2836 = vmatmul.f32.gmra.mxu0 %v2835
    %v2837 = vpop.f32.mrf.mxu0
    %v2838 = vadd.f32 %v2805, %v2837
    %2839 = vdwg.mxu0
    %2840 = vmatpush.msra.mxu0 0.0
    %2841 = vmatpush.msra.mxu0 0.0
    %2842 = vmatpush.msra.mxu0 0.0
    %2843 = vmatpush.msra.mxu0 0.0
    %2844 = vmatpush.msra.mxu0 0.0
    %2845 = vmatpush.msra.mxu0 0.0
    %2846 = vmatpush.msra.mxu0 0.0
    %2847 = vmatpush.msra.mxu0 0.0
    %2848 = vmatpush.msra.mxu0 0.0
    %2849 = vmatpush.msra.mxu0 0.0
    %2850 = vmatpush.msra.mxu0 0.0
    %2851 = vmatpush.msra.mxu0 0.0
    %2852 = vmatpush.msra.mxu0 0.0
    %2853 = vmatpush.msra.mxu0 0.0
    %v2854 = vand.u32 %v985, 4294901760
    %v2855 = vsub.f32 %v985, %v2854
    %v2856 = vand.u32 %v2855, 4294901760
    %v2857 = vsub.f32 %v2855, %v2856
    %v2858 = vand.u32 %v2857, 4294901760
    %2859 = vmatpush.msra.mxu0 %v2858
    %v2860 = vand.u32 %v95, 4294901760
    %v2861 = vsub.f32 %v95, %v2860
    %v2862 = vand.u32 %v2861, 4294901760
    %v2863 = vsub.f32 %v2861, %v2862
    %v2864 = vand.u32 %v2863, 4294901760
    %2865 = vmatpush.msra.mxu0 %v2864
    %v2866 = vand.u32 %v2811, 4294901760
    %2867 = vmatmul.f32.gmra.mxu0 %v2866
    %v2868 = vpop.f32.mrf.mxu0
    %v2869 = vadd.f32 %v2838, %v2868
    %2870 = vdwg.mxu0
    %2871 = vmatpush.msra.mxu0 0.0
    %2872 = vmatpush.msra.mxu0 0.0
    %2873 = vmatpush.msra.mxu0 0.0
    %2874 = vmatpush.msra.mxu0 0.0
    %2875 = vmatpush.msra.mxu0 0.0
    %2876 = vmatpush.msra.mxu0 0.0
    %2877 = vmatpush.msra.mxu0 0.0
    %2878 = vmatpush.msra.mxu0 0.0
    %2879 = vmatpush.msra.mxu0 0.0
    %2880 = vmatpush.msra.mxu0 0.0
    %2881 = vmatpush.msra.mxu0 0.0
    %2882 = vmatpush.msra.mxu0 0.0
    %2883 = vmatpush.msra.mxu0 0.0
    %2884 = vmatpush.msra.mxu0 0.0
    %v2885 = vand.u32 %v985, 4294901760
    %v2886 = vsub.f32 %v985, %v2885
    %2887 = vmatpush.msra.mxu0 %v2886
    %v2888 = vand.u32 %v95, 4294901760
    %v2889 = vsub.f32 %v95, %v2888
    %2890 = vmatpush.msra.mxu0 %v2889
    %v2891 = vand.u32 %v2811, 4294901760
    %v2892 = vsub.f32 %v2811, %v2891
    %2893 = vmatmul.f32.gmra.mxu0 %v2892
    %v2894 = vpop.f32.mrf.mxu0
    %v2895 = vadd.f32 %v2869, %v2894
    %2896 = vdwg.mxu0
    %2897 = vmatpush.msra.mxu0 0.0
    %2898 = vmatpush.msra.mxu0 0.0
    %2899 = vmatpush.msra.mxu0 0.0
    %2900 = vmatpush.msra.mxu0 0.0
    %2901 = vmatpush.msra.mxu0 0.0
    %2902 = vmatpush.msra.mxu0 0.0
    %2903 = vmatpush.msra.mxu0 0.0
    %2904 = vmatpush.msra.mxu0 0.0
    %2905 = vmatpush.msra.mxu0 0.0
    %2906 = vmatpush.msra.mxu0 0.0
    %2907 = vmatpush.msra.mxu0 0.0
    %2908 = vmatpush.msra.mxu0 0.0
    %2909 = vmatpush.msra.mxu0 0.0
    %2910 = vmatpush.msra.mxu0 0.0
    %v2911 = vand.u32 %v985, 4294901760
    %2912 = vmatpush.msra.mxu0 %v2911
    %v2913 = vand.u32 %v95, 4294901760
    %2914 = vmatpush.msra.mxu0 %v2913
    %v2915 = vand.u32 %v2811, 4294901760
    %v2916 = vsub.f32 %v2811, %v2915
    %v2917 = vand.u32 %v2916, 4294901760
    %2918 = vmatmul.f32.gmra.mxu0 %v2917
    %v2919 = vpop.f32.mrf.mxu0
    %v2920 = vadd.f32 %v2895, %v2919
    %2921 = vdwg.mxu0
    %2922 = vmatpush.msra.mxu0 0.0
    %2923 = vmatpush.msra.mxu0 0.0
    %2924 = vmatpush.msra.mxu0 0.0
    %2925 = vmatpush.msra.mxu0 0.0
    %2926 = vmatpush.msra.mxu0 0.0
    %2927 = vmatpush.msra.mxu0 0.0
    %2928 = vmatpush.msra.mxu0 0.0
    %2929 = vmatpush.msra.mxu0 0.0
    %2930 = vmatpush.msra.mxu0 0.0
    %2931 = vmatpush.msra.mxu0 0.0
    %2932 = vmatpush.msra.mxu0 0.0
    %2933 = vmatpush.msra.mxu0 0.0
    %2934 = vmatpush.msra.mxu0 0.0
    %2935 = vmatpush.msra.mxu0 0.0
    %v2936 = vand.u32 %v985, 4294901760
    %v2937 = vsub.f32 %v985, %v2936
    %v2938 = vand.u32 %v2937, 4294901760
    %2939 = vmatpush.msra.mxu0 %v2938
    %v2940 = vand.u32 %v95, 4294901760
    %v2941 = vsub.f32 %v95, %v2940
    %v2942 = vand.u32 %v2941, 4294901760
    %2943 = vmatpush.msra.mxu0 %v2942
    %v2944 = vand.u32 %v2811, 4294901760
    %2945 = vmatmul.f32.gmra.mxu0 %v2944
    %v2946 = vpop.f32.mrf.mxu0
    %v2947 = vadd.f32 %v2920, %v2946
    %2948 = vdwg.mxu0
    %2949 = vmatpush.msra.mxu0 0.0
    %2950 = vmatpush.msra.mxu0 0.0
    %2951 = vmatpush.msra.mxu0 0.0
    %2952 = vmatpush.msra.mxu0 0.0
    %2953 = vmatpush.msra.mxu0 0.0
    %2954 = vmatpush.msra.mxu0 0.0
    %2955 = vmatpush.msra.mxu0 0.0
    %2956 = vmatpush.msra.mxu0 0.0
    %2957 = vmatpush.msra.mxu0 0.0
    %2958 = vmatpush.msra.mxu0 0.0
    %2959 = vmatpush.msra.mxu0 0.0
    %2960 = vmatpush.msra.mxu0 0.0
    %2961 = vmatpush.msra.mxu0 0.0
    %2962 = vmatpush.msra.mxu0 0.0
    %v2963 = vand.u32 %v985, 4294901760
    %2964 = vmatpush.msra.mxu0 %v2963
    %v2965 = vand.u32 %v95, 4294901760
    %2966 = vmatpush.msra.mxu0 %v2965
    %v2967 = vand.u32 %v2811, 4294901760
    %2968 = vmatmul.f32.gmra.mxu0 %v2967
    %v2969 = vpop.f32.mrf.mxu0
    %v2970 = vadd.f32 %v2947, %v2969
    %2971 = vdwg.mxu0
    %v2972 = vadd.f32 %v2970, %v101
    %v2973 = vxor.u32 %v2972, 2147483648
    %v2974 = vmul.f32 %v2973, 1.442695
    %v2975 = vpow.pop %v2974
    %v2976 = vadd.f32 %v2975, 1.0
    %v2977 = vrcp.pop %v2976
    %v2978 = vmul.f32 %v2976, %v2977
    %v2979 = vsub.f32 1.0, %v2978
    %v2980 = vmul.f32 %v2977, %v2979
    %v2981 = vadd.f32 %v2977, %v2980
    %vm2982 = vweird.f32 %v2976
    %vm2983 = vweird.f32 %v2977
    %vm2984 = vmor %vm2982, %vm2983
    %v2985 = vsel %vm2984, %v2977, %v2981
    %v2986 = vand.u32 2147483647, %v2976
    %vm2987 = vcmp.eq.f32.partialorder %v2986, 8.507059e+37
    %v2988 = vand.u32 %v2976, 2147483648
    %v2989 = vor.u32 1.1754944e-38, %v2988
    %v2990 = vsel %vm2987, %v2989, %v2985
    %v2991 = vmul.f32 1.0, %v2990
    %v2992 = vtanh.pop %v2972
    %v2993 = vmul.f32 %v2991, %v2418
    %2995 = vrot.lane.b32.xlu0 %v2992, 108
    %v2996 = vpop.permute.xlu0 %2995
    %v2998 = vmul.f32 %v2991, %v2996
    %3000 = vrot.lane.b32.xlu0 %v2998, 10
    %v3001 = vpop.permute.xlu0 %3000
    %v3003 = vadd.f32 %v2993, %v3001
    %v3004 = vtanh.pop %v3003
    %3006 = vrot.lane.b32.xlu0 %v3004, 20
    %v3007 = vpop.permute.xlu0 %3006
    %v3009 = vmul.f32 %v2991, %v3007
    %v3010 = vsel %vm2022, %v3009, 0.0
    %v3012 = vrot.slane %v3010, 1
    %v3013 = vperm.slane %v3010, 0
    %v3014 = vperm.slane %v3012, 0
    %3015 = vrot.lane.b32.xlu0 %v3013, 98
    %v3016 = vpop.permute.xlu0 %3015
    %3017 = vrot.lane.b32.xlu0 %v3014, 98
    %v3018 = vpop.permute.xlu0 %3017
    %3021 = vst.msk [vmem:[#allocation9 + $0x3] sm:$0x1] %vm1199, %v3016
    %3022 = vst.msk [vmem:[#allocation9 + $0xb] sm:$0x1] %vm1199, %v3018
    %v3023 = vsel %vm2022, %v3009, %v2417
    %v3024 = vsel %vm2022, %v3003, %v2418
    %vm3025 = vcmp.gt.s32.totalorder %v92, 5
    %v3027 = vsel %vm361, %v2635, 0
    %3029 = vmatpush.msra.mxu0 0.0
    %3030 = vmatpush.msra.mxu0 0.0
    %3031 = vmatpush.msra.mxu0 0.0
    %3032 = vmatpush.msra.mxu0 0.0
    %3033 = vmatpush.msra.mxu0 0.0
    %3034 = vmatpush.msra.mxu0 0.0
    %3035 = vmatpush.msra.mxu0 0.0
    %3036 = vmatpush.msra.mxu0 0.0
    %3037 = vmatpush.msra.mxu0 0.0
    %3038 = vmatpush.msra.mxu0 0.0
    %3039 = vmatpush.msra.mxu0 0.0
    %3040 = vmatpush.msra.mxu0 0.0
    %3041 = vmatpush.msra.mxu0 0.0
    %3042 = vmatpush.msra.mxu0 0.0
    %v3043 = vand.u32 %v367, 4294901760
    %3044 = vmatpush.msra.mxu0 %v3043
    %v3045 = vand.u32 %v93, 4294901760
    %3046 = vmatpush.msra.mxu0 %v3045
    %v3047 = vand.u32 %v3027, 4294901760
    %v3048 = vsub.f32 %v3027, %v3047
    %v3049 = vand.u32 %v3048, 4294901760
    %v3050 = vsub.f32 %v3048, %v3049
    %v3051 = vand.u32 %v3050, 4294901760
    %3052 = vmatmul.f32.gmra.mxu0 %v3051
    %v3053 = vpop.f32.mrf.mxu0
    %v3054 = vadd.f32 0.0, %v3053
    %3055 = vdwg.mxu0
    %3056 = vmatpush.msra.mxu0 0.0
    %3057 = vmatpush.msra.mxu0 0.0
    %3058 = vmatpush.msra.mxu0 0.0
    %3059 = vmatpush.msra.mxu0 0.0
    %3060 = vmatpush.msra.mxu0 0.0
    %3061 = vmatpush.msra.mxu0 0.0
    %3062 = vmatpush.msra.mxu0 0.0
    %3063 = vmatpush.msra.mxu0 0.0
    %3064 = vmatpush.msra.mxu0 0.0
    %3065 = vmatpush.msra.mxu0 0.0
    %3066 = vmatpush.msra.mxu0 0.0
    %3067 = vmatpush.msra.mxu0 0.0
    %3068 = vmatpush.msra.mxu0 0.0
    %3069 = vmatpush.msra.mxu0 0.0
    %v3070 = vand.u32 %v367, 4294901760
    %v3071 = vsub.f32 %v367, %v3070
    %v3072 = vand.u32 %v3071, 4294901760
    %v3073 = vsub.f32 %v3071, %v3072
    %v3074 = vand.u32 %v3073, 4294901760
    %3075 = vmatpush.msra.mxu0 %v3074
    %v3076 = vand.u32 %v93, 4294901760
    %v3077 = vsub.f32 %v93, %v3076
    %v3078 = vand.u32 %v3077, 4294901760
    %v3079 = vsub.f32 %v3077, %v3078
    %v3080 = vand.u32 %v3079, 4294901760
    %3081 = vmatpush.msra.mxu0 %v3080
    %v3082 = vand.u32 %v3027, 4294901760
    %3083 = vmatmul.f32.gmra.mxu0 %v3082
    %v3084 = vpop.f32.mrf.mxu0
    %v3085 = vadd.f32 %v3054, %v3084
    %3086 = vdwg.mxu0
    %3087 = vmatpush.msra.mxu0 0.0
    %3088 = vmatpush.msra.mxu0 0.0
    %3089 = vmatpush.msra.mxu0 0.0
    %3090 = vmatpush.msra.mxu0 0.0
    %3091 = vmatpush.msra.mxu0 0.0
    %3092 = vmatpush.msra.mxu0 0.0
    %3093 = vmatpush.msra.mxu0 0.0
    %3094 = vmatpush.msra.mxu0 0.0
    %3095 = vmatpush.msra.mxu0 0.0
    %3096 = vmatpush.msra.mxu0 0.0
    %3097 = vmatpush.msra.mxu0 0.0
    %3098 = vmatpush.msra.mxu0 0.0
    %3099 = vmatpush.msra.mxu0 0.0
    %3100 = vmatpush.msra.mxu0 0.0
    %v3101 = vand.u32 %v367, 4294901760
    %v3102 = vsub.f32 %v367, %v3101
    %3103 = vmatpush.msra.mxu0 %v3102
    %v3104 = vand.u32 %v93, 4294901760
    %v3105 = vsub.f32 %v93, %v3104
    %3106 = vmatpush.msra.mxu0 %v3105
    %v3107 = vand.u32 %v3027, 4294901760
    %v3108 = vsub.f32 %v3027, %v3107
    %3109 = vmatmul.f32.gmra.mxu0 %v3108
    %v3110 = vpop.f32.mrf.mxu0
    %v3111 = vadd.f32 %v3085, %v3110
    %3112 = vdwg.mxu0
    %3113 = vmatpush.msra.mxu0 0.0
    %3114 = vmatpush.msra.mxu0 0.0
    %3115 = vmatpush.msra.mxu0 0.0
    %3116 = vmatpush.msra.mxu0 0.0
    %3117 = vmatpush.msra.mxu0 0.0
    %3118 = vmatpush.msra.mxu0 0.0
    %3119 = vmatpush.msra.mxu0 0.0
    %3120 = vmatpush.msra.mxu0 0.0
    %3121 = vmatpush.msra.mxu0 0.0
    %3122 = vmatpush.msra.mxu0 0.0
    %3123 = vmatpush.msra.mxu0 0.0
    %3124 = vmatpush.msra.mxu0 0.0
    %3125 = vmatpush.msra.mxu0 0.0
    %3126 = vmatpush.msra.mxu0 0.0
    %v3127 = vand.u32 %v367, 4294901760
    %3128 = vmatpush.msra.mxu0 %v3127
    %v3129 = vand.u32 %v93, 4294901760
    %3130 = vmatpush.msra.mxu0 %v3129
    %v3131 = vand.u32 %v3027, 4294901760
    %v3132 = vsub.f32 %v3027, %v3131
    %v3133 = vand.u32 %v3132, 4294901760
    %3134 = vmatmul.f32.gmra.mxu0 %v3133
    %v3135 = vpop.f32.mrf.mxu0
    %v3136 = vadd.f32 %v3111, %v3135
    %3137 = vdwg.mxu0
    %3138 = vmatpush.msra.mxu0 0.0
    %3139 = vmatpush.msra.mxu0 0.0
    %3140 = vmatpush.msra.mxu0 0.0
    %3141 = vmatpush.msra.mxu0 0.0
    %3142 = vmatpush.msra.mxu0 0.0
    %3143 = vmatpush.msra.mxu0 0.0
    %3144 = vmatpush.msra.mxu0 0.0
    %3145 = vmatpush.msra.mxu0 0.0
    %3146 = vmatpush.msra.mxu0 0.0
    %3147 = vmatpush.msra.mxu0 0.0
    %3148 = vmatpush.msra.mxu0 0.0
    %3149 = vmatpush.msra.mxu0 0.0
    %3150 = vmatpush.msra.mxu0 0.0
    %3151 = vmatpush.msra.mxu0 0.0
    %v3152 = vand.u32 %v367, 4294901760
    %v3153 = vsub.f32 %v367, %v3152
    %v3154 = vand.u32 %v3153, 4294901760
    %3155 = vmatpush.msra.mxu0 %v3154
    %v3156 = vand.u32 %v93, 4294901760
    %v3157 = vsub.f32 %v93, %v3156
    %v3158 = vand.u32 %v3157, 4294901760
    %3159 = vmatpush.msra.mxu0 %v3158
    %v3160 = vand.u32 %v3027, 4294901760
    %3161 = vmatmul.f32.gmra.mxu0 %v3160
    %v3162 = vpop.f32.mrf.mxu0
    %v3163 = vadd.f32 %v3136, %v3162
    %3164 = vdwg.mxu0
    %3165 = vmatpush.msra.mxu0 0.0
    %3166 = vmatpush.msra.mxu0 0.0
    %3167 = vmatpush.msra.mxu0 0.0
    %3168 = vmatpush.msra.mxu0 0.0
    %3169 = vmatpush.msra.mxu0 0.0
    %3170 = vmatpush.msra.mxu0 0.0
    %3171 = vmatpush.msra.mxu0 0.0
    %3172 = vmatpush.msra.mxu0 0.0
    %3173 = vmatpush.msra.mxu0 0.0
    %3174 = vmatpush.msra.mxu0 0.0
    %3175 = vmatpush.msra.mxu0 0.0
    %3176 = vmatpush.msra.mxu0 0.0
    %3177 = vmatpush.msra.mxu0 0.0
    %3178 = vmatpush.msra.mxu0 0.0
    %v3179 = vand.u32 %v367, 4294901760
    %3180 = vmatpush.msra.mxu0 %v3179
    %v3181 = vand.u32 %v93, 4294901760
    %3182 = vmatpush.msra.mxu0 %v3181
    %v3183 = vand.u32 %v3027, 4294901760
    %3184 = vmatmul.f32.gmra.mxu0 %v3183
    %v3185 = vpop.f32.mrf.mxu0
    %v3186 = vadd.f32 %v3163, %v3185
    %3187 = vdwg.mxu0
    %v3188 = vadd.f32 %v345, %v3186
    %v3189 = vxor.u32 %v3188, 2147483648
    %v3190 = vmul.f32 %v3189, 1.442695
    %v3191 = vpow.pop %v3190
    %v3192 = vadd.f32 %v3191, 1.0
    %v3193 = vrcp.pop %v3192
    %v3194 = vmul.f32 %v3192, %v3193
    %v3195 = vsub.f32 1.0, %v3194
    %v3196 = vmul.f32 %v3193, %v3195
    %v3197 = vadd.f32 %v3193, %v3196
    %vm3198 = vweird.f32 %v3192
    %vm3199 = vweird.f32 %v3193
    %vm3200 = vmor %vm3198, %vm3199
    %v3201 = vsel %vm3200, %v3193, %v3197
    %v3202 = vand.u32 2147483647, %v3192
    %vm3203 = vcmp.eq.f32.partialorder %v3202, 8.507059e+37
    %v3204 = vand.u32 %v3192, 2147483648
    %v3205 = vor.u32 1.1754944e-38, %v3204
    %v3206 = vsel %vm3203, %v3205, %v3201
    %v3207 = vmul.f32 1.0, %v3206
    %v3208 = vtanh.pop %v3188
    %3210 = vrot.lane.b32.xlu0 %v2642, 10
    %v3211 = vpop.permute.xlu0 %3210
    %v3213 = vmul.f32 %v3207, %v3211
    %3215 = vrot.lane.b32.xlu0 %v3208, 108
    %v3216 = vpop.permute.xlu0 %3215
    %v3218 = vmul.f32 %v3207, %v3216
    %3220 = vrot.lane.b32.xlu0 %v3218, 10
    %v3221 = vpop.permute.xlu0 %3220
    %v3223 = vadd.f32 %v3213, %v3221
    %v3224 = vtanh.pop %v3223
    %3226 = vrot.lane.b32.xlu0 %v3224, 20
    %v3227 = vpop.permute.xlu0 %3226
    %v3229 = vmul.f32 %v3207, %v3227
    %v3230 = vsel %vm3025, 1, 0
    %3231 = vset.pattern.permute.xlu0 0
    %3232 = vperm.xlu0 %3231, %v3230
    %v3233 = vpop.permute.xlu0 %3232
    %vm3234 = vcmp.eq.s32.totalorder %v3233, 1
    %3236 = vst [vmem:[#allocation1] ss:$4 sm:$0xff] %v3229
    %v3237 = vld.sshfl [vmem:[#allocation1] sm:$0xff pattern:$0x73625140]
    %3238 = vrot.lane.b32.xlu0 %v3237, 98
    %v3239 = vpop.permute.xlu0 %3238
    %v3241 = vsel %vm3234, %v3239, %v2635
    %3243 = vst [vmem:[#allocation1] ss:$4 sm:$0xff] %v3223
    %v3244 = vld.sshfl [vmem:[#allocation1] sm:$0xff pattern:$0x73625140]
    %3245 = vrot.lane.b32.xlu0 %v3244, 118
    %v3246 = vpop.permute.xlu0 %3245
    %v3248 = vsel %vm3234, %v3246, %v2642
    %3250 = vrot.lane.b32.xlu0 %v3023, 98
    %v3251 = vpop.permute.xlu0 %3250
    %v3252 = vsel %vm361, %v3251, 0
    %3254 = vmatpush.msra.mxu0 0.0
    %3255 = vmatpush.msra.mxu0 0.0
    %3256 = vmatpush.msra.mxu0 0.0
    %3257 = vmatpush.msra.mxu0 0.0
    %3258 = vmatpush.msra.mxu0 0.0
    %3259 = vmatpush.msra.mxu0 0.0
    %3260 = vmatpush.msra.mxu0 0.0
    %3261 = vmatpush.msra.mxu0 0.0
    %3262 = vmatpush.msra.mxu0 0.0
    %3263 = vmatpush.msra.mxu0 0.0
    %3264 = vmatpush.msra.mxu0 0.0
    %3265 = vmatpush.msra.mxu0 0.0
    %3266 = vmatpush.msra.mxu0 0.0
    %3267 = vmatpush.msra.mxu0 0.0
    %v3268 = vand.u32 %v817, 4294901760
    %3269 = vmatpush.msra.mxu0 %v3268
    %v3270 = vand.u32 %v97, 4294901760
    %3271 = vmatpush.msra.mxu0 %v3270
    %v3272 = vand.u32 %v3252, 4294901760
    %v3273 = vsub.f32 %v3252, %v3272
    %v3274 = vand.u32 %v3273, 4294901760
    %v3275 = vsub.f32 %v3273, %v3274
    %v3276 = vand.u32 %v3275, 4294901760
    %3277 = vmatmul.f32.gmra.mxu0 %v3276
    %v3278 = vpop.f32.mrf.mxu0
    %v3279 = vadd.f32 0.0, %v3278
    %3280 = vdwg.mxu0
    %3281 = vmatpush.msra.mxu0 0.0
    %3282 = vmatpush.msra.mxu0 0.0
    %3283 = vmatpush.msra.mxu0 0.0
    %3284 = vmatpush.msra.mxu0 0.0
    %3285 = vmatpush.msra.mxu0 0.0
    %3286 = vmatpush.msra.mxu0 0.0
    %3287 = vmatpush.msra.mxu0 0.0
    %3288 = vmatpush.msra.mxu0 0.0
    %3289 = vmatpush.msra.mxu0 0.0
    %3290 = vmatpush.msra.mxu0 0.0
    %3291 = vmatpush.msra.mxu0 0.0
    %3292 = vmatpush.msra.mxu0 0.0
    %3293 = vmatpush.msra.mxu0 0.0
    %3294 = vmatpush.msra.mxu0 0.0
    %v3295 = vand.u32 %v817, 4294901760
    %v3296 = vsub.f32 %v817, %v3295
    %v3297 = vand.u32 %v3296, 4294901760
    %v3298 = vsub.f32 %v3296, %v3297
    %v3299 = vand.u32 %v3298, 4294901760
    %3300 = vmatpush.msra.mxu0 %v3299
    %v3301 = vand.u32 %v97, 4294901760
    %v3302 = vsub.f32 %v97, %v3301
    %v3303 = vand.u32 %v3302, 4294901760
    %v3304 = vsub.f32 %v3302, %v3303
    %v3305 = vand.u32 %v3304, 4294901760
    %3306 = vmatpush.msra.mxu0 %v3305
    %v3307 = vand.u32 %v3252, 4294901760
    %3308 = vmatmul.f32.gmra.mxu0 %v3307
    %v3309 = vpop.f32.mrf.mxu0
    %v3310 = vadd.f32 %v3279, %v3309
    %3311 = vdwg.mxu0
    %3312 = vmatpush.msra.mxu0 0.0
    %3313 = vmatpush.msra.mxu0 0.0
    %3314 = vmatpush.msra.mxu0 0.0
    %3315 = vmatpush.msra.mxu0 0.0
    %3316 = vmatpush.msra.mxu0 0.0
    %3317 = vmatpush.msra.mxu0 0.0
    %3318 = vmatpush.msra.mxu0 0.0
    %3319 = vmatpush.msra.mxu0 0.0
    %3320 = vmatpush.msra.mxu0 0.0
    %3321 = vmatpush.msra.mxu0 0.0
    %3322 = vmatpush.msra.mxu0 0.0
    %3323 = vmatpush.msra.mxu0 0.0
    %3324 = vmatpush.msra.mxu0 0.0
    %3325 = vmatpush.msra.mxu0 0.0
    %v3326 = vand.u32 %v817, 4294901760
    %v3327 = vsub.f32 %v817, %v3326
    %3328 = vmatpush.msra.mxu0 %v3327
    %v3329 = vand.u32 %v97, 4294901760
    %v3330 = vsub.f32 %v97, %v3329
    %3331 = vmatpush.msra.mxu0 %v3330
    %v3332 = vand.u32 %v3252, 4294901760
    %v3333 = vsub.f32 %v3252, %v3332
    %3334 = vmatmul.f32.gmra.mxu0 %v3333
    %v3335 = vpop.f32.mrf.mxu0
    %v3336 = vadd.f32 %v3310, %v3335
    %3337 = vdwg.mxu0
    %3338 = vmatpush.msra.mxu0 0.0
    %3339 = vmatpush.msra.mxu0 0.0
    %3340 = vmatpush.msra.mxu0 0.0
    %3341 = vmatpush.msra.mxu0 0.0
    %3342 = vmatpush.msra.mxu0 0.0
    %3343 = vmatpush.msra.mxu0 0.0
    %3344 = vmatpush.msra.mxu0 0.0
    %3345 = vmatpush.msra.mxu0 0.0
    %3346 = vmatpush.msra.mxu0 0.0
    %3347 = vmatpush.msra.mxu0 0.0
    %3348 = vmatpush.msra.mxu0 0.0
    %3349 = vmatpush.msra.mxu0 0.0
    %3350 = vmatpush.msra.mxu0 0.0
    %3351 = vmatpush.msra.mxu0 0.0
    %v3352 = vand.u32 %v817, 4294901760
    %3353 = vmatpush.msra.mxu0 %v3352
    %v3354 = vand.u32 %v97, 4294901760
    %3355 = vmatpush.msra.mxu0 %v3354
    %v3356 = vand.u32 %v3252, 4294901760
    %v3357 = vsub.f32 %v3252, %v3356
    %v3358 = vand.u32 %v3357, 4294901760
    %3359 = vmatmul.f32.gmra.mxu0 %v3358
    %v3360 = vpop.f32.mrf.mxu0
    %v3361 = vadd.f32 %v3336, %v3360
    %3362 = vdwg.mxu0
    %3363 = vmatpush.msra.mxu0 0.0
    %3364 = vmatpush.msra.mxu0 0.0
    %3365 = vmatpush.msra.mxu0 0.0
    %3366 = vmatpush.msra.mxu0 0.0
    %3367 = vmatpush.msra.mxu0 0.0
    %3368 = vmatpush.msra.mxu0 0.0
    %3369 = vmatpush.msra.mxu0 0.0
    %3370 = vmatpush.msra.mxu0 0.0
    %3371 = vmatpush.msra.mxu0 0.0
    %3372 = vmatpush.msra.mxu0 0.0
    %3373 = vmatpush.msra.mxu0 0.0
    %3374 = vmatpush.msra.mxu0 0.0
    %3375 = vmatpush.msra.mxu0 0.0
    %3376 = vmatpush.msra.mxu0 0.0
    %v3377 = vand.u32 %v817, 4294901760
    %v3378 = vsub.f32 %v817, %v3377
    %v3379 = vand.u32 %v3378, 4294901760
    %3380 = vmatpush.msra.mxu0 %v3379
    %v3381 = vand.u32 %v97, 4294901760
    %v3382 = vsub.f32 %v97, %v3381
    %v3383 = vand.u32 %v3382, 4294901760
    %3384 = vmatpush.msra.mxu0 %v3383
    %v3385 = vand.u32 %v3252, 4294901760
    %3386 = vmatmul.f32.gmra.mxu0 %v3385
    %v3387 = vpop.f32.mrf.mxu0
    %v3388 = vadd.f32 %v3361, %v3387
    %3389 = vdwg.mxu0
    %3390 = vmatpush.msra.mxu0 0.0
    %3391 = vmatpush.msra.mxu0 0.0
    %3392 = vmatpush.msra.mxu0 0.0
    %3393 = vmatpush.msra.mxu0 0.0
    %3394 = vmatpush.msra.mxu0 0.0
    %3395 = vmatpush.msra.mxu0 0.0
    %3396 = vmatpush.msra.mxu0 0.0
    %3397 = vmatpush.msra.mxu0 0.0
    %3398 = vmatpush.msra.mxu0 0.0
    %3399 = vmatpush.msra.mxu0 0.0
    %3400 = vmatpush.msra.mxu0 0.0
    %3401 = vmatpush.msra.mxu0 0.0
    %3402 = vmatpush.msra.mxu0 0.0
    %3403 = vmatpush.msra.mxu0 0.0
    %v3404 = vand.u32 %v817, 4294901760
    %3405 = vmatpush.msra.mxu0 %v3404
    %v3406 = vand.u32 %v97, 4294901760
    %3407 = vmatpush.msra.mxu0 %v3406
    %v3408 = vand.u32 %v3252, 4294901760
    %3409 = vmatmul.f32.gmra.mxu0 %v3408
    %v3410 = vpop.f32.mrf.mxu0
    %v3411 = vadd.f32 %v3388, %v3410
    %3412 = vdwg.mxu0
    %3413 = vst [vmem:[#allocation1] ss:$4 sm:$0xff] %v2623
    %v3414 = vld.sshfl [vmem:[#allocation1] sm:$0xff pattern:$0x73625140]
    %3415 = vrot.lane.b32.xlu0 %v3414, 98
    %v3416 = vpop.permute.xlu0 %3415
    %v3417 = vsel %vm361, %v3416, 0
    %3419 = vmatpush.msra.mxu0 0.0
    %3420 = vmatpush.msra.mxu0 0.0
    %3421 = vmatpush.msra.mxu0 0.0
    %3422 = vmatpush.msra.mxu0 0.0
    %3423 = vmatpush.msra.mxu0 0.0
    %3424 = vmatpush.msra.mxu0 0.0
    %3425 = vmatpush.msra.mxu0 0.0
    %3426 = vmatpush.msra.mxu0 0.0
    %3427 = vmatpush.msra.mxu0 0.0
    %3428 = vmatpush.msra.mxu0 0.0
    %3429 = vmatpush.msra.mxu0 0.0
    %3430 = vmatpush.msra.mxu0 0.0
    %3431 = vmatpush.msra.mxu0 0.0
    %3432 = vmatpush.msra.mxu0 0.0
    %v3433 = vand.u32 %v985, 4294901760
    %3434 = vmatpush.msra.mxu0 %v3433
    %v3435 = vand.u32 %v95, 4294901760
    %3436 = vmatpush.msra.mxu0 %v3435
    %v3437 = vand.u32 %v3417, 4294901760
    %v3438 = vsub.f32 %v3417, %v3437
    %v3439 = vand.u32 %v3438, 4294901760
    %v3440 = vsub.f32 %v3438, %v3439
    %v3441 = vand.u32 %v3440, 4294901760
    %3442 = vmatmul.f32.gmra.mxu0 %v3441
    %v3443 = vpop.f32.mrf.mxu0
    %v3444 = vadd.f32 %v3411, %v3443
    %3445 = vdwg.mxu0
    %3446 = vmatpush.msra.mxu0 0.0
    %3447 = vmatpush.msra.mxu0 0.0
    %3448 = vmatpush.msra.mxu0 0.0
    %3449 = vmatpush.msra.mxu0 0.0
    %3450 = vmatpush.msra.mxu0 0.0
    %3451 = vmatpush.msra.mxu0 0.0
    %3452 = vmatpush.msra.mxu0 0.0
    %3453 = vmatpush.msra.mxu0 0.0
    %3454 = vmatpush.msra.mxu0 0.0
    %3455 = vmatpush.msra.mxu0 0.0
    %3456 = vmatpush.msra.mxu0 0.0
    %3457 = vmatpush.msra.mxu0 0.0
    %3458 = vmatpush.msra.mxu0 0.0
    %3459 = vmatpush.msra.mxu0 0.0
    %v3460 = vand.u32 %v985, 4294901760
    %v3461 = vsub.f32 %v985, %v3460
    %v3462 = vand.u32 %v3461, 4294901760
    %v3463 = vsub.f32 %v3461, %v3462
    %v3464 = vand.u32 %v3463, 4294901760
    %3465 = vmatpush.msra.mxu0 %v3464
    %v3466 = vand.u32 %v95, 4294901760
    %v3467 = vsub.f32 %v95, %v3466
    %v3468 = vand.u32 %v3467, 4294901760
    %v3469 = vsub.f32 %v3467, %v3468
    %v3470 = vand.u32 %v3469, 4294901760
    %3471 = vmatpush.msra.mxu0 %v3470
    %v3472 = vand.u32 %v3417, 4294901760
    %3473 = vmatmul.f32.gmra.mxu0 %v3472
    %v3474 = vpop.f32.mrf.mxu0
    %v3475 = vadd.f32 %v3444, %v3474
    %3476 = vdwg.mxu0
    %3477 = vmatpush.msra.mxu0 0.0
    %3478 = vmatpush.msra.mxu0 0.0
    %3479 = vmatpush.msra.mxu0 0.0
    %3480 = vmatpush.msra.mxu0 0.0
    %3481 = vmatpush.msra.mxu0 0.0
    %3482 = vmatpush.msra.mxu0 0.0
    %3483 = vmatpush.msra.mxu0 0.0
    %3484 = vmatpush.msra.mxu0 0.0
    %3485 = vmatpush.msra.mxu0 0.0
    %3486 = vmatpush.msra.mxu0 0.0
    %3487 = vmatpush.msra.mxu0 0.0
    %3488 = vmatpush.msra.mxu0 0.0
    %3489 = vmatpush.msra.mxu0 0.0
    %3490 = vmatpush.msra.mxu0 0.0
    %v3491 = vand.u32 %v985, 4294901760
    %v3492 = vsub.f32 %v985, %v3491
    %3493 = vmatpush.msra.mxu0 %v3492
    %v3494 = vand.u32 %v95, 4294901760
    %v3495 = vsub.f32 %v95, %v3494
    %3496 = vmatpush.msra.mxu0 %v3495
    %v3497 = vand.u32 %v3417, 4294901760
    %v3498 = vsub.f32 %v3417, %v3497
    %3499 = vmatmul.f32.gmra.mxu0 %v3498
    %v3500 = vpop.f32.mrf.mxu0
    %v3501 = vadd.f32 %v3475, %v3500
    %3502 = vdwg.mxu0
    %3503 = vmatpush.msra.mxu0 0.0
    %3504 = vmatpush.msra.mxu0 0.0
    %3505 = vmatpush.msra.mxu0 0.0
    %3506 = vmatpush.msra.mxu0 0.0
    %3507 = vmatpush.msra.mxu0 0.0
    %3508 = vmatpush.msra.mxu0 0.0
    %3509 = vmatpush.msra.mxu0 0.0
    %3510 = vmatpush.msra.mxu0 0.0
    %3511 = vmatpush.msra.mxu0 0.0
    %3512 = vmatpush.msra.mxu0 0.0
    %3513 = vmatpush.msra.mxu0 0.0
    %3514 = vmatpush.msra.mxu0 0.0
    %3515 = vmatpush.msra.mxu0 0.0
    %3516 = vmatpush.msra.mxu0 0.0
    %v3517 = vand.u32 %v985, 4294901760
    %3518 = vmatpush.msra.mxu0 %v3517
    %v3519 = vand.u32 %v95, 4294901760
    %3520 = vmatpush.msra.mxu0 %v3519
    %v3521 = vand.u32 %v3417, 4294901760
    %v3522 = vsub.f32 %v3417, %v3521
    %v3523 = vand.u32 %v3522, 4294901760
    %3524 = vmatmul.f32.gmra.mxu0 %v3523
    %v3525 = vpop.f32.mrf.mxu0
    %v3526 = vadd.f32 %v3501, %v3525
    %3527 = vdwg.mxu0
    %3528 = vmatpush.msra.mxu0 0.0
    %3529 = vmatpush.msra.mxu0 0.0
    %3530 = vmatpush.msra.mxu0 0.0
    %3531 = vmatpush.msra.mxu0 0.0
    %3532 = vmatpush.msra.mxu0 0.0
    %3533 = vmatpush.msra.mxu0 0.0
    %3534 = vmatpush.msra.mxu0 0.0
    %3535 = vmatpush.msra.mxu0 0.0
    %3536 = vmatpush.msra.mxu0 0.0
    %3537 = vmatpush.msra.mxu0 0.0
    %3538 = vmatpush.msra.mxu0 0.0
    %3539 = vmatpush.msra.mxu0 0.0
    %3540 = vmatpush.msra.mxu0 0.0
    %3541 = vmatpush.msra.mxu0 0.0
    %v3542 = vand.u32 %v985, 4294901760
    %v3543 = vsub.f32 %v985, %v3542
    %v3544 = vand.u32 %v3543, 4294901760
    %3545 = vmatpush.msra.mxu0 %v3544
    %v3546 = vand.u32 %v95, 4294901760
    %v3547 = vsub.f32 %v95, %v3546
    %v3548 = vand.u32 %v3547, 4294901760
    %3549 = vmatpush.msra.mxu0 %v3548
    %v3550 = vand.u32 %v3417, 4294901760
    %3551 = vmatmul.f32.gmra.mxu0 %v3550
    %v3552 = vpop.f32.mrf.mxu0
    %v3553 = vadd.f32 %v3526, %v3552
    %3554 = vdwg.mxu0
    %3555 = vmatpush.msra.mxu0 0.0
    %3556 = vmatpush.msra.mxu0 0.0
    %3557 = vmatpush.msra.mxu0 0.0
    %3558 = vmatpush.msra.mxu0 0.0
    %3559 = vmatpush.msra.mxu0 0.0
    %3560 = vmatpush.msra.mxu0 0.0
    %3561 = vmatpush.msra.mxu0 0.0
    %3562 = vmatpush.msra.mxu0 0.0
    %3563 = vmatpush.msra.mxu0 0.0
    %3564 = vmatpush.msra.mxu0 0.0
    %3565 = vmatpush.msra.mxu0 0.0
    %3566 = vmatpush.msra.mxu0 0.0
    %3567 = vmatpush.msra.mxu0 0.0
    %3568 = vmatpush.msra.mxu0 0.0
    %v3569 = vand.u32 %v985, 4294901760
    %3570 = vmatpush.msra.mxu0 %v3569
    %v3571 = vand.u32 %v95, 4294901760
    %3572 = vmatpush.msra.mxu0 %v3571
    %v3573 = vand.u32 %v3417, 4294901760
    %3574 = vmatmul.f32.gmra.mxu0 %v3573
    %v3575 = vpop.f32.mrf.mxu0
    %v3576 = vadd.f32 %v3553, %v3575
    %3577 = vdwg.mxu0
    %v3578 = vadd.f32 %v3576, %v101
    %v3579 = vxor.u32 %v3578, 2147483648
    %v3580 = vmul.f32 %v3579, 1.442695
    %v3581 = vpow.pop %v3580
    %v3582 = vadd.f32 %v3581, 1.0
    %v3583 = vrcp.pop %v3582
    %v3584 = vmul.f32 %v3582, %v3583
    %v3585 = vsub.f32 1.0, %v3584
    %v3586 = vmul.f32 %v3583, %v3585
    %v3587 = vadd.f32 %v3583, %v3586
    %vm3588 = vweird.f32 %v3582
    %vm3589 = vweird.f32 %v3583
    %vm3590 = vmor %vm3588, %vm3589
    %v3591 = vsel %vm3590, %v3583, %v3587
    %v3592 = vand.u32 2147483647, %v3582
    %vm3593 = vcmp.eq.f32.partialorder %v3592, 8.507059e+37
    %v3594 = vand.u32 %v3582, 2147483648
    %v3595 = vor.u32 1.1754944e-38, %v3594
    %v3596 = vsel %vm3593, %v3595, %v3591
    %v3597 = vmul.f32 1.0, %v3596
    %v3598 = vtanh.pop %v3578
    %v3599 = vmul.f32 %v3597, %v3024
    %3601 = vrot.lane.b32.xlu0 %v3598, 108
    %v3602 = vpop.permute.xlu0 %3601
    %v3604 = vmul.f32 %v3597, %v3602
    %3606 = vrot.lane.b32.xlu0 %v3604, 10
    %v3607 = vpop.permute.xlu0 %3606
    %v3609 = vadd.f32 %v3599, %v3607
    %v3610 = vtanh.pop %v3609
    %3612 = vrot.lane.b32.xlu0 %v3610, 20
    %v3613 = vpop.permute.xlu0 %3612
    %v3615 = vmul.f32 %v3597, %v3613
    %v3616 = vsel %vm2628, %v3615, 0.0
    %v3618 = vrot.slane %v3616, 1
    %v3619 = vperm.slane %v3616, 0
    %v3620 = vperm.slane %v3618, 0
    %3621 = vrot.lane.b32.xlu0 %v3619, 98
    %v3622 = vpop.permute.xlu0 %3621
    %3623 = vrot.lane.b32.xlu0 %v3620, 98
    %v3624 = vpop.permute.xlu0 %3623
    %3627 = vst.msk [vmem:[#allocation9 + $0x4] sm:$0x1] %vm1199, %v3622
    %3628 = vst.msk [vmem:[#allocation9 + $0xc] sm:$0x1] %vm1199, %v3624
    %v3629 = vsel %vm2628, %v3615, %v3023
    %v3630 = vsel %vm2628, %v3609, %v3024
    %vm3631 = vcmp.gt.s32.totalorder %v92, 6
    %v3633 = vsel %vm361, %v3241, 0
    %3635 = vmatpush.msra.mxu0 0.0
    %3636 = vmatpush.msra.mxu0 0.0
    %3637 = vmatpush.msra.mxu0 0.0
    %3638 = vmatpush.msra.mxu0 0.0
    %3639 = vmatpush.msra.mxu0 0.0
    %3640 = vmatpush.msra.mxu0 0.0
    %3641 = vmatpush.msra.mxu0 0.0
    %3642 = vmatpush.msra.mxu0 0.0
    %3643 = vmatpush.msra.mxu0 0.0
    %3644 = vmatpush.msra.mxu0 0.0
    %3645 = vmatpush.msra.mxu0 0.0
    %3646 = vmatpush.msra.mxu0 0.0
    %3647 = vmatpush.msra.mxu0 0.0
    %3648 = vmatpush.msra.mxu0 0.0
    %v3649 = vand.u32 %v367, 4294901760
    %3650 = vmatpush.msra.mxu0 %v3649
    %v3651 = vand.u32 %v93, 4294901760
    %3652 = vmatpush.msra.mxu0 %v3651
    %v3653 = vand.u32 %v3633, 4294901760
    %v3654 = vsub.f32 %v3633, %v3653
    %v3655 = vand.u32 %v3654, 4294901760
    %v3656 = vsub.f32 %v3654, %v3655
    %v3657 = vand.u32 %v3656, 4294901760
    %3658 = vmatmul.f32.gmra.mxu0 %v3657
    %v3659 = vpop.f32.mrf.mxu0
    %v3660 = vadd.f32 0.0, %v3659
    %3661 = vdwg.mxu0
    %3662 = vmatpush.msra.mxu0 0.0
    %3663 = vmatpush.msra.mxu0 0.0
    %3664 = vmatpush.msra.mxu0 0.0
    %3665 = vmatpush.msra.mxu0 0.0
    %3666 = vmatpush.msra.mxu0 0.0
    %3667 = vmatpush.msra.mxu0 0.0
    %3668 = vmatpush.msra.mxu0 0.0
    %3669 = vmatpush.msra.mxu0 0.0
    %3670 = vmatpush.msra.mxu0 0.0
    %3671 = vmatpush.msra.mxu0 0.0
    %3672 = vmatpush.msra.mxu0 0.0
    %3673 = vmatpush.msra.mxu0 0.0
    %3674 = vmatpush.msra.mxu0 0.0
    %3675 = vmatpush.msra.mxu0 0.0
    %v3676 = vand.u32 %v367, 4294901760
    %v3677 = vsub.f32 %v367, %v3676
    %v3678 = vand.u32 %v3677, 4294901760
    %v3679 = vsub.f32 %v3677, %v3678
    %v3680 = vand.u32 %v3679, 4294901760
    %3681 = vmatpush.msra.mxu0 %v3680
    %v3682 = vand.u32 %v93, 4294901760
    %v3683 = vsub.f32 %v93, %v3682
    %v3684 = vand.u32 %v3683, 4294901760
    %v3685 = vsub.f32 %v3683, %v3684
    %v3686 = vand.u32 %v3685, 4294901760
    %3687 = vmatpush.msra.mxu0 %v3686
    %v3688 = vand.u32 %v3633, 4294901760
    %3689 = vmatmul.f32.gmra.mxu0 %v3688
    %v3690 = vpop.f32.mrf.mxu0
    %v3691 = vadd.f32 %v3660, %v3690
    %3692 = vdwg.mxu0
    %3693 = vmatpush.msra.mxu0 0.0
    %3694 = vmatpush.msra.mxu0 0.0
    %3695 = vmatpush.msra.mxu0 0.0
    %3696 = vmatpush.msra.mxu0 0.0
    %3697 = vmatpush.msra.mxu0 0.0
    %3698 = vmatpush.msra.mxu0 0.0
    %3699 = vmatpush.msra.mxu0 0.0
    %3700 = vmatpush.msra.mxu0 0.0
    %3701 = vmatpush.msra.mxu0 0.0
    %3702 = vmatpush.msra.mxu0 0.0
    %3703 = vmatpush.msra.mxu0 0.0
    %3704 = vmatpush.msra.mxu0 0.0
    %3705 = vmatpush.msra.mxu0 0.0
    %3706 = vmatpush.msra.mxu0 0.0
    %v3707 = vand.u32 %v367, 4294901760
    %v3708 = vsub.f32 %v367, %v3707
    %3709 = vmatpush.msra.mxu0 %v3708
    %v3710 = vand.u32 %v93, 4294901760
    %v3711 = vsub.f32 %v93, %v3710
    %3712 = vmatpush.msra.mxu0 %v3711
    %v3713 = vand.u32 %v3633, 4294901760
    %v3714 = vsub.f32 %v3633, %v3713
    %3715 = vmatmul.f32.gmra.mxu0 %v3714
    %v3716 = vpop.f32.mrf.mxu0
    %v3717 = vadd.f32 %v3691, %v3716
    %3718 = vdwg.mxu0
    %3719 = vmatpush.msra.mxu0 0.0
    %3720 = vmatpush.msra.mxu0 0.0
    %3721 = vmatpush.msra.mxu0 0.0
    %3722 = vmatpush.msra.mxu0 0.0
    %3723 = vmatpush.msra.mxu0 0.0
    %3724 = vmatpush.msra.mxu0 0.0
    %3725 = vmatpush.msra.mxu0 0.0
    %3726 = vmatpush.msra.mxu0 0.0
    %3727 = vmatpush.msra.mxu0 0.0
    %3728 = vmatpush.msra.mxu0 0.0
    %3729 = vmatpush.msra.mxu0 0.0
    %3730 = vmatpush.msra.mxu0 0.0
    %3731 = vmatpush.msra.mxu0 0.0
    %3732 = vmatpush.msra.mxu0 0.0
    %v3733 = vand.u32 %v367, 4294901760
    %3734 = vmatpush.msra.mxu0 %v3733
    %v3735 = vand.u32 %v93, 4294901760
    %3736 = vmatpush.msra.mxu0 %v3735
    %v3737 = vand.u32 %v3633, 4294901760
    %v3738 = vsub.f32 %v3633, %v3737
    %v3739 = vand.u32 %v3738, 4294901760
    %3740 = vmatmul.f32.gmra.mxu0 %v3739
    %v3741 = vpop.f32.mrf.mxu0
    %v3742 = vadd.f32 %v3717, %v3741
    %3743 = vdwg.mxu0
    %3744 = vmatpush.msra.mxu0 0.0
    %3745 = vmatpush.msra.mxu0 0.0
    %3746 = vmatpush.msra.mxu0 0.0
    %3747 = vmatpush.msra.mxu0 0.0
    %3748 = vmatpush.msra.mxu0 0.0
    %3749 = vmatpush.msra.mxu0 0.0
    %3750 = vmatpush.msra.mxu0 0.0
    %3751 = vmatpush.msra.mxu0 0.0
    %3752 = vmatpush.msra.mxu0 0.0
    %3753 = vmatpush.msra.mxu0 0.0
    %3754 = vmatpush.msra.mxu0 0.0
    %3755 = vmatpush.msra.mxu0 0.0
    %3756 = vmatpush.msra.mxu0 0.0
    %3757 = vmatpush.msra.mxu0 0.0
    %v3758 = vand.u32 %v367, 4294901760
    %v3759 = vsub.f32 %v367, %v3758
    %v3760 = vand.u32 %v3759, 4294901760
    %3761 = vmatpush.msra.mxu0 %v3760
    %v3762 = vand.u32 %v93, 4294901760
    %v3763 = vsub.f32 %v93, %v3762
    %v3764 = vand.u32 %v3763, 4294901760
    %3765 = vmatpush.msra.mxu0 %v3764
    %v3766 = vand.u32 %v3633, 4294901760
    %3767 = vmatmul.f32.gmra.mxu0 %v3766
    %v3768 = vpop.f32.mrf.mxu0
    %v3769 = vadd.f32 %v3742, %v3768
    %3770 = vdwg.mxu0
    %3771 = vmatpush.msra.mxu0 0.0
    %3772 = vmatpush.msra.mxu0 0.0
    %3773 = vmatpush.msra.mxu0 0.0
    %3774 = vmatpush.msra.mxu0 0.0
    %3775 = vmatpush.msra.mxu0 0.0
    %3776 = vmatpush.msra.mxu0 0.0
    %3777 = vmatpush.msra.mxu0 0.0
    %3778 = vmatpush.msra.mxu0 0.0
    %3779 = vmatpush.msra.mxu0 0.0
    %3780 = vmatpush.msra.mxu0 0.0
    %3781 = vmatpush.msra.mxu0 0.0
    %3782 = vmatpush.msra.mxu0 0.0
    %3783 = vmatpush.msra.mxu0 0.0
    %3784 = vmatpush.msra.mxu0 0.0
    %v3785 = vand.u32 %v367, 4294901760
    %3786 = vmatpush.msra.mxu0 %v3785
    %v3787 = vand.u32 %v93, 4294901760
    %3788 = vmatpush.msra.mxu0 %v3787
    %v3789 = vand.u32 %v3633, 4294901760
    %3790 = vmatmul.f32.gmra.mxu0 %v3789
    %v3791 = vpop.f32.mrf.mxu0
    %v3792 = vadd.f32 %v3769, %v3791
    %3793 = vdwg.mxu0
    %v3794 = vadd.f32 %v346, %v3792
    %v3795 = vxor.u32 %v3794, 2147483648
    %v3796 = vmul.f32 %v3795, 1.442695
    %v3797 = vpow.pop %v3796
    %v3798 = vadd.f32 %v3797, 1.0
    %v3799 = vrcp.pop %v3798
    %v3800 = vmul.f32 %v3798, %v3799
    %v3801 = vsub.f32 1.0, %v3800
    %v3802 = vmul.f32 %v3799, %v3801
    %v3803 = vadd.f32 %v3799, %v3802
    %vm3804 = vweird.f32 %v3798
    %vm3805 = vweird.f32 %v3799
    %vm3806 = vmor %vm3804, %vm3805
    %v3807 = vsel %vm3806, %v3799, %v3803
    %v3808 = vand.u32 2147483647, %v3798
    %vm3809 = vcmp.eq.f32.partialorder %v3808, 8.507059e+37
    %v3810 = vand.u32 %v3798, 2147483648
    %v3811 = vor.u32 1.1754944e-38, %v3810
    %v3812 = vsel %vm3809, %v3811, %v3807
    %v3813 = vmul.f32 1.0, %v3812
    %v3814 = vtanh.pop %v3794
    %3816 = vrot.lane.b32.xlu0 %v3248, 10
    %v3817 = vpop.permute.xlu0 %3816
    %v3819 = vmul.f32 %v3813, %v3817
    %3821 = vrot.lane.b32.xlu0 %v3814, 108
    %v3822 = vpop.permute.xlu0 %3821
    %v3824 = vmul.f32 %v3813, %v3822
    %3826 = vrot.lane.b32.xlu0 %v3824, 10
    %v3827 = vpop.permute.xlu0 %3826
    %v3829 = vadd.f32 %v3819, %v3827
    %v3830 = vtanh.pop %v3829
    %3832 = vrot.lane.b32.xlu0 %v3830, 20
    %v3833 = vpop.permute.xlu0 %3832
    %v3835 = vmul.f32 %v3813, %v3833
    %v3836 = vsel %vm3631, 1, 0
    %3837 = vset.pattern.permute.xlu0 0
    %3838 = vperm.xlu0 %3837, %v3836
    %v3839 = vpop.permute.xlu0 %3838
    %vm3840 = vcmp.eq.s32.totalorder %v3839, 1
    %3842 = vst [vmem:[#allocation1] ss:$4 sm:$0xff] %v3835
    %v3843 = vld.sshfl [vmem:[#allocation1] sm:$0xff pattern:$0x73625140]
    %3844 = vrot.lane.b32.xlu0 %v3843, 98
    %v3845 = vpop.permute.xlu0 %3844
    %v3847 = vsel %vm3840, %v3845, %v3241
    %3849 = vst [vmem:[#allocation1] ss:$4 sm:$0xff] %v3829
    %v3850 = vld.sshfl [vmem:[#allocation1] sm:$0xff pattern:$0x73625140]
    %3851 = vrot.lane.b32.xlu0 %v3850, 118
    %v3852 = vpop.permute.xlu0 %3851
    %v3854 = vsel %vm3840, %v3852, %v3248
    %3856 = vrot.lane.b32.xlu0 %v3629, 98
    %v3857 = vpop.permute.xlu0 %3856
    %v3858 = vsel %vm361, %v3857, 0
    %3860 = vmatpush.msra.mxu0 0.0
    %3861 = vmatpush.msra.mxu0 0.0
    %3862 = vmatpush.msra.mxu0 0.0
    %3863 = vmatpush.msra.mxu0 0.0
    %3864 = vmatpush.msra.mxu0 0.0
    %3865 = vmatpush.msra.mxu0 0.0
    %3866 = vmatpush.msra.mxu0 0.0
    %3867 = vmatpush.msra.mxu0 0.0
    %3868 = vmatpush.msra.mxu0 0.0
    %3869 = vmatpush.msra.mxu0 0.0
    %3870 = vmatpush.msra.mxu0 0.0
    %3871 = vmatpush.msra.mxu0 0.0
    %3872 = vmatpush.msra.mxu0 0.0
    %3873 = vmatpush.msra.mxu0 0.0
    %v3874 = vand.u32 %v817, 4294901760
    %3875 = vmatpush.msra.mxu0 %v3874
    %v3876 = vand.u32 %v97, 4294901760
    %3877 = vmatpush.msra.mxu0 %v3876
    %v3878 = vand.u32 %v3858, 4294901760
    %v3879 = vsub.f32 %v3858, %v3878
    %v3880 = vand.u32 %v3879, 4294901760
    %v3881 = vsub.f32 %v3879, %v3880
    %v3882 = vand.u32 %v3881, 4294901760
    %3883 = vmatmul.f32.gmra.mxu0 %v3882
    %v3884 = vpop.f32.mrf.mxu0
    %v3885 = vadd.f32 0.0, %v3884
    %3886 = vdwg.mxu0
    %3887 = vmatpush.msra.mxu0 0.0
    %3888 = vmatpush.msra.mxu0 0.0
    %3889 = vmatpush.msra.mxu0 0.0
    %3890 = vmatpush.msra.mxu0 0.0
    %3891 = vmatpush.msra.mxu0 0.0
    %3892 = vmatpush.msra.mxu0 0.0
    %3893 = vmatpush.msra.mxu0 0.0
    %3894 = vmatpush.msra.mxu0 0.0
    %3895 = vmatpush.msra.mxu0 0.0
    %3896 = vmatpush.msra.mxu0 0.0
    %3897 = vmatpush.msra.mxu0 0.0
    %3898 = vmatpush.msra.mxu0 0.0
    %3899 = vmatpush.msra.mxu0 0.0
    %3900 = vmatpush.msra.mxu0 0.0
    %v3901 = vand.u32 %v817, 4294901760
    %v3902 = vsub.f32 %v817, %v3901
    %v3903 = vand.u32 %v3902, 4294901760
    %v3904 = vsub.f32 %v3902, %v3903
    %v3905 = vand.u32 %v3904, 4294901760
    %3906 = vmatpush.msra.mxu0 %v3905
    %v3907 = vand.u32 %v97, 4294901760
    %v3908 = vsub.f32 %v97, %v3907
    %v3909 = vand.u32 %v3908, 4294901760
    %v3910 = vsub.f32 %v3908, %v3909
    %v3911 = vand.u32 %v3910, 4294901760
    %3912 = vmatpush.msra.mxu0 %v3911
    %v3913 = vand.u32 %v3858, 4294901760
    %3914 = vmatmul.f32.gmra.mxu0 %v3913
    %v3915 = vpop.f32.mrf.mxu0
    %v3916 = vadd.f32 %v3885, %v3915
    %3917 = vdwg.mxu0
    %3918 = vmatpush.msra.mxu0 0.0
    %3919 = vmatpush.msra.mxu0 0.0
    %3920 = vmatpush.msra.mxu0 0.0
    %3921 = vmatpush.msra.mxu0 0.0
    %3922 = vmatpush.msra.mxu0 0.0
    %3923 = vmatpush.msra.mxu0 0.0
    %3924 = vmatpush.msra.mxu0 0.0
    %3925 = vmatpush.msra.mxu0 0.0
    %3926 = vmatpush.msra.mxu0 0.0
    %3927 = vmatpush.msra.mxu0 0.0
    %3928 = vmatpush.msra.mxu0 0.0
    %3929 = vmatpush.msra.mxu0 0.0
    %3930 = vmatpush.msra.mxu0 0.0
    %3931 = vmatpush.msra.mxu0 0.0
    %v3932 = vand.u32 %v817, 4294901760
    %v3933 = vsub.f32 %v817, %v3932
    %3934 = vmatpush.msra.mxu0 %v3933
    %v3935 = vand.u32 %v97, 4294901760
    %v3936 = vsub.f32 %v97, %v3935
    %3937 = vmatpush.msra.mxu0 %v3936
    %v3938 = vand.u32 %v3858, 4294901760
    %v3939 = vsub.f32 %v3858, %v3938
    %3940 = vmatmul.f32.gmra.mxu0 %v3939
    %v3941 = vpop.f32.mrf.mxu0
    %v3942 = vadd.f32 %v3916, %v3941
    %3943 = vdwg.mxu0
    %3944 = vmatpush.msra.mxu0 0.0
    %3945 = vmatpush.msra.mxu0 0.0
    %3946 = vmatpush.msra.mxu0 0.0
    %3947 = vmatpush.msra.mxu0 0.0
    %3948 = vmatpush.msra.mxu0 0.0
    %3949 = vmatpush.msra.mxu0 0.0
    %3950 = vmatpush.msra.mxu0 0.0
    %3951 = vmatpush.msra.mxu0 0.0
    %3952 = vmatpush.msra.mxu0 0.0
    %3953 = vmatpush.msra.mxu0 0.0
    %3954 = vmatpush.msra.mxu0 0.0
    %3955 = vmatpush.msra.mxu0 0.0
    %3956 = vmatpush.msra.mxu0 0.0
    %3957 = vmatpush.msra.mxu0 0.0
    %v3958 = vand.u32 %v817, 4294901760
    %3959 = vmatpush.msra.mxu0 %v3958
    %v3960 = vand.u32 %v97, 4294901760
    %3961 = vmatpush.msra.mxu0 %v3960
    %v3962 = vand.u32 %v3858, 4294901760
    %v3963 = vsub.f32 %v3858, %v3962
    %v3964 = vand.u32 %v3963, 4294901760
    %3965 = vmatmul.f32.gmra.mxu0 %v3964
    %v3966 = vpop.f32.mrf.mxu0
    %v3967 = vadd.f32 %v3942, %v3966
    %3968 = vdwg.mxu0
    %3969 = vmatpush.msra.mxu0 0.0
    %3970 = vmatpush.msra.mxu0 0.0
    %3971 = vmatpush.msra.mxu0 0.0
    %3972 = vmatpush.msra.mxu0 0.0
    %3973 = vmatpush.msra.mxu0 0.0
    %3974 = vmatpush.msra.mxu0 0.0
    %3975 = vmatpush.msra.mxu0 0.0
    %3976 = vmatpush.msra.mxu0 0.0
    %3977 = vmatpush.msra.mxu0 0.0
    %3978 = vmatpush.msra.mxu0 0.0
    %3979 = vmatpush.msra.mxu0 0.0
    %3980 = vmatpush.msra.mxu0 0.0
    %3981 = vmatpush.msra.mxu0 0.0
    %3982 = vmatpush.msra.mxu0 0.0
    %v3983 = vand.u32 %v817, 4294901760
    %v3984 = vsub.f32 %v817, %v3983
    %v3985 = vand.u32 %v3984, 4294901760
    %3986 = vmatpush.msra.mxu0 %v3985
    %v3987 = vand.u32 %v97, 4294901760
    %v3988 = vsub.f32 %v97, %v3987
    %v3989 = vand.u32 %v3988, 4294901760
    %3990 = vmatpush.msra.mxu0 %v3989
    %v3991 = vand.u32 %v3858, 4294901760
    %3992 = vmatmul.f32.gmra.mxu0 %v3991
    %v3993 = vpop.f32.mrf.mxu0
    %v3994 = vadd.f32 %v3967, %v3993
    %3995 = vdwg.mxu0
    %3996 = vmatpush.msra.mxu0 0.0
    %3997 = vmatpush.msra.mxu0 0.0
    %3998 = vmatpush.msra.mxu0 0.0
    %3999 = vmatpush.msra.mxu0 0.0
    %4000 = vmatpush.msra.mxu0 0.0
    %4001 = vmatpush.msra.mxu0 0.0
    %4002 = vmatpush.msra.mxu0 0.0
    %4003 = vmatpush.msra.mxu0 0.0
    %4004 = vmatpush.msra.mxu0 0.0
    %4005 = vmatpush.msra.mxu0 0.0
    %4006 = vmatpush.msra.mxu0 0.0
    %4007 = vmatpush.msra.mxu0 0.0
    %4008 = vmatpush.msra.mxu0 0.0
    %4009 = vmatpush.msra.mxu0 0.0
    %v4010 = vand.u32 %v817, 4294901760
    %4011 = vmatpush.msra.mxu0 %v4010
    %v4012 = vand.u32 %v97, 4294901760
    %4013 = vmatpush.msra.mxu0 %v4012
    %v4014 = vand.u32 %v3858, 4294901760
    %4015 = vmatmul.f32.gmra.mxu0 %v4014
    %v4016 = vpop.f32.mrf.mxu0
    %v4017 = vadd.f32 %v3994, %v4016
    %4018 = vdwg.mxu0
    %4019 = vst [vmem:[#allocation1] ss:$4 sm:$0xff] %v3229
    %v4020 = vld.sshfl [vmem:[#allocation1] sm:$0xff pattern:$0x73625140]
    %4021 = vrot.lane.b32.xlu0 %v4020, 98
    %v4022 = vpop.permute.xlu0 %4021
    %v4023 = vsel %vm361, %v4022, 0
    %4025 = vmatpush.msra.mxu0 0.0
    %4026 = vmatpush.msra.mxu0 0.0
    %4027 = vmatpush.msra.mxu0 0.0
    %4028 = vmatpush.msra.mxu0 0.0
    %4029 = vmatpush.msra.mxu0 0.0
    %4030 = vmatpush.msra.mxu0 0.0
    %4031 = vmatpush.msra.mxu0 0.0
    %4032 = vmatpush.msra.mxu0 0.0
    %4033 = vmatpush.msra.mxu0 0.0
    %4034 = vmatpush.msra.mxu0 0.0
    %4035 = vmatpush.msra.mxu0 0.0
    %4036 = vmatpush.msra.mxu0 0.0
    %4037 = vmatpush.msra.mxu0 0.0
    %4038 = vmatpush.msra.mxu0 0.0
    %v4039 = vand.u32 %v985, 4294901760
    %4040 = vmatpush.msra.mxu0 %v4039
    %v4041 = vand.u32 %v95, 4294901760
    %4042 = vmatpush.msra.mxu0 %v4041
    %v4043 = vand.u32 %v4023, 4294901760
    %v4044 = vsub.f32 %v4023, %v4043
    %v4045 = vand.u32 %v4044, 4294901760
    %v4046 = vsub.f32 %v4044, %v4045
    %v4047 = vand.u32 %v4046, 4294901760
    %4048 = vmatmul.f32.gmra.mxu0 %v4047
    %v4049 = vpop.f32.mrf.mxu0
    %v4050 = vadd.f32 %v4017, %v4049
    %4051 = vdwg.mxu0
    %4052 = vmatpush.msra.mxu0 0.0
    %4053 = vmatpush.msra.mxu0 0.0
    %4054 = vmatpush.msra.mxu0 0.0
    %4055 = vmatpush.msra.mxu0 0.0
    %4056 = vmatpush.msra.mxu0 0.0
    %4057 = vmatpush.msra.mxu0 0.0
    %4058 = vmatpush.msra.mxu0 0.0
    %4059 = vmatpush.msra.mxu0 0.0
    %4060 = vmatpush.msra.mxu0 0.0
    %4061 = vmatpush.msra.mxu0 0.0
    %4062 = vmatpush.msra.mxu0 0.0
    %4063 = vmatpush.msra.mxu0 0.0
    %4064 = vmatpush.msra.mxu0 0.0
    %4065 = vmatpush.msra.mxu0 0.0
    %v4066 = vand.u32 %v985, 4294901760
    %v4067 = vsub.f32 %v985, %v4066
    %v4068 = vand.u32 %v4067, 4294901760
    %v4069 = vsub.f32 %v4067, %v4068
    %v4070 = vand.u32 %v4069, 4294901760
    %4071 = vmatpush.msra.mxu0 %v4070
    %v4072 = vand.u32 %v95, 4294901760
    %v4073 = vsub.f32 %v95, %v4072
    %v4074 = vand.u32 %v4073, 4294901760
    %v4075 = vsub.f32 %v4073, %v4074
    %v4076 = vand.u32 %v4075, 4294901760
    %4077 = vmatpush.msra.mxu0 %v4076
    %v4078 = vand.u32 %v4023, 4294901760
    %4079 = vmatmul.f32.gmra.mxu0 %v4078
    %v4080 = vpop.f32.mrf.mxu0
    %v4081 = vadd.f32 %v4050, %v4080
    %4082 = vdwg.mxu0
    %4083 = vmatpush.msra.mxu0 0.0
    %4084 = vmatpush.msra.mxu0 0.0
    %4085 = vmatpush.msra.mxu0 0.0
    %4086 = vmatpush.msra.mxu0 0.0
    %4087 = vmatpush.msra.mxu0 0.0
    %4088 = vmatpush.msra.mxu0 0.0
    %4089 = vmatpush.msra.mxu0 0.0
    %4090 = vmatpush.msra.mxu0 0.0
    %4091 = vmatpush.msra.mxu0 0.0
    %4092 = vmatpush.msra.mxu0 0.0
    %4093 = vmatpush.msra.mxu0 0.0
    %4094 = vmatpush.msra.mxu0 0.0
    %4095 = vmatpush.msra.mxu0 0.0
    %4096 = vmatpush.msra.mxu0 0.0
    %v4097 = vand.u32 %v985, 4294901760
    %v4098 = vsub.f32 %v985, %v4097
    %4099 = vmatpush.msra.mxu0 %v4098
    %v4100 = vand.u32 %v95, 4294901760
    %v4101 = vsub.f32 %v95, %v4100
    %4102 = vmatpush.msra.mxu0 %v4101
    %v4103 = vand.u32 %v4023, 4294901760
    %v4104 = vsub.f32 %v4023, %v4103
    %4105 = vmatmul.f32.gmra.mxu0 %v4104
    %v4106 = vpop.f32.mrf.mxu0
    %v4107 = vadd.f32 %v4081, %v4106
    %4108 = vdwg.mxu0
    %4109 = vmatpush.msra.mxu0 0.0
    %4110 = vmatpush.msra.mxu0 0.0
    %4111 = vmatpush.msra.mxu0 0.0
    %4112 = vmatpush.msra.mxu0 0.0
    %4113 = vmatpush.msra.mxu0 0.0
    %4114 = vmatpush.msra.mxu0 0.0
    %4115 = vmatpush.msra.mxu0 0.0
    %4116 = vmatpush.msra.mxu0 0.0
    %4117 = vmatpush.msra.mxu0 0.0
    %4118 = vmatpush.msra.mxu0 0.0
    %4119 = vmatpush.msra.mxu0 0.0
    %4120 = vmatpush.msra.mxu0 0.0
    %4121 = vmatpush.msra.mxu0 0.0
    %4122 = vmatpush.msra.mxu0 0.0
    %v4123 = vand.u32 %v985, 4294901760
    %4124 = vmatpush.msra.mxu0 %v4123
    %v4125 = vand.u32 %v95, 4294901760
    %4126 = vmatpush.msra.mxu0 %v4125
    %v4127 = vand.u32 %v4023, 4294901760
    %v4128 = vsub.f32 %v4023, %v4127
    %v4129 = vand.u32 %v4128, 4294901760
    %4130 = vmatmul.f32.gmra.mxu0 %v4129
    %v4131 = vpop.f32.mrf.mxu0
    %v4132 = vadd.f32 %v4107, %v4131
    %4133 = vdwg.mxu0
    %4134 = vmatpush.msra.mxu0 0.0
    %4135 = vmatpush.msra.mxu0 0.0
    %4136 = vmatpush.msra.mxu0 0.0
    %4137 = vmatpush.msra.mxu0 0.0
    %4138 = vmatpush.msra.mxu0 0.0
    %4139 = vmatpush.msra.mxu0 0.0
    %4140 = vmatpush.msra.mxu0 0.0
    %4141 = vmatpush.msra.mxu0 0.0
    %4142 = vmatpush.msra.mxu0 0.0
    %4143 = vmatpush.msra.mxu0 0.0
    %4144 = vmatpush.msra.mxu0 0.0
    %4145 = vmatpush.msra.mxu0 0.0
    %4146 = vmatpush.msra.mxu0 0.0
    %4147 = vmatpush.msra.mxu0 0.0
    %v4148 = vand.u32 %v985, 4294901760
    %v4149 = vsub.f32 %v985, %v4148
    %v4150 = vand.u32 %v4149, 4294901760
    %4151 = vmatpush.msra.mxu0 %v4150
    %v4152 = vand.u32 %v95, 4294901760
    %v4153 = vsub.f32 %v95, %v4152
    %v4154 = vand.u32 %v4153, 4294901760
    %4155 = vmatpush.msra.mxu0 %v4154
    %v4156 = vand.u32 %v4023, 4294901760
    %4157 = vmatmul.f32.gmra.mxu0 %v4156
    %v4158 = vpop.f32.mrf.mxu0
    %v4159 = vadd.f32 %v4132, %v4158
    %4160 = vdwg.mxu0
    %4161 = vmatpush.msra.mxu0 0.0
    %4162 = vmatpush.msra.mxu0 0.0
    %4163 = vmatpush.msra.mxu0 0.0
    %4164 = vmatpush.msra.mxu0 0.0
    %4165 = vmatpush.msra.mxu0 0.0
    %4166 = vmatpush.msra.mxu0 0.0
    %4167 = vmatpush.msra.mxu0 0.0
    %4168 = vmatpush.msra.mxu0 0.0
    %4169 = vmatpush.msra.mxu0 0.0
    %4170 = vmatpush.msra.mxu0 0.0
    %4171 = vmatpush.msra.mxu0 0.0
    %4172 = vmatpush.msra.mxu0 0.0
    %4173 = vmatpush.msra.mxu0 0.0
    %4174 = vmatpush.msra.mxu0 0.0
    %v4175 = vand.u32 %v985, 4294901760
    %4176 = vmatpush.msra.mxu0 %v4175
    %v4177 = vand.u32 %v95, 4294901760
    %4178 = vmatpush.msra.mxu0 %v4177
    %v4179 = vand.u32 %v4023, 4294901760
    %4180 = vmatmul.f32.gmra.mxu0 %v4179
    %v4181 = vpop.f32.mrf.mxu0
    %v4182 = vadd.f32 %v4159, %v4181
    %4183 = vdwg.mxu0
    %v4184 = vadd.f32 %v4182, %v101
    %v4185 = vxor.u32 %v4184, 2147483648
    %v4186 = vmul.f32 %v4185, 1.442695
    %v4187 = vpow.pop %v4186
    %v4188 = vadd.f32 %v4187, 1.0
    %v4189 = vrcp.pop %v4188
    %v4190 = vmul.f32 %v4188, %v4189
    %v4191 = vsub.f32 1.0, %v4190
    %v4192 = vmul.f32 %v4189, %v4191
    %v4193 = vadd.f32 %v4189, %v4192
    %vm4194 = vweird.f32 %v4188
    %vm4195 = vweird.f32 %v4189
    %vm4196 = vmor %vm4194, %vm4195
    %v4197 = vsel %vm4196, %v4189, %v4193
    %v4198 = vand.u32 2147483647, %v4188
    %vm4199 = vcmp.eq.f32.partialorder %v4198, 8.507059e+37
    %v4200 = vand.u32 %v4188, 2147483648
    %v4201 = vor.u32 1.1754944e-38, %v4200
    %v4202 = vsel %vm4199, %v4201, %v4197
    %v4203 = vmul.f32 1.0, %v4202
    %v4204 = vtanh.pop %v4184
    %v4205 = vmul.f32 %v4203, %v3630
    %4207 = vrot.lane.b32.xlu0 %v4204, 108
    %v4208 = vpop.permute.xlu0 %4207
    %v4210 = vmul.f32 %v4203, %v4208
    %4212 = vrot.lane.b32.xlu0 %v4210, 10
    %v4213 = vpop.permute.xlu0 %4212
    %v4215 = vadd.f32 %v4205, %v4213
    %v4216 = vtanh.pop %v4215
    %4218 = vrot.lane.b32.xlu0 %v4216, 20
    %v4219 = vpop.permute.xlu0 %4218
    %v4221 = vmul.f32 %v4203, %v4219
    %v4222 = vsel %vm3234, %v4221, 0.0
    %v4224 = vrot.slane %v4222, 1
    %v4225 = vperm.slane %v4222, 0
    %v4226 = vperm.slane %v4224, 0
    %4227 = vrot.lane.b32.xlu0 %v4225, 98
    %v4228 = vpop.permute.xlu0 %4227
    %4229 = vrot.lane.b32.xlu0 %v4226, 98
    %v4230 = vpop.permute.xlu0 %4229
    %4233 = vst.msk [vmem:[#allocation9 + $0x5] sm:$0x1] %vm1199, %v4228
    %4234 = vst.msk [vmem:[#allocation9 + $0xd] sm:$0x1] %vm1199, %v4230
    %v4235 = vsel %vm3234, %v4221, %v3629
    %v4236 = vsel %vm3234, %v4215, %v3630
    %vm4237 = vcmp.gt.s32.totalorder %v92, 7
    %v4239 = vsel %vm361, %v3847, 0
    %4241 = vmatpush.msra.mxu0 0.0
    %4242 = vmatpush.msra.mxu0 0.0
    %4243 = vmatpush.msra.mxu0 0.0
    %4244 = vmatpush.msra.mxu0 0.0
    %4245 = vmatpush.msra.mxu0 0.0
    %4246 = vmatpush.msra.mxu0 0.0
    %4247 = vmatpush.msra.mxu0 0.0
    %4248 = vmatpush.msra.mxu0 0.0
    %4249 = vmatpush.msra.mxu0 0.0
    %4250 = vmatpush.msra.mxu0 0.0
    %4251 = vmatpush.msra.mxu0 0.0
    %4252 = vmatpush.msra.mxu0 0.0
    %4253 = vmatpush.msra.mxu0 0.0
    %4254 = vmatpush.msra.mxu0 0.0
    %v4255 = vand.u32 %v367, 4294901760
    %4256 = vmatpush.msra.mxu0 %v4255
    %v4257 = vand.u32 %v93, 4294901760
    %4258 = vmatpush.msra.mxu0 %v4257
    %v4259 = vand.u32 %v4239, 4294901760
    %v4260 = vsub.f32 %v4239, %v4259
    %v4261 = vand.u32 %v4260, 4294901760
    %v4262 = vsub.f32 %v4260, %v4261
    %v4263 = vand.u32 %v4262, 4294901760
    %4264 = vmatmul.f32.gmra.mxu0 %v4263
    %v4265 = vpop.f32.mrf.mxu0
    %v4266 = vadd.f32 0.0, %v4265
    %4267 = vdwg.mxu0
    %4268 = vmatpush.msra.mxu0 0.0
    %4269 = vmatpush.msra.mxu0 0.0
    %4270 = vmatpush.msra.mxu0 0.0
    %4271 = vmatpush.msra.mxu0 0.0
    %4272 = vmatpush.msra.mxu0 0.0
    %4273 = vmatpush.msra.mxu0 0.0
    %4274 = vmatpush.msra.mxu0 0.0
    %4275 = vmatpush.msra.mxu0 0.0
    %4276 = vmatpush.msra.mxu0 0.0
    %4277 = vmatpush.msra.mxu0 0.0
    %4278 = vmatpush.msra.mxu0 0.0
    %4279 = vmatpush.msra.mxu0 0.0
    %4280 = vmatpush.msra.mxu0 0.0
    %4281 = vmatpush.msra.mxu0 0.0
    %v4282 = vand.u32 %v367, 4294901760
    %v4283 = vsub.f32 %v367, %v4282
    %v4284 = vand.u32 %v4283, 4294901760
    %v4285 = vsub.f32 %v4283, %v4284
    %v4286 = vand.u32 %v4285, 4294901760
    %4287 = vmatpush.msra.mxu0 %v4286
    %v4288 = vand.u32 %v93, 4294901760
    %v4289 = vsub.f32 %v93, %v4288
    %v4290 = vand.u32 %v4289, 4294901760
    %v4291 = vsub.f32 %v4289, %v4290
    %v4292 = vand.u32 %v4291, 4294901760
    %4293 = vmatpush.msra.mxu0 %v4292
    %v4294 = vand.u32 %v4239, 4294901760
    %4295 = vmatmul.f32.gmra.mxu0 %v4294
    %v4296 = vpop.f32.mrf.mxu0
    %v4297 = vadd.f32 %v4266, %v4296
    %4298 = vdwg.mxu0
    %4299 = vmatpush.msra.mxu0 0.0
    %4300 = vmatpush.msra.mxu0 0.0
    %4301 = vmatpush.msra.mxu0 0.0
    %4302 = vmatpush.msra.mxu0 0.0
    %4303 = vmatpush.msra.mxu0 0.0
    %4304 = vmatpush.msra.mxu0 0.0
    %4305 = vmatpush.msra.mxu0 0.0
    %4306 = vmatpush.msra.mxu0 0.0
    %4307 = vmatpush.msra.mxu0 0.0
    %4308 = vmatpush.msra.mxu0 0.0
    %4309 = vmatpush.msra.mxu0 0.0
    %4310 = vmatpush.msra.mxu0 0.0
    %4311 = vmatpush.msra.mxu0 0.0
    %4312 = vmatpush.msra.mxu0 0.0
    %v4313 = vand.u32 %v367, 4294901760
    %v4314 = vsub.f32 %v367, %v4313
    %4315 = vmatpush.msra.mxu0 %v4314
    %v4316 = vand.u32 %v93, 4294901760
    %v4317 = vsub.f32 %v93, %v4316
    %4318 = vmatpush.msra.mxu0 %v4317
    %v4319 = vand.u32 %v4239, 4294901760
    %v4320 = vsub.f32 %v4239, %v4319
    %4321 = vmatmul.f32.gmra.mxu0 %v4320
    %v4322 = vpop.f32.mrf.mxu0
    %v4323 = vadd.f32 %v4297, %v4322
    %4324 = vdwg.mxu0
    %4325 = vmatpush.msra.mxu0 0.0
    %4326 = vmatpush.msra.mxu0 0.0
    %4327 = vmatpush.msra.mxu0 0.0
    %4328 = vmatpush.msra.mxu0 0.0
    %4329 = vmatpush.msra.mxu0 0.0
    %4330 = vmatpush.msra.mxu0 0.0
    %4331 = vmatpush.msra.mxu0 0.0
    %4332 = vmatpush.msra.mxu0 0.0
    %4333 = vmatpush.msra.mxu0 0.0
    %4334 = vmatpush.msra.mxu0 0.0
    %4335 = vmatpush.msra.mxu0 0.0
    %4336 = vmatpush.msra.mxu0 0.0
    %4337 = vmatpush.msra.mxu0 0.0
    %4338 = vmatpush.msra.mxu0 0.0
    %v4339 = vand.u32 %v367, 4294901760
    %4340 = vmatpush.msra.mxu0 %v4339
    %v4341 = vand.u32 %v93, 4294901760
    %4342 = vmatpush.msra.mxu0 %v4341
    %v4343 = vand.u32 %v4239, 4294901760
    %v4344 = vsub.f32 %v4239, %v4343
    %v4345 = vand.u32 %v4344, 4294901760
    %4346 = vmatmul.f32.gmra.mxu0 %v4345
    %v4347 = vpop.f32.mrf.mxu0
    %v4348 = vadd.f32 %v4323, %v4347
    %4349 = vdwg.mxu0
    %4350 = vmatpush.msra.mxu0 0.0
    %4351 = vmatpush.msra.mxu0 0.0
    %4352 = vmatpush.msra.mxu0 0.0
    %4353 = vmatpush.msra.mxu0 0.0
    %4354 = vmatpush.msra.mxu0 0.0
    %4355 = vmatpush.msra.mxu0 0.0
    %4356 = vmatpush.msra.mxu0 0.0
    %4357 = vmatpush.msra.mxu0 0.0
    %4358 = vmatpush.msra.mxu0 0.0
    %4359 = vmatpush.msra.mxu0 0.0
    %4360 = vmatpush.msra.mxu0 0.0
    %4361 = vmatpush.msra.mxu0 0.0
    %4362 = vmatpush.msra.mxu0 0.0
    %4363 = vmatpush.msra.mxu0 0.0
    %v4364 = vand.u32 %v367, 4294901760
    %v4365 = vsub.f32 %v367, %v4364
    %v4366 = vand.u32 %v4365, 4294901760
    %4367 = vmatpush.msra.mxu0 %v4366
    %v4368 = vand.u32 %v93, 4294901760
    %v4369 = vsub.f32 %v93, %v4368
    %v4370 = vand.u32 %v4369, 4294901760
    %4371 = vmatpush.msra.mxu0 %v4370
    %v4372 = vand.u32 %v4239, 4294901760
    %4373 = vmatmul.f32.gmra.mxu0 %v4372
    %v4374 = vpop.f32.mrf.mxu0
    %v4375 = vadd.f32 %v4348, %v4374
    %4376 = vdwg.mxu0
    %4377 = vmatpush.msra.mxu0 0.0
    %4378 = vmatpush.msra.mxu0 0.0
    %4379 = vmatpush.msra.mxu0 0.0
    %4380 = vmatpush.msra.mxu0 0.0
    %4381 = vmatpush.msra.mxu0 0.0
    %4382 = vmatpush.msra.mxu0 0.0
    %4383 = vmatpush.msra.mxu0 0.0
    %4384 = vmatpush.msra.mxu0 0.0
    %4385 = vmatpush.msra.mxu0 0.0
    %4386 = vmatpush.msra.mxu0 0.0
    %4387 = vmatpush.msra.mxu0 0.0
    %4388 = vmatpush.msra.mxu0 0.0
    %4389 = vmatpush.msra.mxu0 0.0
    %4390 = vmatpush.msra.mxu0 0.0
    %v4391 = vand.u32 %v367, 4294901760
    %4392 = vmatpush.msra.mxu0 %v4391
    %v4393 = vand.u32 %v93, 4294901760
    %4394 = vmatpush.msra.mxu0 %v4393
    %v4395 = vand.u32 %v4239, 4294901760
    %4396 = vmatmul.f32.gmra.mxu0 %v4395
    %v4397 = vpop.f32.mrf.mxu0
    %v4398 = vadd.f32 %v4375, %v4397
    %4399 = vdwg.mxu0
    %v4400 = vadd.f32 %v347, %v4398
    %v4401 = vxor.u32 %v4400, 2147483648
    %v4402 = vmul.f32 %v4401, 1.442695
    %v4403 = vpow.pop %v4402
    %v4404 = vadd.f32 %v4403, 1.0
    %v4405 = vrcp.pop %v4404
    %v4406 = vmul.f32 %v4404, %v4405
    %v4407 = vsub.f32 1.0, %v4406
    %v4408 = vmul.f32 %v4405, %v4407
    %v4409 = vadd.f32 %v4405, %v4408
    %vm4410 = vweird.f32 %v4404
    %vm4411 = vweird.f32 %v4405
    %vm4412 = vmor %vm4410, %vm4411
    %v4413 = vsel %vm4412, %v4405, %v4409
    %v4414 = vand.u32 2147483647, %v4404
    %vm4415 = vcmp.eq.f32.partialorder %v4414, 8.507059e+37
    %v4416 = vand.u32 %v4404, 2147483648
    %v4417 = vor.u32 1.1754944e-38, %v4416
    %v4418 = vsel %vm4415, %v4417, %v4413
    %v4419 = vmul.f32 1.0, %v4418
    %v4420 = vtanh.pop %v4400
    %4422 = vrot.lane.b32.xlu0 %v3854, 10
    %v4423 = vpop.permute.xlu0 %4422
    %v4425 = vmul.f32 %v4419, %v4423
    %4427 = vrot.lane.b32.xlu0 %v4420, 108
    %v4428 = vpop.permute.xlu0 %4427
    %v4430 = vmul.f32 %v4419, %v4428
    %4432 = vrot.lane.b32.xlu0 %v4430, 10
    %v4433 = vpop.permute.xlu0 %4432
    %v4435 = vadd.f32 %v4425, %v4433
    %v4436 = vtanh.pop %v4435
    %4438 = vrot.lane.b32.xlu0 %v4436, 20
    %v4439 = vpop.permute.xlu0 %4438
    %v4441 = vmul.f32 %v4419, %v4439
    %v4442 = vsel %vm4237, 1, 0
    %4443 = vset.pattern.permute.xlu0 0
    %4444 = vperm.xlu0 %4443, %v4442
    %v4445 = vpop.permute.xlu0 %4444
    %vm4446 = vcmp.eq.s32.totalorder %v4445, 1
    %4448 = vst [vmem:[#allocation1] ss:$4 sm:$0xff] %v4441
    %v4449 = vld.sshfl [vmem:[#allocation1] sm:$0xff pattern:$0x73625140]
    %4450 = vrot.lane.b32.xlu0 %v4449, 98
    %v4451 = vpop.permute.xlu0 %4450
    %v4453 = vsel %vm4446, %v4451, %v3847
    %4455 = vst [vmem:[#allocation1] ss:$4 sm:$0xff] %v4435
    %v4456 = vld.sshfl [vmem:[#allocation1] sm:$0xff pattern:$0x73625140]
    %4457 = vrot.lane.b32.xlu0 %v4456, 118
    %v4458 = vpop.permute.xlu0 %4457
    %v4460 = vsel %vm4446, %v4458, %v3854
    %4462 = vrot.lane.b32.xlu0 %v4235, 98
    %v4463 = vpop.permute.xlu0 %4462
    %v4464 = vsel %vm361, %v4463, 0
    %4466 = vmatpush.msra.mxu0 0.0
    %4467 = vmatpush.msra.mxu0 0.0
    %4468 = vmatpush.msra.mxu0 0.0
    %4469 = vmatpush.msra.mxu0 0.0
    %4470 = vmatpush.msra.mxu0 0.0
    %4471 = vmatpush.msra.mxu0 0.0
    %4472 = vmatpush.msra.mxu0 0.0
    %4473 = vmatpush.msra.mxu0 0.0
    %4474 = vmatpush.msra.mxu0 0.0
    %4475 = vmatpush.msra.mxu0 0.0
    %4476 = vmatpush.msra.mxu0 0.0
    %4477 = vmatpush.msra.mxu0 0.0
    %4478 = vmatpush.msra.mxu0 0.0
    %4479 = vmatpush.msra.mxu0 0.0
    %v4480 = vand.u32 %v817, 4294901760
    %4481 = vmatpush.msra.mxu0 %v4480
    %v4482 = vand.u32 %v97, 4294901760
    %4483 = vmatpush.msra.mxu0 %v4482
    %v4484 = vand.u32 %v4464, 4294901760
    %v4485 = vsub.f32 %v4464, %v4484
    %v4486 = vand.u32 %v4485, 4294901760
    %v4487 = vsub.f32 %v4485, %v4486
    %v4488 = vand.u32 %v4487, 4294901760
    %4489 = vmatmul.f32.gmra.mxu0 %v4488
    %v4490 = vpop.f32.mrf.mxu0
    %v4491 = vadd.f32 0.0, %v4490
    %4492 = vdwg.mxu0
    %4493 = vmatpush.msra.mxu0 0.0
    %4494 = vmatpush.msra.mxu0 0.0
    %4495 = vmatpush.msra.mxu0 0.0
    %4496 = vmatpush.msra.mxu0 0.0
    %4497 = vmatpush.msra.mxu0 0.0
    %4498 = vmatpush.msra.mxu0 0.0
    %4499 = vmatpush.msra.mxu0 0.0
    %4500 = vmatpush.msra.mxu0 0.0
    %4501 = vmatpush.msra.mxu0 0.0
    %4502 = vmatpush.msra.mxu0 0.0
    %4503 = vmatpush.msra.mxu0 0.0
    %4504 = vmatpush.msra.mxu0 0.0
    %4505 = vmatpush.msra.mxu0 0.0
    %4506 = vmatpush.msra.mxu0 0.0
    %v4507 = vand.u32 %v817, 4294901760
    %v4508 = vsub.f32 %v817, %v4507
    %v4509 = vand.u32 %v4508, 4294901760
    %v4510 = vsub.f32 %v4508, %v4509
    %v4511 = vand.u32 %v4510, 4294901760
    %4512 = vmatpush.msra.mxu0 %v4511
    %v4513 = vand.u32 %v97, 4294901760
    %v4514 = vsub.f32 %v97, %v4513
    %v4515 = vand.u32 %v4514, 4294901760
    %v4516 = vsub.f32 %v4514, %v4515
    %v4517 = vand.u32 %v4516, 4294901760
    %4518 = vmatpush.msra.mxu0 %v4517
    %v4519 = vand.u32 %v4464, 4294901760
    %4520 = vmatmul.f32.gmra.mxu0 %v4519
    %v4521 = vpop.f32.mrf.mxu0
    %v4522 = vadd.f32 %v4491, %v4521
    %4523 = vdwg.mxu0
    %4524 = vmatpush.msra.mxu0 0.0
    %4525 = vmatpush.msra.mxu0 0.0
    %4526 = vmatpush.msra.mxu0 0.0
    %4527 = vmatpush.msra.mxu0 0.0
    %4528 = vmatpush.msra.mxu0 0.0
    %4529 = vmatpush.msra.mxu0 0.0
    %4530 = vmatpush.msra.mxu0 0.0
    %4531 = vmatpush.msra.mxu0 0.0
    %4532 = vmatpush.msra.mxu0 0.0
    %4533 = vmatpush.msra.mxu0 0.0
    %4534 = vmatpush.msra.mxu0 0.0
    %4535 = vmatpush.msra.mxu0 0.0
    %4536 = vmatpush.msra.mxu0 0.0
    %4537 = vmatpush.msra.mxu0 0.0
    %v4538 = vand.u32 %v817, 4294901760
    %v4539 = vsub.f32 %v817, %v4538
    %4540 = vmatpush.msra.mxu0 %v4539
    %v4541 = vand.u32 %v97, 4294901760
    %v4542 = vsub.f32 %v97, %v4541
    %4543 = vmatpush.msra.mxu0 %v4542
    %v4544 = vand.u32 %v4464, 4294901760
    %v4545 = vsub.f32 %v4464, %v4544
    %4546 = vmatmul.f32.gmra.mxu0 %v4545
    %v4547 = vpop.f32.mrf.mxu0
    %v4548 = vadd.f32 %v4522, %v4547
    %4549 = vdwg.mxu0
    %4550 = vmatpush.msra.mxu0 0.0
    %4551 = vmatpush.msra.mxu0 0.0
    %4552 = vmatpush.msra.mxu0 0.0
    %4553 = vmatpush.msra.mxu0 0.0
    %4554 = vmatpush.msra.mxu0 0.0
    %4555 = vmatpush.msra.mxu0 0.0
    %4556 = vmatpush.msra.mxu0 0.0
    %4557 = vmatpush.msra.mxu0 0.0
    %4558 = vmatpush.msra.mxu0 0.0
    %4559 = vmatpush.msra.mxu0 0.0
    %4560 = vmatpush.msra.mxu0 0.0
    %4561 = vmatpush.msra.mxu0 0.0
    %4562 = vmatpush.msra.mxu0 0.0
    %4563 = vmatpush.msra.mxu0 0.0
    %v4564 = vand.u32 %v817, 4294901760
    %4565 = vmatpush.msra.mxu0 %v4564
    %v4566 = vand.u32 %v97, 4294901760
    %4567 = vmatpush.msra.mxu0 %v4566
    %v4568 = vand.u32 %v4464, 4294901760
    %v4569 = vsub.f32 %v4464, %v4568
    %v4570 = vand.u32 %v4569, 4294901760
    %4571 = vmatmul.f32.gmra.mxu0 %v4570
    %v4572 = vpop.f32.mrf.mxu0
    %v4573 = vadd.f32 %v4548, %v4572
    %4574 = vdwg.mxu0
    %4575 = vmatpush.msra.mxu0 0.0
    %4576 = vmatpush.msra.mxu0 0.0
    %4577 = vmatpush.msra.mxu0 0.0
    %4578 = vmatpush.msra.mxu0 0.0
    %4579 = vmatpush.msra.mxu0 0.0
    %4580 = vmatpush.msra.mxu0 0.0
    %4581 = vmatpush.msra.mxu0 0.0
    %4582 = vmatpush.msra.mxu0 0.0
    %4583 = vmatpush.msra.mxu0 0.0
    %4584 = vmatpush.msra.mxu0 0.0
    %4585 = vmatpush.msra.mxu0 0.0
    %4586 = vmatpush.msra.mxu0 0.0
    %4587 = vmatpush.msra.mxu0 0.0
    %4588 = vmatpush.msra.mxu0 0.0
    %v4589 = vand.u32 %v817, 4294901760
    %v4590 = vsub.f32 %v817, %v4589
    %v4591 = vand.u32 %v4590, 4294901760
    %4592 = vmatpush.msra.mxu0 %v4591
    %v4593 = vand.u32 %v97, 4294901760
    %v4594 = vsub.f32 %v97, %v4593
    %v4595 = vand.u32 %v4594, 4294901760
    %4596 = vmatpush.msra.mxu0 %v4595
    %v4597 = vand.u32 %v4464, 4294901760
    %4598 = vmatmul.f32.gmra.mxu0 %v4597
    %v4599 = vpop.f32.mrf.mxu0
    %v4600 = vadd.f32 %v4573, %v4599
    %4601 = vdwg.mxu0
    %4602 = vmatpush.msra.mxu0 0.0
    %4603 = vmatpush.msra.mxu0 0.0
    %4604 = vmatpush.msra.mxu0 0.0
    %4605 = vmatpush.msra.mxu0 0.0
    %4606 = vmatpush.msra.mxu0 0.0
    %4607 = vmatpush.msra.mxu0 0.0
    %4608 = vmatpush.msra.mxu0 0.0
    %4609 = vmatpush.msra.mxu0 0.0
    %4610 = vmatpush.msra.mxu0 0.0
    %4611 = vmatpush.msra.mxu0 0.0
    %4612 = vmatpush.msra.mxu0 0.0
    %4613 = vmatpush.msra.mxu0 0.0
    %4614 = vmatpush.msra.mxu0 0.0
    %4615 = vmatpush.msra.mxu0 0.0
    %v4616 = vand.u32 %v817, 4294901760
    %4617 = vmatpush.msra.mxu0 %v4616
    %v4618 = vand.u32 %v97, 4294901760
    %4619 = vmatpush.msra.mxu0 %v4618
    %v4620 = vand.u32 %v4464, 4294901760
    %4621 = vmatmul.f32.gmra.mxu0 %v4620
    %v4622 = vpop.f32.mrf.mxu0
    %v4623 = vadd.f32 %v4600, %v4622
    %4624 = vdwg.mxu0
    %4625 = vst [vmem:[#allocation1] ss:$4 sm:$0xff] %v3835
    %v4626 = vld.sshfl [vmem:[#allocation1] sm:$0xff pattern:$0x73625140]
    %4627 = vrot.lane.b32.xlu0 %v4626, 98
    %v4628 = vpop.permute.xlu0 %4627
    %v4629 = vsel %vm361, %v4628, 0
    %4631 = vmatpush.msra.mxu0 0.0
    %4632 = vmatpush.msra.mxu0 0.0
    %4633 = vmatpush.msra.mxu0 0.0
    %4634 = vmatpush.msra.mxu0 0.0
    %4635 = vmatpush.msra.mxu0 0.0
    %4636 = vmatpush.msra.mxu0 0.0
    %4637 = vmatpush.msra.mxu0 0.0
    %4638 = vmatpush.msra.mxu0 0.0
    %4639 = vmatpush.msra.mxu0 0.0
    %4640 = vmatpush.msra.mxu0 0.0
    %4641 = vmatpush.msra.mxu0 0.0
    %4642 = vmatpush.msra.mxu0 0.0
    %4643 = vmatpush.msra.mxu0 0.0
    %4644 = vmatpush.msra.mxu0 0.0
    %v4645 = vand.u32 %v985, 4294901760
    %4646 = vmatpush.msra.mxu0 %v4645
    %v4647 = vand.u32 %v95, 4294901760
    %4648 = vmatpush.msra.mxu0 %v4647
    %v4649 = vand.u32 %v4629, 4294901760
    %v4650 = vsub.f32 %v4629, %v4649
    %v4651 = vand.u32 %v4650, 4294901760
    %v4652 = vsub.f32 %v4650, %v4651
    %v4653 = vand.u32 %v4652, 4294901760
    %4654 = vmatmul.f32.gmra.mxu0 %v4653
    %v4655 = vpop.f32.mrf.mxu0
    %v4656 = vadd.f32 %v4623, %v4655
    %4657 = vdwg.mxu0
    %4658 = vmatpush.msra.mxu0 0.0
    %4659 = vmatpush.msra.mxu0 0.0
    %4660 = vmatpush.msra.mxu0 0.0
    %4661 = vmatpush.msra.mxu0 0.0
    %4662 = vmatpush.msra.mxu0 0.0
    %4663 = vmatpush.msra.mxu0 0.0
    %4664 = vmatpush.msra.mxu0 0.0
    %4665 = vmatpush.msra.mxu0 0.0
    %4666 = vmatpush.msra.mxu0 0.0
    %4667 = vmatpush.msra.mxu0 0.0
    %4668 = vmatpush.msra.mxu0 0.0
    %4669 = vmatpush.msra.mxu0 0.0
    %4670 = vmatpush.msra.mxu0 0.0
    %4671 = vmatpush.msra.mxu0 0.0
    %v4672 = vand.u32 %v985, 4294901760
    %v4673 = vsub.f32 %v985, %v4672
    %v4674 = vand.u32 %v4673, 4294901760
    %v4675 = vsub.f32 %v4673, %v4674
    %v4676 = vand.u32 %v4675, 4294901760
    %4677 = vmatpush.msra.mxu0 %v4676
    %v4678 = vand.u32 %v95, 4294901760
    %v4679 = vsub.f32 %v95, %v4678
    %v4680 = vand.u32 %v4679, 4294901760
    %v4681 = vsub.f32 %v4679, %v4680
    %v4682 = vand.u32 %v4681, 4294901760
    %4683 = vmatpush.msra.mxu0 %v4682
    %v4684 = vand.u32 %v4629, 4294901760
    %4685 = vmatmul.f32.gmra.mxu0 %v4684
    %v4686 = vpop.f32.mrf.mxu0
    %v4687 = vadd.f32 %v4656, %v4686
    %4688 = vdwg.mxu0
    %4689 = vmatpush.msra.mxu0 0.0
    %4690 = vmatpush.msra.mxu0 0.0
    %4691 = vmatpush.msra.mxu0 0.0
    %4692 = vmatpush.msra.mxu0 0.0
    %4693 = vmatpush.msra.mxu0 0.0
    %4694 = vmatpush.msra.mxu0 0.0
    %4695 = vmatpush.msra.mxu0 0.0
    %4696 = vmatpush.msra.mxu0 0.0
    %4697 = vmatpush.msra.mxu0 0.0
    %4698 = vmatpush.msra.mxu0 0.0
    %4699 = vmatpush.msra.mxu0 0.0
    %4700 = vmatpush.msra.mxu0 0.0
    %4701 = vmatpush.msra.mxu0 0.0
    %4702 = vmatpush.msra.mxu0 0.0
    %v4703 = vand.u32 %v985, 4294901760
    %v4704 = vsub.f32 %v985, %v4703
    %4705 = vmatpush.msra.mxu0 %v4704
    %v4706 = vand.u32 %v95, 4294901760
    %v4707 = vsub.f32 %v95, %v4706
    %4708 = vmatpush.msra.mxu0 %v4707
    %v4709 = vand.u32 %v4629, 4294901760
    %v4710 = vsub.f32 %v4629, %v4709
    %4711 = vmatmul.f32.gmra.mxu0 %v4710
    %v4712 = vpop.f32.mrf.mxu0
    %v4713 = vadd.f32 %v4687, %v4712
    %4714 = vdwg.mxu0
    %4715 = vmatpush.msra.mxu0 0.0
    %4716 = vmatpush.msra.mxu0 0.0
    %4717 = vmatpush.msra.mxu0 0.0
    %4718 = vmatpush.msra.mxu0 0.0
    %4719 = vmatpush.msra.mxu0 0.0
    %4720 = vmatpush.msra.mxu0 0.0
    %4721 = vmatpush.msra.mxu0 0.0
    %4722 = vmatpush.msra.mxu0 0.0
    %4723 = vmatpush.msra.mxu0 0.0
    %4724 = vmatpush.msra.mxu0 0.0
    %4725 = vmatpush.msra.mxu0 0.0
    %4726 = vmatpush.msra.mxu0 0.0
    %4727 = vmatpush.msra.mxu0 0.0
    %4728 = vmatpush.msra.mxu0 0.0
    %v4729 = vand.u32 %v985, 4294901760
    %4730 = vmatpush.msra.mxu0 %v4729
    %v4731 = vand.u32 %v95, 4294901760
    %4732 = vmatpush.msra.mxu0 %v4731
    %v4733 = vand.u32 %v4629, 4294901760
    %v4734 = vsub.f32 %v4629, %v4733
    %v4735 = vand.u32 %v4734, 4294901760
    %4736 = vmatmul.f32.gmra.mxu0 %v4735
    %v4737 = vpop.f32.mrf.mxu0
    %v4738 = vadd.f32 %v4713, %v4737
    %4739 = vdwg.mxu0
    %4740 = vmatpush.msra.mxu0 0.0
    %4741 = vmatpush.msra.mxu0 0.0
    %4742 = vmatpush.msra.mxu0 0.0
    %4743 = vmatpush.msra.mxu0 0.0
    %4744 = vmatpush.msra.mxu0 0.0
    %4745 = vmatpush.msra.mxu0 0.0
    %4746 = vmatpush.msra.mxu0 0.0
    %4747 = vmatpush.msra.mxu0 0.0
    %4748 = vmatpush.msra.mxu0 0.0
    %4749 = vmatpush.msra.mxu0 0.0
    %4750 = vmatpush.msra.mxu0 0.0
    %4751 = vmatpush.msra.mxu0 0.0
    %4752 = vmatpush.msra.mxu0 0.0
    %4753 = vmatpush.msra.mxu0 0.0
    %v4754 = vand.u32 %v985, 4294901760
    %v4755 = vsub.f32 %v985, %v4754
    %v4756 = vand.u32 %v4755, 4294901760
    %4757 = vmatpush.msra.mxu0 %v4756
    %v4758 = vand.u32 %v95, 4294901760
    %v4759 = vsub.f32 %v95, %v4758
    %v4760 = vand.u32 %v4759, 4294901760
    %4761 = vmatpush.msra.mxu0 %v4760
    %v4762 = vand.u32 %v4629, 4294901760
    %4763 = vmatmul.f32.gmra.mxu0 %v4762
    %v4764 = vpop.f32.mrf.mxu0
    %v4765 = vadd.f32 %v4738, %v4764
    %4766 = vdwg.mxu0
    %4767 = vmatpush.msra.mxu0 0.0
    %4768 = vmatpush.msra.mxu0 0.0
    %4769 = vmatpush.msra.mxu0 0.0
    %4770 = vmatpush.msra.mxu0 0.0
    %4771 = vmatpush.msra.mxu0 0.0
    %4772 = vmatpush.msra.mxu0 0.0
    %4773 = vmatpush.msra.mxu0 0.0
    %4774 = vmatpush.msra.mxu0 0.0
    %4775 = vmatpush.msra.mxu0 0.0
    %4776 = vmatpush.msra.mxu0 0.0
    %4777 = vmatpush.msra.mxu0 0.0
    %4778 = vmatpush.msra.mxu0 0.0
    %4779 = vmatpush.msra.mxu0 0.0
    %4780 = vmatpush.msra.mxu0 0.0
    %v4781 = vand.u32 %v985, 4294901760
    %4782 = vmatpush.msra.mxu0 %v4781
    %v4783 = vand.u32 %v95, 4294901760
    %4784 = vmatpush.msra.mxu0 %v4783
    %v4785 = vand.u32 %v4629, 4294901760
    %4786 = vmatmul.f32.gmra.mxu0 %v4785
    %v4787 = vpop.f32.mrf.mxu0
    %v4788 = vadd.f32 %v4765, %v4787
    %4789 = vdwg.mxu0
    %v4790 = vadd.f32 %v4788, %v101
    %v4791 = vxor.u32 %v4790, 2147483648
    %v4792 = vmul.f32 %v4791, 1.442695
    %v4793 = vpow.pop %v4792
    %v4794 = vadd.f32 %v4793, 1.0
    %v4795 = vrcp.pop %v4794
    %v4796 = vmul.f32 %v4794, %v4795
    %v4797 = vsub.f32 1.0, %v4796
    %v4798 = vmul.f32 %v4795, %v4797
    %v4799 = vadd.f32 %v4795, %v4798
    %vm4800 = vweird.f32 %v4794
    %vm4801 = vweird.f32 %v4795
    %vm4802 = vmor %vm4800, %vm4801
    %v4803 = vsel %vm4802, %v4795, %v4799
    %v4804 = vand.u32 2147483647, %v4794
    %vm4805 = vcmp.eq.f32.partialorder %v4804, 8.507059e+37
    %v4806 = vand.u32 %v4794, 2147483648
    %v4807 = vor.u32 1.1754944e-38, %v4806
    %v4808 = vsel %vm4805, %v4807, %v4803
    %v4809 = vmul.f32 1.0, %v4808
    %v4810 = vtanh.pop %v4790
    %v4811 = vmul.f32 %v4809, %v4236
    %4813 = vrot.lane.b32.xlu0 %v4810, 108
    %v4814 = vpop.permute.xlu0 %4813
    %v4816 = vmul.f32 %v4809, %v4814
    %4818 = vrot.lane.b32.xlu0 %v4816, 10
    %v4819 = vpop.permute.xlu0 %4818
    %v4821 = vadd.f32 %v4811, %v4819
    %v4822 = vtanh.pop %v4821
    %4824 = vrot.lane.b32.xlu0 %v4822, 20
    %v4825 = vpop.permute.xlu0 %4824
    %v4827 = vmul.f32 %v4809, %v4825
    %v4828 = vsel %vm3840, %v4827, 0.0
    %v4830 = vrot.slane %v4828, 1
    %v4831 = vperm.slane %v4828, 0
    %v4832 = vperm.slane %v4830, 0
    %4833 = vrot.lane.b32.xlu0 %v4831, 98
    %v4834 = vpop.permute.xlu0 %4833
    %4835 = vrot.lane.b32.xlu0 %v4832, 98
    %v4836 = vpop.permute.xlu0 %4835
    %4839 = vst.msk [vmem:[#allocation9 + $0x6] sm:$0x1] %vm1199, %v4834
    %4840 = vst.msk [vmem:[#allocation9 + $0xe] sm:$0x1] %vm1199, %v4836
    %v4841 = vsel %vm3840, %v4827, %v4235
    %v4842 = vsel %vm3840, %v4821, %v4236
    %4844 = vrot.lane.b32.xlu0 %v4841, 98
    %v4845 = vpop.permute.xlu0 %4844
    %v4846 = vsel %vm361, %v4845, 0
    %4848 = vmatpush.msra.mxu0 0.0
    %4849 = vmatpush.msra.mxu0 0.0
    %4850 = vmatpush.msra.mxu0 0.0
    %4851 = vmatpush.msra.mxu0 0.0
    %4852 = vmatpush.msra.mxu0 0.0
    %4853 = vmatpush.msra.mxu0 0.0
    %4854 = vmatpush.msra.mxu0 0.0
    %4855 = vmatpush.msra.mxu0 0.0
    %4856 = vmatpush.msra.mxu0 0.0
    %4857 = vmatpush.msra.mxu0 0.0
    %4858 = vmatpush.msra.mxu0 0.0
    %4859 = vmatpush.msra.mxu0 0.0
    %4860 = vmatpush.msra.mxu0 0.0
    %4861 = vmatpush.msra.mxu0 0.0
    %v4862 = vand.u32 %v817, 4294901760
    %4863 = vmatpush.msra.mxu0 %v4862
    %v4864 = vand.u32 %v97, 4294901760
    %4865 = vmatpush.msra.mxu0 %v4864
    %v4866 = vand.u32 %v4846, 4294901760
    %v4867 = vsub.f32 %v4846, %v4866
    %v4868 = vand.u32 %v4867, 4294901760
    %v4869 = vsub.f32 %v4867, %v4868
    %v4870 = vand.u32 %v4869, 4294901760
    %4871 = vmatmul.f32.gmra.mxu0 %v4870
    %v4872 = vpop.f32.mrf.mxu0
    %v4873 = vadd.f32 0.0, %v4872
    %4874 = vdwg.mxu0
    %4875 = vmatpush.msra.mxu0 0.0
    %4876 = vmatpush.msra.mxu0 0.0
    %4877 = vmatpush.msra.mxu0 0.0
    %4878 = vmatpush.msra.mxu0 0.0
    %4879 = vmatpush.msra.mxu0 0.0
    %4880 = vmatpush.msra.mxu0 0.0
    %4881 = vmatpush.msra.mxu0 0.0
    %4882 = vmatpush.msra.mxu0 0.0
    %4883 = vmatpush.msra.mxu0 0.0
    %4884 = vmatpush.msra.mxu0 0.0
    %4885 = vmatpush.msra.mxu0 0.0
    %4886 = vmatpush.msra.mxu0 0.0
    %4887 = vmatpush.msra.mxu0 0.0
    %4888 = vmatpush.msra.mxu0 0.0
    %v4889 = vand.u32 %v817, 4294901760
    %v4890 = vsub.f32 %v817, %v4889
    %v4891 = vand.u32 %v4890, 4294901760
    %v4892 = vsub.f32 %v4890, %v4891
    %v4893 = vand.u32 %v4892, 4294901760
    %4894 = vmatpush.msra.mxu0 %v4893
    %v4895 = vand.u32 %v97, 4294901760
    %v4896 = vsub.f32 %v97, %v4895
    %v4897 = vand.u32 %v4896, 4294901760
    %v4898 = vsub.f32 %v4896, %v4897
    %v4899 = vand.u32 %v4898, 4294901760
    %4900 = vmatpush.msra.mxu0 %v4899
    %v4901 = vand.u32 %v4846, 4294901760
    %4902 = vmatmul.f32.gmra.mxu0 %v4901
    %v4903 = vpop.f32.mrf.mxu0
    %v4904 = vadd.f32 %v4873, %v4903
    %4905 = vdwg.mxu0
    %4906 = vmatpush.msra.mxu0 0.0
    %4907 = vmatpush.msra.mxu0 0.0
    %4908 = vmatpush.msra.mxu0 0.0
    %4909 = vmatpush.msra.mxu0 0.0
    %4910 = vmatpush.msra.mxu0 0.0
    %4911 = vmatpush.msra.mxu0 0.0
    %4912 = vmatpush.msra.mxu0 0.0
    %4913 = vmatpush.msra.mxu0 0.0
    %4914 = vmatpush.msra.mxu0 0.0
    %4915 = vmatpush.msra.mxu0 0.0
    %4916 = vmatpush.msra.mxu0 0.0
    %4917 = vmatpush.msra.mxu0 0.0
    %4918 = vmatpush.msra.mxu0 0.0
    %4919 = vmatpush.msra.mxu0 0.0
    %v4920 = vand.u32 %v817, 4294901760
    %v4921 = vsub.f32 %v817, %v4920
    %4922 = vmatpush.msra.mxu0 %v4921
    %v4923 = vand.u32 %v97, 4294901760
    %v4924 = vsub.f32 %v97, %v4923
    %4925 = vmatpush.msra.mxu0 %v4924
    %v4926 = vand.u32 %v4846, 4294901760
    %v4927 = vsub.f32 %v4846, %v4926
    %4928 = vmatmul.f32.gmra.mxu0 %v4927
    %v4929 = vpop.f32.mrf.mxu0
    %v4930 = vadd.f32 %v4904, %v4929
    %4931 = vdwg.mxu0
    %4932 = vmatpush.msra.mxu0 0.0
    %4933 = vmatpush.msra.mxu0 0.0
    %4934 = vmatpush.msra.mxu0 0.0
    %4935 = vmatpush.msra.mxu0 0.0
    %4936 = vmatpush.msra.mxu0 0.0
    %4937 = vmatpush.msra.mxu0 0.0
    %4938 = vmatpush.msra.mxu0 0.0
    %4939 = vmatpush.msra.mxu0 0.0
    %4940 = vmatpush.msra.mxu0 0.0
    %4941 = vmatpush.msra.mxu0 0.0
    %4942 = vmatpush.msra.mxu0 0.0
    %4943 = vmatpush.msra.mxu0 0.0
    %4944 = vmatpush.msra.mxu0 0.0
    %4945 = vmatpush.msra.mxu0 0.0
    %v4946 = vand.u32 %v817, 4294901760
    %4947 = vmatpush.msra.mxu0 %v4946
    %v4948 = vand.u32 %v97, 4294901760
    %4949 = vmatpush.msra.mxu0 %v4948
    %v4950 = vand.u32 %v4846, 4294901760
    %v4951 = vsub.f32 %v4846, %v4950
    %v4952 = vand.u32 %v4951, 4294901760
    %4953 = vmatmul.f32.gmra.mxu0 %v4952
    %v4954 = vpop.f32.mrf.mxu0
    %v4955 = vadd.f32 %v4930, %v4954
    %4956 = vdwg.mxu0
    %4957 = vmatpush.msra.mxu0 0.0
    %4958 = vmatpush.msra.mxu0 0.0
    %4959 = vmatpush.msra.mxu0 0.0
    %4960 = vmatpush.msra.mxu0 0.0
    %4961 = vmatpush.msra.mxu0 0.0
    %4962 = vmatpush.msra.mxu0 0.0
    %4963 = vmatpush.msra.mxu0 0.0
    %4964 = vmatpush.msra.mxu0 0.0
    %4965 = vmatpush.msra.mxu0 0.0
    %4966 = vmatpush.msra.mxu0 0.0
    %4967 = vmatpush.msra.mxu0 0.0
    %4968 = vmatpush.msra.mxu0 0.0
    %4969 = vmatpush.msra.mxu0 0.0
    %4970 = vmatpush.msra.mxu0 0.0
    %v4971 = vand.u32 %v817, 4294901760
    %v4972 = vsub.f32 %v817, %v4971
    %v4973 = vand.u32 %v4972, 4294901760
    %4974 = vmatpush.msra.mxu0 %v4973
    %v4975 = vand.u32 %v97, 4294901760
    %v4976 = vsub.f32 %v97, %v4975
    %v4977 = vand.u32 %v4976, 4294901760
    %4978 = vmatpush.msra.mxu0 %v4977
    %v4979 = vand.u32 %v4846, 4294901760
    %4980 = vmatmul.f32.gmra.mxu0 %v4979
    %v4981 = vpop.f32.mrf.mxu0
    %v4982 = vadd.f32 %v4955, %v4981
    %4983 = vdwg.mxu0
    %4984 = vmatpush.msra.mxu0 0.0
    %4985 = vmatpush.msra.mxu0 0.0
    %4986 = vmatpush.msra.mxu0 0.0
    %4987 = vmatpush.msra.mxu0 0.0
    %4988 = vmatpush.msra.mxu0 0.0
    %4989 = vmatpush.msra.mxu0 0.0
    %4990 = vmatpush.msra.mxu0 0.0
    %4991 = vmatpush.msra.mxu0 0.0
    %4992 = vmatpush.msra.mxu0 0.0
    %4993 = vmatpush.msra.mxu0 0.0
    %4994 = vmatpush.msra.mxu0 0.0
    %4995 = vmatpush.msra.mxu0 0.0
    %4996 = vmatpush.msra.mxu0 0.0
    %4997 = vmatpush.msra.mxu0 0.0
    %v4998 = vand.u32 %v817, 4294901760
    %4999 = vmatpush.msra.mxu0 %v4998
    %v5000 = vand.u32 %v97, 4294901760
    %5001 = vmatpush.msra.mxu0 %v5000
    %v5002 = vand.u32 %v4846, 4294901760
    %5003 = vmatmul.f32.gmra.mxu0 %v5002
    %v5004 = vpop.f32.mrf.mxu0
    %v5005 = vadd.f32 %v4982, %v5004
    %5006 = vdwg.mxu0
    %5007 = vst [vmem:[#allocation1] ss:$4 sm:$0xff] %v4441
    %v5008 = vld.sshfl [vmem:[#allocation1] sm:$0xff pattern:$0x73625140]
    %5009 = vrot.lane.b32.xlu0 %v5008, 98
    %v5010 = vpop.permute.xlu0 %5009
    %v5011 = vsel %vm361, %v5010, 0
    %5013 = vmatpush.msra.mxu0 0.0
    %5014 = vmatpush.msra.mxu0 0.0
    %5015 = vmatpush.msra.mxu0 0.0
    %5016 = vmatpush.msra.mxu0 0.0
    %5017 = vmatpush.msra.mxu0 0.0
    %5018 = vmatpush.msra.mxu0 0.0
    %5019 = vmatpush.msra.mxu0 0.0
    %5020 = vmatpush.msra.mxu0 0.0
    %5021 = vmatpush.msra.mxu0 0.0
    %5022 = vmatpush.msra.mxu0 0.0
    %5023 = vmatpush.msra.mxu0 0.0
    %5024 = vmatpush.msra.mxu0 0.0
    %5025 = vmatpush.msra.mxu0 0.0
    %5026 = vmatpush.msra.mxu0 0.0
    %v5027 = vand.u32 %v985, 4294901760
    %5028 = vmatpush.msra.mxu0 %v5027
    %v5029 = vand.u32 %v95, 4294901760
    %5030 = vmatpush.msra.mxu0 %v5029
    %v5031 = vand.u32 %v5011, 4294901760
    %v5032 = vsub.f32 %v5011, %v5031
    %v5033 = vand.u32 %v5032, 4294901760
    %v5034 = vsub.f32 %v5032, %v5033
    %v5035 = vand.u32 %v5034, 4294901760
    %5036 = vmatmul.f32.gmra.mxu0 %v5035
    %v5037 = vpop.f32.mrf.mxu0
    %v5038 = vadd.f32 %v5005, %v5037
    %5039 = vdwg.mxu0
    %5040 = vmatpush.msra.mxu0 0.0
    %5041 = vmatpush.msra.mxu0 0.0
    %5042 = vmatpush.msra.mxu0 0.0
    %5043 = vmatpush.msra.mxu0 0.0
    %5044 = vmatpush.msra.mxu0 0.0
    %5045 = vmatpush.msra.mxu0 0.0
    %5046 = vmatpush.msra.mxu0 0.0
    %5047 = vmatpush.msra.mxu0 0.0
    %5048 = vmatpush.msra.mxu0 0.0
    %5049 = vmatpush.msra.mxu0 0.0
    %5050 = vmatpush.msra.mxu0 0.0
    %5051 = vmatpush.msra.mxu0 0.0
    %5052 = vmatpush.msra.mxu0 0.0
    %5053 = vmatpush.msra.mxu0 0.0
    %v5054 = vand.u32 %v985, 4294901760
    %v5055 = vsub.f32 %v985, %v5054
    %v5056 = vand.u32 %v5055, 4294901760
    %v5057 = vsub.f32 %v5055, %v5056
    %v5058 = vand.u32 %v5057, 4294901760
    %5059 = vmatpush.msra.mxu0 %v5058
    %v5060 = vand.u32 %v95, 4294901760
    %v5061 = vsub.f32 %v95, %v5060
    %v5062 = vand.u32 %v5061, 4294901760
    %v5063 = vsub.f32 %v5061, %v5062
    %v5064 = vand.u32 %v5063, 4294901760
    %5065 = vmatpush.msra.mxu0 %v5064
    %v5066 = vand.u32 %v5011, 4294901760
    %5067 = vmatmul.f32.gmra.mxu0 %v5066
    %v5068 = vpop.f32.mrf.mxu0
    %v5069 = vadd.f32 %v5038, %v5068
    %5070 = vdwg.mxu0
    %5071 = vmatpush.msra.mxu0 0.0
    %5072 = vmatpush.msra.mxu0 0.0
    %5073 = vmatpush.msra.mxu0 0.0
    %5074 = vmatpush.msra.mxu0 0.0
    %5075 = vmatpush.msra.mxu0 0.0
    %5076 = vmatpush.msra.mxu0 0.0
    %5077 = vmatpush.msra.mxu0 0.0
    %5078 = vmatpush.msra.mxu0 0.0
    %5079 = vmatpush.msra.mxu0 0.0
    %5080 = vmatpush.msra.mxu0 0.0
    %5081 = vmatpush.msra.mxu0 0.0
    %5082 = vmatpush.msra.mxu0 0.0
    %5083 = vmatpush.msra.mxu0 0.0
    %5084 = vmatpush.msra.mxu0 0.0
    %v5085 = vand.u32 %v985, 4294901760
    %v5086 = vsub.f32 %v985, %v5085
    %5087 = vmatpush.msra.mxu0 %v5086
    %v5088 = vand.u32 %v95, 4294901760
    %v5089 = vsub.f32 %v95, %v5088
    %5090 = vmatpush.msra.mxu0 %v5089
    %v5091 = vand.u32 %v5011, 4294901760
    %v5092 = vsub.f32 %v5011, %v5091
    %5093 = vmatmul.f32.gmra.mxu0 %v5092
    %v5094 = vpop.f32.mrf.mxu0
    %v5095 = vadd.f32 %v5069, %v5094
    %5096 = vdwg.mxu0
    %5097 = vmatpush.msra.mxu0 0.0
    %5098 = vmatpush.msra.mxu0 0.0
    %5099 = vmatpush.msra.mxu0 0.0
    %5100 = vmatpush.msra.mxu0 0.0
    %5101 = vmatpush.msra.mxu0 0.0
    %5102 = vmatpush.msra.mxu0 0.0
    %5103 = vmatpush.msra.mxu0 0.0
    %5104 = vmatpush.msra.mxu0 0.0
    %5105 = vmatpush.msra.mxu0 0.0
    %5106 = vmatpush.msra.mxu0 0.0
    %5107 = vmatpush.msra.mxu0 0.0
    %5108 = vmatpush.msra.mxu0 0.0
    %5109 = vmatpush.msra.mxu0 0.0
    %5110 = vmatpush.msra.mxu0 0.0
    %v5111 = vand.u32 %v985, 4294901760
    %5112 = vmatpush.msra.mxu0 %v5111
    %v5113 = vand.u32 %v95, 4294901760
    %5114 = vmatpush.msra.mxu0 %v5113
    %v5115 = vand.u32 %v5011, 4294901760
    %v5116 = vsub.f32 %v5011, %v5115
    %v5117 = vand.u32 %v5116, 4294901760
    %5118 = vmatmul.f32.gmra.mxu0 %v5117
    %v5119 = vpop.f32.mrf.mxu0
    %v5120 = vadd.f32 %v5095, %v5119
    %5121 = vdwg.mxu0
    %5122 = vmatpush.msra.mxu0 0.0
    %5123 = vmatpush.msra.mxu0 0.0
    %5124 = vmatpush.msra.mxu0 0.0
    %5125 = vmatpush.msra.mxu0 0.0
    %5126 = vmatpush.msra.mxu0 0.0
    %5127 = vmatpush.msra.mxu0 0.0
    %5128 = vmatpush.msra.mxu0 0.0
    %5129 = vmatpush.msra.mxu0 0.0
    %5130 = vmatpush.msra.mxu0 0.0
    %5131 = vmatpush.msra.mxu0 0.0
    %5132 = vmatpush.msra.mxu0 0.0
    %5133 = vmatpush.msra.mxu0 0.0
    %5134 = vmatpush.msra.mxu0 0.0
    %5135 = vmatpush.msra.mxu0 0.0
    %v5136 = vand.u32 %v985, 4294901760
    %v5137 = vsub.f32 %v985, %v5136
    %v5138 = vand.u32 %v5137, 4294901760
    %5139 = vmatpush.msra.mxu0 %v5138
    %v5140 = vand.u32 %v95, 4294901760
    %v5141 = vsub.f32 %v95, %v5140
    %v5142 = vand.u32 %v5141, 4294901760
    %5143 = vmatpush.msra.mxu0 %v5142
    %v5144 = vand.u32 %v5011, 4294901760
    %5145 = vmatmul.f32.gmra.mxu0 %v5144
    %v5146 = vpop.f32.mrf.mxu0
    %v5147 = vadd.f32 %v5120, %v5146
    %5148 = vdwg.mxu0
    %5149 = vmatpush.msra.mxu0 0.0
    %5150 = vmatpush.msra.mxu0 0.0
    %5151 = vmatpush.msra.mxu0 0.0
    %5152 = vmatpush.msra.mxu0 0.0
    %5153 = vmatpush.msra.mxu0 0.0
    %5154 = vmatpush.msra.mxu0 0.0
    %5155 = vmatpush.msra.mxu0 0.0
    %5156 = vmatpush.msra.mxu0 0.0
    %5157 = vmatpush.msra.mxu0 0.0
    %5158 = vmatpush.msra.mxu0 0.0
    %5159 = vmatpush.msra.mxu0 0.0
    %5160 = vmatpush.msra.mxu0 0.0
    %5161 = vmatpush.msra.mxu0 0.0
    %5162 = vmatpush.msra.mxu0 0.0
    %v5163 = vand.u32 %v985, 4294901760
    %5164 = vmatpush.msra.mxu0 %v5163
    %v5165 = vand.u32 %v95, 4294901760
    %5166 = vmatpush.msra.mxu0 %v5165
    %v5167 = vand.u32 %v5011, 4294901760
    %5168 = vmatmul.f32.gmra.mxu0 %v5167
    %v5169 = vpop.f32.mrf.mxu0
    %v5170 = vadd.f32 %v5147, %v5169
    %5171 = vdwg.mxu0
    %v5172 = vadd.f32 %v5170, %v101
    %v5173 = vxor.u32 %v5172, 2147483648
    %v5174 = vmul.f32 %v5173, 1.442695
    %v5175 = vpow.pop %v5174
    %v5176 = vadd.f32 %v5175, 1.0
    %v5177 = vrcp.pop %v5176
    %v5178 = vmul.f32 %v5176, %v5177
    %v5179 = vsub.f32 1.0, %v5178
    %v5180 = vmul.f32 %v5177, %v5179
    %v5181 = vadd.f32 %v5177, %v5180
    %vm5182 = vweird.f32 %v5176
    %vm5183 = vweird.f32 %v5177
    %vm5184 = vmor %vm5182, %vm5183
    %v5185 = vsel %vm5184, %v5177, %v5181
    %v5186 = vand.u32 2147483647, %v5176
    %vm5187 = vcmp.eq.f32.partialorder %v5186, 8.507059e+37
    %v5188 = vand.u32 %v5176, 2147483648
    %v5189 = vor.u32 1.1754944e-38, %v5188
    %v5190 = vsel %vm5187, %v5189, %v5185
    %v5191 = vmul.f32 1.0, %v5190
    %v5192 = vtanh.pop %v5172
    %v5193 = vmul.f32 %v5191, %v4842
    %5195 = vrot.lane.b32.xlu0 %v5192, 108
    %v5196 = vpop.permute.xlu0 %5195
    %v5198 = vmul.f32 %v5191, %v5196
    %5200 = vrot.lane.b32.xlu0 %v5198, 10
    %v5201 = vpop.permute.xlu0 %5200
    %v5203 = vadd.f32 %v5193, %v5201
    %v5204 = vtanh.pop %v5203
    %5206 = vrot.lane.b32.xlu0 %v5204, 20
    %v5207 = vpop.permute.xlu0 %5206
    %v5209 = vmul.f32 %v5191, %v5207
    %v5210 = vsel %vm4446, %v5209, 0.0
    %v5212 = vrot.slane %v5210, 1
    %v5213 = vperm.slane %v5210, 0
    %v5214 = vperm.slane %v5212, 0
    %5215 = vrot.lane.b32.xlu0 %v5213, 98
    %v5216 = vpop.permute.xlu0 %5215
    %5217 = vrot.lane.b32.xlu0 %v5214, 98
    %v5218 = vpop.permute.xlu0 %5217
    %5221 = vst.msk [vmem:[#allocation9 + $0x7] sm:$0x1] %vm1199, %v5216
    %5222 = vst.msk [vmem:[#allocation9 + $0xf] sm:$0x1] %vm1199, %v5218
    %v5223 = vsel %vm4446, %v5209, %v4841
    %v5224 = vsel %vm4446, %v5203, %v4842
    %vm5225 = vcmask 74752
    %5226 = vst.msk [vmem:[#allocation10] sm:$0x3] %vm5225, %v4453
    %5228 = vrot.lane.b32.xlu0 %v5223, 98
    %v5229 = vpop.permute.xlu0 %5228
    %s5231 = scalar_lea.vmem [#allocation10], 2
    %5232 = vst.msk [vmem:[%s5231] sm:$0x3] %vm5225, %v5229
    %5233 = vst.msk [vmem:[#allocation12] sm:$0x3] %vm5225, %v4460
    %5235 = vrot.lane.b32.xlu0 %v5224, 118
    %v5236 = vpop.permute.xlu0 %5235
    %s5238 = scalar_lea.vmem [#allocation12], 2
    %5239 = vst.msk [vmem:[%s5238] sm:$0x3] %vm5225, %v5236
    %v5240 = vld [vmem:[#allocation9] sm:$0xff]
    %v5241 = vld [vmem:[#allocation9 + $0x8] sm:$0xff]
    %v5242 = vlaneseq
    %v5243 = vshrl.u32 %v5242, 7
    %v5244 = vstv %s91
    %vm5245 = vcmp.lt.s32.totalorder %v5243, %v5244
    %v5246 = vsel %vm5245, %v5240, -1e+30
    %v5247 = vsel %vm5245, %v5241, -1e+30
    %v5248 = vsel %vm361, %v5246, -inf
    %v5249 = vrot.slane %v5248, 4
    %v5250 = vmax.f32 %v5248, %v5249
    %v5251 = vrot.slane %v5250, 2
    %v5252 = vmax.f32 %v5250, %v5251
    %v5253 = vrot.slane %v5252, 1
    %v5254 = vmax.f32 %v5252, %v5253
    %v5255 = vsel %vm361, %v5247, -inf
    %v5256 = vrot.slane %v5255, 4
    %v5257 = vmax.f32 %v5255, %v5256
    %v5258 = vrot.slane %v5257, 2
    %v5259 = vmax.f32 %v5257, %v5258
    %v5260 = vrot.slane %v5259, 1
    %v5261 = vmax.f32 %v5259, %v5260
    %v5262 = vsub.f32 %v5240, %v5254
    %v5263 = vsub.f32 %v5241, %v5261
    %v5264 = vmul.f32 %v5262, 1.442695
    %v5265 = vpow.pop %v5264
    %v5266 = vmul.f32 %v5263, 1.442695
    %v5267 = vpow.pop %v5266
    %v5268 = vsel %vm5245, %v5265, 0.0
    %v5269 = vsel %vm5245, %v5267, 0.0
    %v5270 = vsel %vm361, %v5268, 0.0
    %v5271 = vrot.slane %v5270, 4
    %v5272 = vadd.f32 %v5270, %v5271
    %v5273 = vrot.slane %v5272, 2
    %v5274 = vadd.f32 %v5272, %v5273
    %v5275 = vrot.slane %v5274, 1
    %v5276 = vadd.f32 %v5274, %v5275
    %v5277 = vsel %vm361, %v5269, 0.0
    %v5278 = vrot.slane %v5277, 4
    %v5279 = vadd.f32 %v5277, %v5278
    %v5280 = vrot.slane %v5279, 2
    %v5281 = vadd.f32 %v5279, %v5280
    %v5282 = vrot.slane %v5281, 1
    %v5283 = vadd.f32 %v5281, %v5282
    %v5284 = vlog2.pop %v5276
    %v5285 = vmul.f32 %v5284, 0.6931472
    %v5286 = vlog2.pop %v5283
    %v5287 = vmul.f32 %v5286, 0.6931472
    %v5288 = vsub.f32 %v5262, %v5285
    %v5289 = vsub.f32 %v5263, %v5287
    %v5290 = vsel %vm5245, %v5288, 0.0
    %v5291 = vsel %vm5245, %v5289, 0.0
    %5292 = vst.msk [vmem:[#allocation9] sm:$0xff] %vm361, %v5290
    %5293 = vst.msk [vmem:[#allocation9 + $0x8] sm:$0xff] %vm361, %v5291
    // Predicated region
    $region58: #{_forward_jit.1} parent=1 // pred_check
      _
    $region59: #{_forward_jit.1} parent=1 // pred_check_branch
      %5295 = sbr.rel (0) target = $region61
    $region60: #{_forward_jit.1} parent=1 // pred_region
      %5297 = vsyncadd [#allocation5], 0
      %s5298 = sshll.u32 [#allocation9], 4
      %s5299 = int_to_ptr.vmem [resolvable:$true] %s5298
      %s5300 = sshll.u32 %s11, 4
      %s5301 = int_to_ptr.hbm [resolvable:$true] %s5300
      %5306 = dma.vmem_to_hbm [thread:$0]  %s5299, 256, %s5301, [#allocation5], 128, 128, 8
    $region61: #{_forward_jit.1} parent=1 // pred_fallthru
      _
    // Predicated region
    $region62: #{_forward_jit.1} parent=1 // pred_check
      _
    $region63: #{_forward_jit.1} parent=1 // pred_check_branch
      %5308 = sbr.rel (0) target = $region65
    $region64: #{_forward_jit.1} parent=1 // pred_region
      %5310 = vsyncadd [#allocation11], 0
      %s5311 = sshll.u32 [#allocation10], 4
      %s5312 = int_to_ptr.vmem [resolvable:$true] %s5311
      %s5313 = sshll.u32 %s12, 4
      %s5314 = int_to_ptr.hbm [resolvable:$true] %s5313
      %5319 = dma.vmem_to_hbm [thread:$0]  %s5312, 64, %s5314, [#allocation11], 32, 32, 2
    $region65: #{_forward_jit.1} parent=1 // pred_fallthru
      _
    // Predicated region
    $region66: #{_forward_jit.1} parent=1 // pred_check
      _
    $region67: #{_forward_jit.1} parent=1 // pred_check_branch
      %5321 = sbr.rel (0) target = $region69
    $region68: #{_forward_jit.1} parent=1 // pred_region
      %5323 = vsyncadd [#allocation11], 0
      %s5324 = sshll.u32 [#allocation12], 4
      %s5325 = int_to_ptr.vmem [resolvable:$true] %s5324
      %s5326 = sshll.u32 %s13, 4
      %s5327 = int_to_ptr.hbm [resolvable:$true] %s5326
      %5332 = dma.vmem_to_hbm [thread:$0]  %s5325, 64, %s5327, [#allocation11], 32, 32, 2
    $region69: #{_forward_jit.1} parent=1 // pred_fallthru
      _
    // Predicated region
    $region70: #{_forward_jit.1} parent=1 // pred_check
      _
    $region71: #{_forward_jit.1} parent=1 // pred_check_branch
      %5334 = sbr.rel (0) target = $region73
    $region72: #{_forward_jit.1} parent=1 // pred_region
      %5336 = dma.done [#allocation5], 256
    $region73: #{_forward_jit.1} parent=1 // pred_fallthru
      _
    // Predicated region
    $region74: #{_forward_jit.1} parent=1 // pred_check
      _
    $region75: #{_forward_jit.1} parent=1 // pred_check_branch
      %5338 = sbr.rel (0) target = $region77
    $region76: #{_forward_jit.1} parent=1 // pred_region
      %5340 = dma.done [#allocation11], 64
    $region77: #{_forward_jit.1} parent=1 // pred_fallthru
      _
    // Predicated region
    $region78: #{_forward_jit.1} parent=1 // pred_check
      _
    $region79: #{_forward_jit.1} parent=1 // pred_check_branch
      %5342 = sbr.rel (0) target = $region81
    $region80: #{_forward_jit.1} parent=1 // pred_region
      %5344 = dma.done [#allocation11], 64
    $region81: #{_forward_jit.1} parent=1 // pred_fallthru
      _
    %5345 = vsyncpa [#allocation4], 1
    %5346 = vsyncpa [#allocation7], 1
    %5347 = vsyncpa [#allocation5], 1
    %5348 = vsyncpa [#allocation11], 1

</llo_original>
